<compile_context>
chip_gen: v5e
topology: v5e:2x2
jax: 0.10.0
libtpu: 0.0.40
codegen_flags: <defaults>
</compile_context>

<pallas_src>
import jax
import jax.numpy as jnp
from jax import lax
from jax.experimental import pallas as pl
from jax.experimental.pallas import tpu as pltpu


# ----------------------------------------------------------------------------
# Fused kernel: conv0(1x1)+BN0+ReLU (once per core, into VMEM scratch)
#               -> conv1(5x5)+BN1+ReLU as one K=3200 matmul per channel block.
#
#   x0_ref : (P, n_pad, Cin)   bf16  pooled activations, tap-major
#   w0_ref : (Cin, 128)        bf16  conv0 weight
#   s0/b0  : (1, 128)          f32   folded BN0 scale / bias
#   w1_ref : (P*128, block_j)  bf16  conv1 weight slice (tap-major rows)
#   s1/b1  : (1, block_j)      f32   folded BN1 scale / bias slice
#   y1_ref : (n_pad, block_j)  f32   conv1 output (spatial 1x1)
#   y0_ref : (n_pad, P*128)    bf16  persistent scratch: conv0 activations
# ----------------------------------------------------------------------------
def _aux_head_kernel(x0_ref, w0_ref, s0_ref, b0_ref, w1_ref, s1_ref, b1_ref,
                     y1_ref, y0_ref):
    num_taps = x0_ref.shape[0]

    # conv0 only at each core's first channel-block step; result persists in
    # the VMEM scratch for the remaining steps on that core.
    @pl.when(pl.program_id(1) == 0)
    def _():
        w0 = w0_ref[...]                      # bf16, straight into the MXU
        s0 = s0_ref[...]
        b0 = b0_ref[...]
        for t in range(num_taps):             # 25 small dots, done once per core
            y0 = jnp.dot(x0_ref[t], w0, preferred_element_type=jnp.float32)
            y0 = jnp.maximum(y0 * s0 + b0, 0.0)
            y0_ref[:, t * 128:(t + 1) * 128] = y0.astype(jnp.bfloat16)

    # conv1: single bf16 x bf16 -> f32 matmul over K = 25*128 = 3200.
    acc = jnp.dot(y0_ref[...], w1_ref[...], preferred_element_type=jnp.float32)
    y1_ref[...] = jnp.maximum(acc * s1_ref[...] + b1_ref[...], 0.0)


def bn_fold(gamma, beta, mean, var, eps=1e-3):
    scale = gamma / jnp.sqrt(var + eps)
    return scale, beta - mean * scale


# ----------------------------------------------------------------------------
# One-time parameter preparation (reshapes / BN folds / bf16 casts off the
# per-call critical path).
# ----------------------------------------------------------------------------
def prepare_aux_params(p):
    P = 25
    cin = p['w0'].shape[1]
    w0 = p['w0'].reshape(128, cin).T.astype(jnp.bfloat16)            # (Cin, 128)
    # (768, 128, 5, 5) -> (5, 5, 128, 768) -> (25*128, 768), tap-major rows.
    w1 = jnp.transpose(p['w1'], (2, 3, 1, 0)).reshape(P * 128, 768)
    w1 = w1.astype(jnp.bfloat16)
    s0, b0 = bn_fold(p['bn0_gamma'], p['bn0_beta'], p['bn0_mean'], p['bn0_var'])
    s1, b1 = bn_fold(p['bn1_gamma'], p['bn1_beta'], p['bn1_mean'], p['bn1_var'])
    return dict(
        w0=w0, w1=w1,
        s0=s0.reshape(1, 128).astype(jnp.float32),
        b0=b0.reshape(1, 128).astype(jnp.float32),
        s1=s1.reshape(1, 768).astype(jnp.float32),
        b1=b1.reshape(1, 768).astype(jnp.float32),
        wfc_t=p['wfc'].T.astype(jnp.bfloat16),                        # (768, C)
        bfc=p['bfc'],
    )


# ----------------------------------------------------------------------------
# InceptionAux forward (inference-mode BN), conv stack in Pallas
# ----------------------------------------------------------------------------
def inception_aux_forward(x_nchw, q, *, block_j=128):
    N, Cin, H, W = x_nchw.shape
    x = jnp.transpose(x_nchw, (0, 2, 3, 1))                          # NHWC

    # F.avg_pool2d(kernel_size=5, stride=3): cheap mem-bound pooling step.
    pooled = lax.reduce_window(x, 0.0, lax.add, (1, 5, 5, 1), (1, 3, 3, 1),
                               'VALID') / 25.0
    _, Ho, Wo, _ = pooled.shape
    # conv1 is 5x5 VALID; the fused kernel assumes it consumes the whole pooled
    # map (true for the 17x17 Mixed_6e feature map the aux head sees).
    assert (Ho, Wo) == (5, 5), "aux head expects a 17x17 input feature map"
    P = Ho * Wo

    # Tap-major bf16 layout (P, n_pad, Cin); batch padded to full sublane tiles.
    n_pad = max(8, -(-N // 8) * 8)
    x0 = jnp.transpose(pooled, (1, 2, 0, 3)).reshape(P, N, Cin)
    x0 = jnp.pad(x0, ((0, 0), (0, n_pad - N), (0, 0))).astype(jnp.bfloat16)

    n_out = 768
    n_cores = 2                                  # outer "parallel" axis (v7x TCs)
    assert n_out % (n_cores * block_j) == 0 and block_j % 128 == 0
    inner = n_out // (n_cores * block_j)         # pipelined steps per core

    y1 = pl.pallas_call(
        _aux_head_kernel,
        out_shape=jax.ShapeDtypeStruct((n_pad, n_out), jnp.float32),
        grid_spec=pltpu.PrefetchScalarGridSpec(
            num_scalar_prefetch=0,
            grid=(n_cores, inner),
            in_specs=[
                pl.BlockSpec((P, n_pad, Cin), lambda c, j: (0, 0, 0)),
                pl.BlockSpec((Cin, 128), lambda c, j: (0, 0)),
                pl.BlockSpec((1, 128), lambda c, j: (0, 0)),
                pl.BlockSpec((1, 128), lambda c, j: (0, 0)),
                pl.BlockSpec((P * 128, block_j), lambda c, j: (0, c * inner + j)),
                pl.BlockSpec((1, block_j), lambda c, j: (0, c * inner + j)),
                pl.BlockSpec((1, block_j), lambda c, j: (0, c * inner + j)),
            ],
            out_specs=pl.BlockSpec((n_pad, block_j),
                                   lambda c, j: (0, c * inner + j)),
            scratch_shapes=[pltpu.VMEM((n_pad, P * 128), jnp.bfloat16)],
        ),
        compiler_params=pltpu.CompilerParams(
            dimension_semantics=("parallel", "arbitrary")),
    )(x0, q['w0'], q['s0'], q['b0'], q['w1'], q['s1'], q['b1'])

    y1 = y1[:N]                                  # drop batch padding rows
    # adaptive_avg_pool2d((1,1)) on a 1x1 map is the identity; flatten + fc is a
    # tiny bandwidth-bound matmul: bf16 activations x pre-transposed bf16 weight.
    return jnp.dot(y1.astype(jnp.bfloat16), q['wfc_t'],
                   preferred_element_type=jnp.float32) + q['bfc']


# ----------------------------------------------------------------------------
# Pure-JAX reference (correctness check).  Applies the SAME bf16 roundings the
# kernel applies (bf16 weights, bf16 pooled input, bf16 conv0 activation, bf16
# pre-fc activation / fc weight) so the comparison isolates kernel correctness
# from those deliberate precision choices; accumulation stays f32 in both.
# ----------------------------------------------------------------------------
def reference_forward(x_nchw, p):
    f32 = jnp.float32
    x = jnp.transpose(x_nchw, (0, 2, 3, 1))
    x = lax.reduce_window(x, 0.0, lax.add, (1, 5, 5, 1), (1, 3, 3, 1),
                          'VALID') / 25.0
    x = x.astype(jnp.bfloat16).astype(f32)
    dn = ('NHWC', 'HWIO', 'NHWC')
    w0 = p['w0'].astype(jnp.bfloat16).astype(f32)
    k0 = jnp.transpose(w0, (2, 3, 1, 0))
    x = lax.conv_general_dilated(x, k0, (1, 1), 'VALID', dimension_numbers=dn,
                                 precision=lax.Precision.HIGHEST)
    s0, b0 = bn_fold(p['bn0_gamma'], p['bn0_beta'], p['bn0_mean'], p['bn0_var'])
    x = jnp.maximum(x * s0 + b0, 0.0)
    x = x.astype(jnp.bfloat16).astype(f32)
    w1 = p['w1'].astype(jnp.bfloat16).astype(f32)
    k1 = jnp.transpose(w1, (2, 3, 1, 0))
    x = lax.conv_general_dilated(x, k1, (1, 1), 'VALID', dimension_numbers=dn,
                                 precision=lax.Precision.HIGHEST)
    s1, b1 = bn_fold(p['bn1_gamma'], p['bn1_beta'], p['bn1_mean'], p['bn1_var'])
    x = jnp.maximum(x * s1 + b1, 0.0)
    x = jnp.mean(x, axis=(1, 2))
    x = x.astype(jnp.bfloat16).astype(f32)
    wfc = p['wfc'].astype(jnp.bfloat16).astype(f32)
    return jnp.dot(x, wfc.T, precision=lax.Precision.HIGHEST) + p['bfc']


# ----------------------------------------------------------------------------
# Deterministic synthetic parameters (shapes follow InceptionAux.__init__)
# ----------------------------------------------------------------------------
def init_params(key, in_channels, num_classes):
    ks = jax.random.split(key, 12)
    p = {}
    p['w0'] = 0.1 * jax.random.normal(ks[0], (128, in_channels, 1, 1), jnp.float32)
    p['bn0_gamma'] = 1.0 + 0.1 * jax.random.normal(ks[1], (128,), jnp.float32)
    p['bn0_beta'] = 0.1 * jax.random.normal(ks[2], (128,), jnp.float32)
    p['bn0_mean'] = 0.1 * jax.random.normal(ks[3], (128,), jnp.float32)
    p['bn0_var'] = 0.5 + jax.random.uniform(ks[4], (128,), jnp.float32)
    p['w1'] = 0.01 * jax.random.normal(ks[5], (768, 128, 5, 5), jnp.float32)
    p['bn1_gamma'] = 1.0 + 0.1 * jax.random.normal(ks[6], (768,), jnp.float32)
    p['bn1_beta'] = 0.1 * jax.random.normal(ks[7], (768,), jnp.float32)
    p['bn1_mean'] = 0.1 * jax.random.normal(ks[8], (768,), jnp.float32)
    p['bn1_var'] = 0.5 + jax.random.uniform(ks[9], (768,), jnp.float32)
    p['wfc'] = 0.001 * jax.random.normal(ks[10], (num_classes, 768), jnp.float32)
    p['bfc'] = 0.01 * jax.random.normal(ks[11], (num_classes,), jnp.float32)
    return p


if __name__ == "__main__":
    key = jax.random.PRNGKey(0)
    kx, kp = jax.random.split(key)
    # Aux-head input inside Inception3: Mixed_6e output, (N, 768, 17, 17).
    N, Cin, H, W = 2, 768, 17, 17
    num_classes = 1000

    x = jax.random.normal(kx, (N, Cin, H, W), jnp.float32)
    params = init_params(kp, Cin, num_classes)
    prep = prepare_aux_params(params)          # one-time weight prep, off hot path

    fwd = jax.jit(inception_aux_forward)
    ref_fwd = jax.jit(reference_forward)

    out = jax.block_until_ready(fwd(x, prep))
    ref = jax.block_until_ready(ref_fwd(x, params))

    assert out.shape == (N, num_classes), out.shape
    if not jnp.allclose(out, ref, atol=2e-3, rtol=2e-3):
        raise AssertionError(
            f"mismatch: max abs err {float(jnp.max(jnp.abs(out - ref)))}")
    print("KERNEL_OK")
</pallas_src>

<mosaic_0001>
module attributes {stable_mosaic.version = 11 : i64} {
  func.func @_aux_head_kernel(%arg0: i32, %arg1: i32, %arg2: memref<25x8x768xbf16, #tpu.memory_space<vmem>>, %arg3: memref<768x128xbf16, #tpu.memory_space<vmem>>, %arg4: memref<1x128xf32, #tpu.memory_space<vmem>>, %arg5: memref<1x128xf32, #tpu.memory_space<vmem>>, %arg6: memref<3200x128xbf16, #tpu.memory_space<vmem>>, %arg7: memref<1x128xf32, #tpu.memory_space<vmem>>, %arg8: memref<1x128xf32, #tpu.memory_space<vmem>>, %arg9: memref<8x128xf32, #tpu.memory_space<vmem>>, %arg10: memref<8x3200xbf16, #tpu.memory_space<vmem>>) attributes {dimension_semantics = [#tpu.dimension_semantics<parallel>, #tpu.dimension_semantics<arbitrary>], iteration_bounds = array<i64: 2, 3>, scalar_prefetch = 0 : i64, scratch_operands = 1 : i64, tpu.core_type = #tpu.core_type<tc>, window_params = [{pipeline_mode = #tpu.pipeline_mode<synchronous>, transform_indices = @transform_0, window_bounds = array<i64: 25, 8, 768>}, {pipeline_mode = #tpu.pipeline_mode<synchronous>, transform_indices = @transform_1, window_bounds = array<i64: 768, 128>}, {pipeline_mode = #tpu.pipeline_mode<synchronous>, transform_indices = @transform_2, window_bounds = array<i64: 1, 128>}, {pipeline_mode = #tpu.pipeline_mode<synchronous>, transform_indices = @transform_3, window_bounds = array<i64: 1, 128>}, {transform_indices = @transform_4, window_bounds = array<i64: 3200, 128>}, {transform_indices = @transform_5, window_bounds = array<i64: 1, 128>}, {transform_indices = @transform_6, window_bounds = array<i64: 1, 128>}, {transform_indices = @transform_7, window_bounds = array<i64: 8, 128>}]} {
    %c0_i32 = arith.constant 0 : i32
    %0 = arith.cmpi eq, %arg1, %c0_i32 : i32
    %1 = arith.extui %0 : i1 to i32
    %c0_i32_0 = arith.constant 0 : i32
    %2 = arith.cmpi ne, %1, %c0_i32_0 : i32
    scf.if %2 {
      %c0_11 = arith.constant 0 : index
      %c0_12 = arith.constant 0 : index
      %15 = vector.load %arg3[%c0_11, %c0_12] : memref<768x128xbf16, #tpu.memory_space<vmem>>, vector<768x128xbf16>
      %c0_13 = arith.constant 0 : index
      %c0_14 = arith.constant 0 : index
      %16 = vector.load %arg4[%c0_13, %c0_14] : memref<1x128xf32, #tpu.memory_space<vmem>>, vector<1x128xf32>
      %c0_15 = arith.constant 0 : index
      %c0_16 = arith.constant 0 : index
      %17 = vector.load %arg5[%c0_15, %c0_16] : memref<1x128xf32, #tpu.memory_space<vmem>>, vector<1x128xf32>
      %c0_17 = arith.constant 0 : index
      %c0_18 = arith.constant 0 : index
      %c0_19 = arith.constant 0 : index
      %18 = vector.load %arg2[%c0_17, %c0_18, %c0_19] : memref<25x8x768xbf16, #tpu.memory_space<vmem>>, vector<1x8x768xbf16>
      %19 = vector.shape_cast %18 : vector<1x8x768xbf16> to vector<8x768xbf16>
      %cst_20 = arith.constant dense<0.000000e+00> : vector<8x128xf32>
      %20 = tpu.matmul %19, %15, %cst_20 {dimension_numbers = #tpu.dot_dimension_numbers<[1], [0], [0], [1], [0, 0, 1, 1], [], []>} : vector<8x768xbf16>, vector<768x128xbf16>, vector<8x128xf32> -> vector<8x128xf32>
      %21 = vector.broadcast %16 : vector<1x128xf32> to vector<8x128xf32>
      %22 = arith.mulf %20, %21 : vector<8x128xf32>
      %23 = vector.broadcast %17 : vector<1x128xf32> to vector<8x128xf32>
      %24 = arith.addf %22, %23 : vector<8x128xf32>
      %cst_21 = arith.constant 0.000000e+00 : f32
      %25 = vector.broadcast %cst_21 : f32 to vector<8x128xf32>
      %26 = arith.maximumf %24, %25 : vector<8x128xf32>
      %27 = arith.truncf %26 : vector<8x128xf32> to vector<8x128xbf16>
      %c0_22 = arith.constant 0 : index
      %c0_23 = arith.constant 0 : index
      %28 = vector.load %arg10[%c0_22, %c0_23] : memref<8x3200xbf16, #tpu.memory_space<vmem>>, vector<8x128xbf16>
      tpu.vector_store %arg10[%c0_22, %c0_23], %27 {strides = array<i32>} : memref<8x3200xbf16, #tpu.memory_space<vmem>>, vector<8x128xbf16>,
      %c1 = arith.constant 1 : index
      %c0_24 = arith.constant 0 : index
      %c0_25 = arith.constant 0 : index
      %29 = vector.load %arg2[%c1, %c0_24, %c0_25] : memref<25x8x768xbf16, #tpu.memory_space<vmem>>, vector<1x8x768xbf16>
      %30 = vector.shape_cast %29 : vector<1x8x768xbf16> to vector<8x768xbf16>
      %cst_26 = arith.constant dense<0.000000e+00> : vector<8x128xf32>
      %31 = tpu.matmul %30, %15, %cst_26 {dimension_numbers = #tpu.dot_dimension_numbers<[1], [0], [0], [1], [0, 0, 1, 1], [], []>} : vector<8x768xbf16>, vector<768x128xbf16>, vector<8x128xf32> -> vector<8x128xf32>
      %32 = vector.broadcast %16 : vector<1x128xf32> to vector<8x128xf32>
      %33 = arith.mulf %31, %32 : vector<8x128xf32>
      %34 = vector.broadcast %17 : vector<1x128xf32> to vector<8x128xf32>
      %35 = arith.addf %33, %34 : vector<8x128xf32>
      %cst_27 = arith.constant 0.000000e+00 : f32
      %36 = vector.broadcast %cst_27 : f32 to vector<8x128xf32>
      %37 = arith.maximumf %35, %36 : vector<8x128xf32>
      %38 = arith.truncf %37 : vector<8x128xf32> to vector<8x128xbf16>
      %c0_28 = arith.constant 0 : index
      %c128 = arith.constant 128 : index
      %39 = vector.load %arg10[%c0_28, %c128] : memref<8x3200xbf16, #tpu.memory_space<vmem>>, vector<8x128xbf16>
      tpu.vector_store %arg10[%c0_28, %c128], %38 {strides = array<i32>} : memref<8x3200xbf16, #tpu.memory_space<vmem>>, vector<8x128xbf16>,
      %c2 = arith.constant 2 : index
      %c0_29 = arith.constant 0 : index
      %c0_30 = arith.constant 0 : index
      %40 = vector.load %arg2[%c2, %c0_29, %c0_30] : memref<25x8x768xbf16, #tpu.memory_space<vmem>>, vector<1x8x768xbf16>
      %41 = vector.shape_cast %40 : vector<1x8x768xbf16> to vector<8x768xbf16>
      %cst_31 = arith.constant dense<0.000000e+00> : vector<8x128xf32>
      %42 = tpu.matmul %41, %15, %cst_31 {dimension_numbers = #tpu.dot_dimension_numbers<[1], [0], [0], [1], [0, 0, 1, 1], [], []>} : vector<8x768xbf16>, vector<768x128xbf16>, vector<8x128xf32> -> vector<8x128xf32>
      %43 = vector.broadcast %16 : vector<1x128xf32> to vector<8x128xf32>
      %44 = arith.mulf %42, %43 : vector<8x128xf32>
      %45 = vector.broadcast %17 : vector<1x128xf32> to vector<8x128xf32>
      %46 = arith.addf %44, %45 : vector<8x128xf32>
      %cst_32 = arith.constant 0.000000e+00 : f32
      %47 = vector.broadcast %cst_32 : f32 to vector<8x128xf32>
      %48 = arith.maximumf %46, %47 : vector<8x128xf32>
      %49 = arith.truncf %48 : vector<8x128xf32> to vector<8x128xbf16>
      %c0_33 = arith.constant 0 : index
      %c256 = arith.constant 256 : index
      %50 = vector.load %arg10[%c0_33, %c256] : memref<8x3200xbf16, #tpu.memory_space<vmem>>, vector<8x128xbf16>
      tpu.vector_store %arg10[%c0_33, %c256], %49 {strides = array<i32>} : memref<8x3200xbf16, #tpu.memory_space<vmem>>, vector<8x128xbf16>,
      %c3 = arith.constant 3 : index
      %c0_34 = arith.constant 0 : index
      %c0_35 = arith.constant 0 : index
      %51 = vector.load %arg2[%c3, %c0_34, %c0_35] : memref<25x8x768xbf16, #tpu.memory_space<vmem>>, vector<1x8x768xbf16>
      %52 = vector.shape_cast %51 : vector<1x8x768xbf16> to vector<8x768xbf16>
      %cst_36 = arith.constant dense<0.000000e+00> : vector<8x128xf32>
      %53 = tpu.matmul %52, %15, %cst_36 {dimension_numbers = #tpu.dot_dimension_numbers<[1], [0], [0], [1], [0, 0, 1, 1], [], []>} : vector<8x768xbf16>, vector<768x128xbf16>, vector<8x128xf32> -> vector<8x128xf32>
      %54 = vector.broadcast %16 : vector<1x128xf32> to vector<8x128xf32>
      %55 = arith.mulf %53, %54 : vector<8x128xf32>
      %56 = vector.broadcast %17 : vector<1x128xf32> to vector<8x128xf32>
      %57 = arith.addf %55, %56 : vector<8x128xf32>
      %cst_37 = arith.constant 0.000000e+00 : f32
      %58 = vector.broadcast %cst_37 : f32 to vector<8x128xf32>
      %59 = arith.maximumf %57, %58 : vector<8x128xf32>
      %60 = arith.truncf %59 : vector<8x128xf32> to vector<8x128xbf16>
      %c0_38 = arith.constant 0 : index
      %c384 = arith.constant 384 : index
      %61 = vector.load %arg10[%c0_38, %c384] : memref<8x3200xbf16, #tpu.memory_space<vmem>>, vector<8x128xbf16>
      tpu.vector_store %arg10[%c0_38, %c384], %60 {strides = array<i32>} : memref<8x3200xbf16, #tpu.memory_space<vmem>>, vector<8x128xbf16>,
      %c4 = arith.constant 4 : index
      %c0_39 = arith.constant 0 : index
      %c0_40 = arith.constant 0 : index
      %62 = vector.load %arg2[%c4, %c0_39, %c0_40] : memref<25x8x768xbf16, #tpu.memory_space<vmem>>, vector<1x8x768xbf16>
      %63 = vector.shape_cast %62 : vector<1x8x768xbf16> to vector<8x768xbf16>
      %cst_41 = arith.constant dense<0.000000e+00> : vector<8x128xf32>
      %64 = tpu.matmul %63, %15, %cst_41 {dimension_numbers = #tpu.dot_dimension_numbers<[1], [0], [0], [1], [0, 0, 1, 1], [], []>} : vector<8x768xbf16>, vector<768x128xbf16>, vector<8x128xf32> -> vector<8x128xf32>
      %65 = vector.broadcast %16 : vector<1x128xf32> to vector<8x128xf32>
      %66 = arith.mulf %64, %65 : vector<8x128xf32>
      %67 = vector.broadcast %17 : vector<1x128xf32> to vector<8x128xf32>
      %68 = arith.addf %66, %67 : vector<8x128xf32>
      %cst_42 = arith.constant 0.000000e+00 : f32
      %69 = vector.broadcast %cst_42 : f32 to vector<8x128xf32>
      %70 = arith.maximumf %68, %69 : vector<8x128xf32>
      %71 = arith.truncf %70 : vector<8x128xf32> to vector<8x128xbf16>
      %c0_43 = arith.constant 0 : index
      %c512 = arith.constant 512 : index
      %72 = vector.load %arg10[%c0_43, %c512] : memref<8x3200xbf16, #tpu.memory_space<vmem>>, vector<8x128xbf16>
      tpu.vector_store %arg10[%c0_43, %c512], %71 {strides = array<i32>} : memref<8x3200xbf16, #tpu.memory_space<vmem>>, vector<8x128xbf16>,
      %c5 = arith.constant 5 : index
      %c0_44 = arith.constant 0 : index
      %c0_45 = arith.constant 0 : index
      %73 = vector.load %arg2[%c5, %c0_44, %c0_45] : memref<25x8x768xbf16, #tpu.memory_space<vmem>>, vector<1x8x768xbf16>
      %74 = vector.shape_cast %73 : vector<1x8x768xbf16> to vector<8x768xbf16>
      %cst_46 = arith.constant dense<0.000000e+00> : vector<8x128xf32>
      %75 = tpu.matmul %74, %15, %cst_46 {dimension_numbers = #tpu.dot_dimension_numbers<[1], [0], [0], [1], [0, 0, 1, 1], [], []>} : vector<8x768xbf16>, vector<768x128xbf16>, vector<8x128xf32> -> vector<8x128xf32>
      %76 = vector.broadcast %16 : vector<1x128xf32> to vector<8x128xf32>
      %77 = arith.mulf %75, %76 : vector<8x128xf32>
      %78 = vector.broadcast %17 : vector<1x128xf32> to vector<8x128xf32>
      %79 = arith.addf %77, %78 : vector<8x128xf32>
      %cst_47 = arith.constant 0.000000e+00 : f32
      %80 = vector.broadcast %cst_47 : f32 to vector<8x128xf32>
      %81 = arith.maximumf %79, %80 : vector<8x128xf32>
      %82 = arith.truncf %81 : vector<8x128xf32> to vector<8x128xbf16>
      %c0_48 = arith.constant 0 : index
      %c640 = arith.constant 640 : index
      %83 = vector.load %arg10[%c0_48, %c640] : memref<8x3200xbf16, #tpu.memory_space<vmem>>, vector<8x128xbf16>
      tpu.vector_store %arg10[%c0_48, %c640], %82 {strides = array<i32>} : memref<8x3200xbf16, #tpu.memory_space<vmem>>, vector<8x128xbf16>,
      %c6 = arith.constant 6 : index
      %c0_49 = arith.constant 0 : index
      %c0_50 = arith.constant 0 : index
      %84 = vector.load %arg2[%c6, %c0_49, %c0_50] : memref<25x8x768xbf16, #tpu.memory_space<vmem>>, vector<1x8x768xbf16>
      %85 = vector.shape_cast %84 : vector<1x8x768xbf16> to vector<8x768xbf16>
      %cst_51 = arith.constant dense<0.000000e+00> : vector<8x128xf32>
      %86 = tpu.matmul %85, %15, %cst_51 {dimension_numbers = #tpu.dot_dimension_numbers<[1], [0], [0], [1], [0, 0, 1, 1], [], []>} : vector<8x768xbf16>, vector<768x128xbf16>, vector<8x128xf32> -> vector<8x128xf32>
      %87 = vector.broadcast %16 : vector<1x128xf32> to vector<8x128xf32>
      %88 = arith.mulf %86, %87 : vector<8x128xf32>
      %89 = vector.broadcast %17 : vector<1x128xf32> to vector<8x128xf32>
      %90 = arith.addf %88, %89 : vector<8x128xf32>
      %cst_52 = arith.constant 0.000000e+00 : f32
      %91 = vector.broadcast %cst_52 : f32 to vector<8x128xf32>
      %92 = arith.maximumf %90, %91 : vector<8x128xf32>
      %93 = arith.truncf %92 : vector<8x128xf32> to vector<8x128xbf16>
      %c0_53 = arith.constant 0 : index
      %c768 = arith.constant 768 : index
      %94 = vector.load %arg10[%c0_53, %c768] : memref<8x3200xbf16, #tpu.memory_space<vmem>>, vector<8x128xbf16>
      tpu.vector_store %arg10[%c0_53, %c768], %93 {strides = array<i32>} : memref<8x3200xbf16, #tpu.memory_space<vmem>>, vector<8x128xbf16>,
      %c7 = arith.constant 7 : index
      %c0_54 = arith.constant 0 : index
      %c0_55 = arith.constant 0 : index
      %95 = vector.load %arg2[%c7, %c0_54, %c0_55] : memref<25x8x768xbf16, #tpu.memory_space<vmem>>, vector<1x8x768xbf16>
      %96 = vector.shape_cast %95 : vector<1x8x768xbf16> to vector<8x768xbf16>
      %cst_56 = arith.constant dense<0.000000e+00> : vector<8x128xf32>
      %97 = tpu.matmul %96, %15, %cst_56 {dimension_numbers = #tpu.dot_dimension_numbers<[1], [0], [0], [1], [0, 0, 1, 1], [], []>} : vector<8x768xbf16>, vector<768x128xbf16>, vector<8x128xf32> -> vector<8x128xf32>
      %98 = vector.broadcast %16 : vector<1x128xf32> to vector<8x128xf32>
      %99 = arith.mulf %97, %98 : vector<8x128xf32>
      %100 = vector.broadcast %17 : vector<1x128xf32> to vector<8x128xf32>
      %101 = arith.addf %99, %100 : vector<8x128xf32>
      %cst_57 = arith.constant 0.000000e+00 : f32
      %102 = vector.broadcast %cst_57 : f32 to vector<8x128xf32>
      %103 = arith.maximumf %101, %102 : vector<8x128xf32>
      %104 = arith.truncf %103 : vector<8x128xf32> to vector<8x128xbf16>
      %c0_58 = arith.constant 0 : index
      %c896 = arith.constant 896 : index
      %105 = vector.load %arg10[%c0_58, %c896] : memref<8x3200xbf16, #tpu.memory_space<vmem>>, vector<8x128xbf16>
      tpu.vector_store %arg10[%c0_58, %c896], %104 {strides = array<i32>} : memref<8x3200xbf16, #tpu.memory_space<vmem>>, vector<8x128xbf16>,
      %c8 = arith.constant 8 : index
      %c0_59 = arith.constant 0 : index
      %c0_60 = arith.constant 0 : index
      %106 = vector.load %arg2[%c8, %c0_59, %c0_60] : memref<25x8x768xbf16, #tpu.memory_space<vmem>>, vector<1x8x768xbf16>
      %107 = vector.shape_cast %106 : vector<1x8x768xbf16> to vector<8x768xbf16>
      %cst_61 = arith.constant dense<0.000000e+00> : vector<8x128xf32>
      %108 = tpu.matmul %107, %15, %cst_61 {dimension_numbers = #tpu.dot_dimension_numbers<[1], [0], [0], [1], [0, 0, 1, 1], [], []>} : vector<8x768xbf16>, vector<768x128xbf16>, vector<8x128xf32> -> vector<8x128xf32>
      %109 = vector.broadcast %16 : vector<1x128xf32> to vector<8x128xf32>
      %110 = arith.mulf %108, %109 : vector<8x128xf32>
      %111 = vector.broadcast %17 : vector<1x128xf32> to vector<8x128xf32>
      %112 = arith.addf %110, %111 : vector<8x128xf32>
      %cst_62 = arith.constant 0.000000e+00 : f32
      %113 = vector.broadcast %cst_62 : f32 to vector<8x128xf32>
      %114 = arith.maximumf %112, %113 : vector<8x128xf32>
      %115 = arith.truncf %114 : vector<8x128xf32> to vector<8x128xbf16>
      %c0_63 = arith.constant 0 : index
      %c1024 = arith.constant 1024 : index
      %116 = vector.load %arg10[%c0_63, %c1024] : memref<8x3200xbf16, #tpu.memory_space<vmem>>, vector<8x128xbf16>
      tpu.vector_store %arg10[%c0_63, %c1024], %115 {strides = array<i32>} : memref<8x3200xbf16, #tpu.memory_space<vmem>>, vector<8x128xbf16>,
      %c9 = arith.constant 9 : index
      %c0_64 = arith.constant 0 : index
      %c0_65 = arith.constant 0 : index
      %117 = vector.load %arg2[%c9, %c0_64, %c0_65] : memref<25x8x768xbf16, #tpu.memory_space<vmem>>, vector<1x8x768xbf16>
      %118 = vector.shape_cast %117 : vector<1x8x768xbf16> to vector<8x768xbf16>
      %cst_66 = arith.constant dense<0.000000e+00> : vector<8x128xf32>
      %119 = tpu.matmul %118, %15, %cst_66 {dimension_numbers = #tpu.dot_dimension_numbers<[1], [0], [0], [1], [0, 0, 1, 1], [], []>} : vector<8x768xbf16>, vector<768x128xbf16>, vector<8x128xf32> -> vector<8x128xf32>
      %120 = vector.broadcast %16 : vector<1x128xf32> to vector<8x128xf32>
      %121 = arith.mulf %119, %120 : vector<8x128xf32>
      %122 = vector.broadcast %17 : vector<1x128xf32> to vector<8x128xf32>
      %123 = arith.addf %121, %122 : vector<8x128xf32>
      %cst_67 = arith.constant 0.000000e+00 : f32
      %124 = vector.broadcast %cst_67 : f32 to vector<8x128xf32>
      %125 = arith.maximumf %123, %124 : vector<8x128xf32>
      %126 = arith.truncf %125 : vector<8x128xf32> to vector<8x128xbf16>
      %c0_68 = arith.constant 0 : index
      %c1152 = arith.constant 1152 : index
      %127 = vector.load %arg10[%c0_68, %c1152] : memref<8x3200xbf16, #tpu.memory_space<vmem>>, vector<8x128xbf16>
      tpu.vector_store %arg10[%c0_68, %c1152], %126 {strides = array<i32>} : memref<8x3200xbf16, #tpu.memory_space<vmem>>, vector<8x128xbf16>,
      %c10 = arith.constant 10 : index
      %c0_69 = arith.constant 0 : index
      %c0_70 = arith.constant 0 : index
      %128 = vector.load %arg2[%c10, %c0_69, %c0_70] : memref<25x8x768xbf16, #tpu.memory_space<vmem>>, vector<1x8x768xbf16>
      %129 = vector.shape_cast %128 : vector<1x8x768xbf16> to vector<8x768xbf16>
      %cst_71 = arith.constant dense<0.000000e+00> : vector<8x128xf32>
      %130 = tpu.matmul %129, %15, %cst_71 {dimension_numbers = #tpu.dot_dimension_numbers<[1], [0], [0], [1], [0, 0, 1, 1], [], []>} : vector<8x768xbf16>, vector<768x128xbf16>, vector<8x128xf32> -> vector<8x128xf32>
      %131 = vector.broadcast %16 : vector<1x128xf32> to vector<8x128xf32>
      %132 = arith.mulf %130, %131 : vector<8x128xf32>
      %133 = vector.broadcast %17 : vector<1x128xf32> to vector<8x128xf32>
      %134 = arith.addf %132, %133 : vector<8x128xf32>
      %cst_72 = arith.constant 0.000000e+00 : f32
      %135 = vector.broadcast %cst_72 : f32 to vector<8x128xf32>
      %136 = arith.maximumf %134, %135 : vector<8x128xf32>
      %137 = arith.truncf %136 : vector<8x128xf32> to vector<8x128xbf16>
      %c0_73 = arith.constant 0 : index
      %c1280 = arith.constant 1280 : index
      %138 = vector.load %arg10[%c0_73, %c1280] : memref<8x3200xbf16, #tpu.memory_space<vmem>>, vector<8x128xbf16>
      tpu.vector_store %arg10[%c0_73, %c1280], %137 {strides = array<i32>} : memref<8x3200xbf16, #tpu.memory_space<vmem>>, vector<8x128xbf16>,
      %c11 = arith.constant 11 : index
      %c0_74 = arith.constant 0 : index
      %c0_75 = arith.constant 0 : index
      %139 = vector.load %arg2[%c11, %c0_74, %c0_75] : memref<25x8x768xbf16, #tpu.memory_space<vmem>>, vector<1x8x768xbf16>
      %140 = vector.shape_cast %139 : vector<1x8x768xbf16> to vector<8x768xbf16>
      %cst_76 = arith.constant dense<0.000000e+00> : vector<8x128xf32>
      %141 = tpu.matmul %140, %15, %cst_76 {dimension_numbers = #tpu.dot_dimension_numbers<[1], [0], [0], [1], [0, 0, 1, 1], [], []>} : vector<8x768xbf16>, vector<768x128xbf16>, vector<8x128xf32> -> vector<8x128xf32>
      %142 = vector.broadcast %16 : vector<1x128xf32> to vector<8x128xf32>
      %143 = arith.mulf %141, %142 : vector<8x128xf32>
      %144 = vector.broadcast %17 : vector<1x128xf32> to vector<8x128xf32>
      %145 = arith.addf %143, %144 : vector<8x128xf32>
      %cst_77 = arith.constant 0.000000e+00 : f32
      %146 = vector.broadcast %cst_77 : f32 to vector<8x128xf32>
      %147 = arith.maximumf %145, %146 : vector<8x128xf32>
      %148 = arith.truncf %147 : vector<8x128xf32> to vector<8x128xbf16>
      %c0_78 = arith.constant 0 : index
      %c1408 = arith.constant 1408 : index
      %149 = vector.load %arg10[%c0_78, %c1408] : memref<8x3200xbf16, #tpu.memory_space<vmem>>, vector<8x128xbf16>
      tpu.vector_store %arg10[%c0_78, %c1408], %148 {strides = array<i32>} : memref<8x3200xbf16, #tpu.memory_space<vmem>>, vector<8x128xbf16>,
      %c12 = arith.constant 12 : index
      %c0_79 = arith.constant 0 : index
      %c0_80 = arith.constant 0 : index
      %150 = vector.load %arg2[%c12, %c0_79, %c0_80] : memref<25x8x768xbf16, #tpu.memory_space<vmem>>, vector<1x8x768xbf16>
      %151 = vector.shape_cast %150 : vector<1x8x768xbf16> to vector<8x768xbf16>
      %cst_81 = arith.constant dense<0.000000e+00> : vector<8x128xf32>
      %152 = tpu.matmul %151, %15, %cst_81 {dimension_numbers = #tpu.dot_dimension_numbers<[1], [0], [0], [1], [0, 0, 1, 1], [], []>} : vector<8x768xbf16>, vector<768x128xbf16>, vector<8x128xf32> -> vector<8x128xf32>
      %153 = vector.broadcast %16 : vector<1x128xf32> to vector<8x128xf32>
      %154 = arith.mulf %152, %153 : vector<8x128xf32>
      %155 = vector.broadcast %17 : vector<1x128xf32> to vector<8x128xf32>
      %156 = arith.addf %154, %155 : vector<8x128xf32>
      %cst_82 = arith.constant 0.000000e+00 : f32
      %157 = vector.broadcast %cst_82 : f32 to vector<8x128xf32>
      %158 = arith.maximumf %156, %157 : vector<8x128xf32>
      %159 = arith.truncf %158 : vector<8x128xf32> to vector<8x128xbf16>
      %c0_83 = arith.constant 0 : index
      %c1536 = arith.constant 1536 : index
      %160 = vector.load %arg10[%c0_83, %c1536] : memref<8x3200xbf16, #tpu.memory_space<vmem>>, vector<8x128xbf16>
      tpu.vector_store %arg10[%c0_83, %c1536], %159 {strides = array<i32>} : memref<8x3200xbf16, #tpu.memory_space<vmem>>, vector<8x128xbf16>,
      %c13 = arith.constant 13 : index
      %c0_84 = arith.constant 0 : index
      %c0_85 = arith.constant 0 : index
      %161 = vector.load %arg2[%c13, %c0_84, %c0_85] : memref<25x8x768xbf16, #tpu.memory_space<vmem>>, vector<1x8x768xbf16>
      %162 = vector.shape_cast %161 : vector<1x8x768xbf16> to vector<8x768xbf16>
      %cst_86 = arith.constant dense<0.000000e+00> : vector<8x128xf32>
      %163 = tpu.matmul %162, %15, %cst_86 {dimension_numbers = #tpu.dot_dimension_numbers<[1], [0], [0], [1], [0, 0, 1, 1], [], []>} : vector<8x768xbf16>, vector<768x128xbf16>, vector<8x128xf32> -> vector<8x128xf32>
      %164 = vector.broadcast %16 : vector<1x128xf32> to vector<8x128xf32>
      %165 = arith.mulf %163, %164 : vector<8x128xf32>
      %166 = vector.broadcast %17 : vector<1x128xf32> to vector<8x128xf32>
      %167 = arith.addf %165, %166 : vector<8x128xf32>
      %cst_87 = arith.constant 0.000000e+00 : f32
      %168 = vector.broadcast %cst_87 : f32 to vector<8x128xf32>
      %169 = arith.maximumf %167, %168 : vector<8x128xf32>
      %170 = arith.truncf %169 : vector<8x128xf32> to vector<8x128xbf16>
      %c0_88 = arith.constant 0 : index
      %c1664 = arith.constant 1664 : index
      %171 = vector.load %arg10[%c0_88, %c1664] : memref<8x3200xbf16, #tpu.memory_space<vmem>>, vector<8x128xbf16>
      tpu.vector_store %arg10[%c0_88, %c1664], %170 {strides = array<i32>} : memref<8x3200xbf16, #tpu.memory_space<vmem>>, vector<8x128xbf16>,
      %c14 = arith.constant 14 : index
      %c0_89 = arith.constant 0 : index
      %c0_90 = arith.constant 0 : index
      %172 = vector.load %arg2[%c14, %c0_89, %c0_90] : memref<25x8x768xbf16, #tpu.memory_space<vmem>>, vector<1x8x768xbf16>
      %173 = vector.shape_cast %172 : vector<1x8x768xbf16> to vector<8x768xbf16>
      %cst_91 = arith.constant dense<0.000000e+00> : vector<8x128xf32>
      %174 = tpu.matmul %173, %15, %cst_91 {dimension_numbers = #tpu.dot_dimension_numbers<[1], [0], [0], [1], [0, 0, 1, 1], [], []>} : vector<8x768xbf16>, vector<768x128xbf16>, vector<8x128xf32> -> vector<8x128xf32>
      %175 = vector.broadcast %16 : vector<1x128xf32> to vector<8x128xf32>
      %176 = arith.mulf %174, %175 : vector<8x128xf32>
      %177 = vector.broadcast %17 : vector<1x128xf32> to vector<8x128xf32>
      %178 = arith.addf %176, %177 : vector<8x128xf32>
      %cst_92 = arith.constant 0.000000e+00 : f32
      %179 = vector.broadcast %cst_92 : f32 to vector<8x128xf32>
      %180 = arith.maximumf %178, %179 : vector<8x128xf32>
      %181 = arith.truncf %180 : vector<8x128xf32> to vector<8x128xbf16>
      %c0_93 = arith.constant 0 : index
      %c1792 = arith.constant 1792 : index
      %182 = vector.load %arg10[%c0_93, %c1792] : memref<8x3200xbf16, #tpu.memory_space<vmem>>, vector<8x128xbf16>
      tpu.vector_store %arg10[%c0_93, %c1792], %181 {strides = array<i32>} : memref<8x3200xbf16, #tpu.memory_space<vmem>>, vector<8x128xbf16>,
      %c15 = arith.constant 15 : index
      %c0_94 = arith.constant 0 : index
      %c0_95 = arith.constant 0 : index
      %183 = vector.load %arg2[%c15, %c0_94, %c0_95] : memref<25x8x768xbf16, #tpu.memory_space<vmem>>, vector<1x8x768xbf16>
      %184 = vector.shape_cast %183 : vector<1x8x768xbf16> to vector<8x768xbf16>
      %cst_96 = arith.constant dense<0.000000e+00> : vector<8x128xf32>
      %185 = tpu.matmul %184, %15, %cst_96 {dimension_numbers = #tpu.dot_dimension_numbers<[1], [0], [0], [1], [0, 0, 1, 1], [], []>} : vector<8x768xbf16>, vector<768x128xbf16>, vector<8x128xf32> -> vector<8x128xf32>
      %186 = vector.broadcast %16 : vector<1x128xf32> to vector<8x128xf32>
      %187 = arith.mulf %185, %186 : vector<8x128xf32>
      %188 = vector.broadcast %17 : vector<1x128xf32> to vector<8x128xf32>
      %189 = arith.addf %187, %188 : vector<8x128xf32>
      %cst_97 = arith.constant 0.000000e+00 : f32
      %190 = vector.broadcast %cst_97 : f32 to vector<8x128xf32>
      %191 = arith.maximumf %189, %190 : vector<8x128xf32>
      %192 = arith.truncf %191 : vector<8x128xf32> to vector<8x128xbf16>
      %c0_98 = arith.constant 0 : index
      %c1920 = arith.constant 1920 : index
      %193 = vector.load %arg10[%c0_98, %c1920] : memref<8x3200xbf16, #tpu.memory_space<vmem>>, vector<8x128xbf16>
      tpu.vector_store %arg10[%c0_98, %c1920], %192 {strides = array<i32>} : memref<8x3200xbf16, #tpu.memory_space<vmem>>, vector<8x128xbf16>,
      %c16 = arith.constant 16 : index
      %c0_99 = arith.constant 0 : index
      %c0_100 = arith.constant 0 : index
      %194 = vector.load %arg2[%c16, %c0_99, %c0_100] : memref<25x8x768xbf16, #tpu.memory_space<vmem>>, vector<1x8x768xbf16>
      %195 = vector.shape_cast %194 : vector<1x8x768xbf16> to vector<8x768xbf16>
      %cst_101 = arith.constant dense<0.000000e+00> : vector<8x128xf32>
      %196 = tpu.matmul %195, %15, %cst_101 {dimension_numbers = #tpu.dot_dimension_numbers<[1], [0], [0], [1], [0, 0, 1, 1], [], []>} : vector<8x768xbf16>, vector<768x128xbf16>, vector<8x128xf32> -> vector<8x128xf32>
      %197 = vector.broadcast %16 : vector<1x128xf32> to vector<8x128xf32>
      %198 = arith.mulf %196, %197 : vector<8x128xf32>
      %199 = vector.broadcast %17 : vector<1x128xf32> to vector<8x128xf32>
      %200 = arith.addf %198, %199 : vector<8x128xf32>
      %cst_102 = arith.constant 0.000000e+00 : f32
      %201 = vector.broadcast %cst_102 : f32 to vector<8x128xf32>
      %202 = arith.maximumf %200, %201 : vector<8x128xf32>
      %203 = arith.truncf %202 : vector<8x128xf32> to vector<8x128xbf16>
      %c0_103 = arith.constant 0 : index
      %c2048 = arith.constant 2048 : index
      %204 = vector.load %arg10[%c0_103, %c2048] : memref<8x3200xbf16, #tpu.memory_space<vmem>>, vector<8x128xbf16>
      tpu.vector_store %arg10[%c0_103, %c2048], %203 {strides = array<i32>} : memref<8x3200xbf16, #tpu.memory_space<vmem>>, vector<8x128xbf16>,
      %c17 = arith.constant 17 : index
      %c0_104 = arith.constant 0 : index
      %c0_105 = arith.constant 0 : index
      %205 = vector.load %arg2[%c17, %c0_104, %c0_105] : memref<25x8x768xbf16, #tpu.memory_space<vmem>>, vector<1x8x768xbf16>
      %206 = vector.shape_cast %205 : vector<1x8x768xbf16> to vector<8x768xbf16>
      %cst_106 = arith.constant dense<0.000000e+00> : vector<8x128xf32>
      %207 = tpu.matmul %206, %15, %cst_106 {dimension_numbers = #tpu.dot_dimension_numbers<[1], [0], [0], [1], [0, 0, 1, 1], [], []>} : vector<8x768xbf16>, vector<768x128xbf16>, vector<8x128xf32> -> vector<8x128xf32>
      %208 = vector.broadcast %16 : vector<1x128xf32> to vector<8x128xf32>
      %209 = arith.mulf %207, %208 : vector<8x128xf32>
      %210 = vector.broadcast %17 : vector<1x128xf32> to vector<8x128xf32>
      %211 = arith.addf %209, %210 : vector<8x128xf32>
      %cst_107 = arith.constant 0.000000e+00 : f32
      %212 = vector.broadcast %cst_107 : f32 to vector<8x128xf32>
      %213 = arith.maximumf %211, %212 : vector<8x128xf32>
      %214 = arith.truncf %213 : vector<8x128xf32> to vector<8x128xbf16>
      %c0_108 = arith.constant 0 : index
      %c2176 = arith.constant 2176 : index
      %215 = vector.load %arg10[%c0_108, %c2176] : memref<8x3200xbf16, #tpu.memory_space<vmem>>, vector<8x128xbf16>
      tpu.vector_store %arg10[%c0_108, %c2176], %214 {strides = array<i32>} : memref<8x3200xbf16, #tpu.memory_space<vmem>>, vector<8x128xbf16>,
      %c18 = arith.constant 18 : index
      %c0_109 = arith.constant 0 : index
      %c0_110 = arith.constant 0 : index
      %216 = vector.load %arg2[%c18, %c0_109, %c0_110] : memref<25x8x768xbf16, #tpu.memory_space<vmem>>, vector<1x8x768xbf16>
      %217 = vector.shape_cast %216 : vector<1x8x768xbf16> to vector<8x768xbf16>
      %cst_111 = arith.constant dense<0.000000e+00> : vector<8x128xf32>
      %218 = tpu.matmul %217, %15, %cst_111 {dimension_numbers = #tpu.dot_dimension_numbers<[1], [0], [0], [1], [0, 0, 1, 1], [], []>} : vector<8x768xbf16>, vector<768x128xbf16>, vector<8x128xf32> -> vector<8x128xf32>
      %219 = vector.broadcast %16 : vector<1x128xf32> to vector<8x128xf32>
      %220 = arith.mulf %218, %219 : vector<8x128xf32>
      %221 = vector.broadcast %17 : vector<1x128xf32> to vector<8x128xf32>
      %222 = arith.addf %220, %221 : vector<8x128xf32>
      %cst_112 = arith.constant 0.000000e+00 : f32
      %223 = vector.broadcast %cst_112 : f32 to vector<8x128xf32>
      %224 = arith.maximumf %222, %223 : vector<8x128xf32>
      %225 = arith.truncf %224 : vector<8x128xf32> to vector<8x128xbf16>
      %c0_113 = arith.constant 0 : index
      %c2304 = arith.constant 2304 : index
      %226 = vector.load %arg10[%c0_113, %c2304] : memref<8x3200xbf16, #tpu.memory_space<vmem>>, vector<8x128xbf16>
      tpu.vector_store %arg10[%c0_113, %c2304], %225 {strides = array<i32>} : memref<8x3200xbf16, #tpu.memory_space<vmem>>, vector<8x128xbf16>,
      %c19 = arith.constant 19 : index
      %c0_114 = arith.constant 0 : index
      %c0_115 = arith.constant 0 : index
      %227 = vector.load %arg2[%c19, %c0_114, %c0_115] : memref<25x8x768xbf16, #tpu.memory_space<vmem>>, vector<1x8x768xbf16>
      %228 = vector.shape_cast %227 : vector<1x8x768xbf16> to vector<8x768xbf16>
      %cst_116 = arith.constant dense<0.000000e+00> : vector<8x128xf32>
      %229 = tpu.matmul %228, %15, %cst_116 {dimension_numbers = #tpu.dot_dimension_numbers<[1], [0], [0], [1], [0, 0, 1, 1], [], []>} : vector<8x768xbf16>, vector<768x128xbf16>, vector<8x128xf32> -> vector<8x128xf32>
      %230 = vector.broadcast %16 : vector<1x128xf32> to vector<8x128xf32>
      %231 = arith.mulf %229, %230 : vector<8x128xf32>
      %232 = vector.broadcast %17 : vector<1x128xf32> to vector<8x128xf32>
      %233 = arith.addf %231, %232 : vector<8x128xf32>
      %cst_117 = arith.constant 0.000000e+00 : f32
      %234 = vector.broadcast %cst_117 : f32 to vector<8x128xf32>
      %235 = arith.maximumf %233, %234 : vector<8x128xf32>
      %236 = arith.truncf %235 : vector<8x128xf32> to vector<8x128xbf16>
      %c0_118 = arith.constant 0 : index
      %c2432 = arith.constant 2432 : index
      %237 = vector.load %arg10[%c0_118, %c2432] : memref<8x3200xbf16, #tpu.memory_space<vmem>>, vector<8x128xbf16>
      tpu.vector_store %arg10[%c0_118, %c2432], %236 {strides = array<i32>} : memref<8x3200xbf16, #tpu.memory_space<vmem>>, vector<8x128xbf16>,
      %c20 = arith.constant 20 : index
      %c0_119 = arith.constant 0 : index
      %c0_120 = arith.constant 0 : index
      %238 = vector.load %arg2[%c20, %c0_119, %c0_120] : memref<25x8x768xbf16, #tpu.memory_space<vmem>>, vector<1x8x768xbf16>
      %239 = vector.shape_cast %238 : vector<1x8x768xbf16> to vector<8x768xbf16>
      %cst_121 = arith.constant dense<0.000000e+00> : vector<8x128xf32>
      %240 = tpu.matmul %239, %15, %cst_121 {dimension_numbers = #tpu.dot_dimension_numbers<[1], [0], [0], [1], [0, 0, 1, 1], [], []>} : vector<8x768xbf16>, vector<768x128xbf16>, vector<8x128xf32> -> vector<8x128xf32>
      %241 = vector.broadcast %16 : vector<1x128xf32> to vector<8x128xf32>
      %242 = arith.mulf %240, %241 : vector<8x128xf32>
      %243 = vector.broadcast %17 : vector<1x128xf32> to vector<8x128xf32>
      %244 = arith.addf %242, %243 : vector<8x128xf32>
      %cst_122 = arith.constant 0.000000e+00 : f32
      %245 = vector.broadcast %cst_122 : f32 to vector<8x128xf32>
      %246 = arith.maximumf %244, %245 : vector<8x128xf32>
      %247 = arith.truncf %246 : vector<8x128xf32> to vector<8x128xbf16>
      %c0_123 = arith.constant 0 : index
      %c2560 = arith.constant 2560 : index
      %248 = vector.load %arg10[%c0_123, %c2560] : memref<8x3200xbf16, #tpu.memory_space<vmem>>, vector<8x128xbf16>
      tpu.vector_store %arg10[%c0_123, %c2560], %247 {strides = array<i32>} : memref<8x3200xbf16, #tpu.memory_space<vmem>>, vector<8x128xbf16>,
      %c21 = arith.constant 21 : index
      %c0_124 = arith.constant 0 : index
      %c0_125 = arith.constant 0 : index
      %249 = vector.load %arg2[%c21, %c0_124, %c0_125] : memref<25x8x768xbf16, #tpu.memory_space<vmem>>, vector<1x8x768xbf16>
      %250 = vector.shape_cast %249 : vector<1x8x768xbf16> to vector<8x768xbf16>
      %cst_126 = arith.constant dense<0.000000e+00> : vector<8x128xf32>
      %251 = tpu.matmul %250, %15, %cst_126 {dimension_numbers = #tpu.dot_dimension_numbers<[1], [0], [0], [1], [0, 0, 1, 1], [], []>} : vector<8x768xbf16>, vector<768x128xbf16>, vector<8x128xf32> -> vector<8x128xf32>
      %252 = vector.broadcast %16 : vector<1x128xf32> to vector<8x128xf32>
      %253 = arith.mulf %251, %252 : vector<8x128xf32>
      %254 = vector.broadcast %17 : vector<1x128xf32> to vector<8x128xf32>
      %255 = arith.addf %253, %254 : vector<8x128xf32>
      %cst_127 = arith.constant 0.000000e+00 : f32
      %256 = vector.broadcast %cst_127 : f32 to vector<8x128xf32>
      %257 = arith.maximumf %255, %256 : vector<8x128xf32>
      %258 = arith.truncf %257 : vector<8x128xf32> to vector<8x128xbf16>
      %c0_128 = arith.constant 0 : index
      %c2688 = arith.constant 2688 : index
      %259 = vector.load %arg10[%c0_128, %c2688] : memref<8x3200xbf16, #tpu.memory_space<vmem>>, vector<8x128xbf16>
      tpu.vector_store %arg10[%c0_128, %c2688], %258 {strides = array<i32>} : memref<8x3200xbf16, #tpu.memory_space<vmem>>, vector<8x128xbf16>,
      %c22 = arith.constant 22 : index
      %c0_129 = arith.constant 0 : index
      %c0_130 = arith.constant 0 : index
      %260 = vector.load %arg2[%c22, %c0_129, %c0_130] : memref<25x8x768xbf16, #tpu.memory_space<vmem>>, vector<1x8x768xbf16>
      %261 = vector.shape_cast %260 : vector<1x8x768xbf16> to vector<8x768xbf16>
      %cst_131 = arith.constant dense<0.000000e+00> : vector<8x128xf32>
      %262 = tpu.matmul %261, %15, %cst_131 {dimension_numbers = #tpu.dot_dimension_numbers<[1], [0], [0], [1], [0, 0, 1, 1], [], []>} : vector<8x768xbf16>, vector<768x128xbf16>, vector<8x128xf32> -> vector<8x128xf32>
      %263 = vector.broadcast %16 : vector<1x128xf32> to vector<8x128xf32>
      %264 = arith.mulf %262, %263 : vector<8x128xf32>
      %265 = vector.broadcast %17 : vector<1x128xf32> to vector<8x128xf32>
      %266 = arith.addf %264, %265 : vector<8x128xf32>
      %cst_132 = arith.constant 0.000000e+00 : f32
      %267 = vector.broadcast %cst_132 : f32 to vector<8x128xf32>
      %268 = arith.maximumf %266, %267 : vector<8x128xf32>
      %269 = arith.truncf %268 : vector<8x128xf32> to vector<8x128xbf16>
      %c0_133 = arith.constant 0 : index
      %c2816 = arith.constant 2816 : index
      %270 = vector.load %arg10[%c0_133, %c2816] : memref<8x3200xbf16, #tpu.memory_space<vmem>>, vector<8x128xbf16>
      tpu.vector_store %arg10[%c0_133, %c2816], %269 {strides = array<i32>} : memref<8x3200xbf16, #tpu.memory_space<vmem>>, vector<8x128xbf16>,
      %c23 = arith.constant 23 : index
      %c0_134 = arith.constant 0 : index
      %c0_135 = arith.constant 0 : index
      %271 = vector.load %arg2[%c23, %c0_134, %c0_135] : memref<25x8x768xbf16, #tpu.memory_space<vmem>>, vector<1x8x768xbf16>
      %272 = vector.shape_cast %271 : vector<1x8x768xbf16> to vector<8x768xbf16>
      %cst_136 = arith.constant dense<0.000000e+00> : vector<8x128xf32>
      %273 = tpu.matmul %272, %15, %cst_136 {dimension_numbers = #tpu.dot_dimension_numbers<[1], [0], [0], [1], [0, 0, 1, 1], [], []>} : vector<8x768xbf16>, vector<768x128xbf16>, vector<8x128xf32> -> vector<8x128xf32>
      %274 = vector.broadcast %16 : vector<1x128xf32> to vector<8x128xf32>
      %275 = arith.mulf %273, %274 : vector<8x128xf32>
      %276 = vector.broadcast %17 : vector<1x128xf32> to vector<8x128xf32>
      %277 = arith.addf %275, %276 : vector<8x128xf32>
      %cst_137 = arith.constant 0.000000e+00 : f32
      %278 = vector.broadcast %cst_137 : f32 to vector<8x128xf32>
      %279 = arith.maximumf %277, %278 : vector<8x128xf32>
      %280 = arith.truncf %279 : vector<8x128xf32> to vector<8x128xbf16>
      %c0_138 = arith.constant 0 : index
      %c2944 = arith.constant 2944 : index
      %281 = vector.load %arg10[%c0_138, %c2944] : memref<8x3200xbf16, #tpu.memory_space<vmem>>, vector<8x128xbf16>
      tpu.vector_store %arg10[%c0_138, %c2944], %280 {strides = array<i32>} : memref<8x3200xbf16, #tpu.memory_space<vmem>>, vector<8x128xbf16>,
      %c24 = arith.constant 24 : index
      %c0_139 = arith.constant 0 : index
      %c0_140 = arith.constant 0 : index
      %282 = vector.load %arg2[%c24, %c0_139, %c0_140] : memref<25x8x768xbf16, #tpu.memory_space<vmem>>, vector<1x8x768xbf16>
      %283 = vector.shape_cast %282 : vector<1x8x768xbf16> to vector<8x768xbf16>
      %cst_141 = arith.constant dense<0.000000e+00> : vector<8x128xf32>
      %284 = tpu.matmul %283, %15, %cst_141 {dimension_numbers = #tpu.dot_dimension_numbers<[1], [0], [0], [1], [0, 0, 1, 1], [], []>} : vector<8x768xbf16>, vector<768x128xbf16>, vector<8x128xf32> -> vector<8x128xf32>
      %285 = vector.broadcast %16 : vector<1x128xf32> to vector<8x128xf32>
      %286 = arith.mulf %284, %285 : vector<8x128xf32>
      %287 = vector.broadcast %17 : vector<1x128xf32> to vector<8x128xf32>
      %288 = arith.addf %286, %287 : vector<8x128xf32>
      %cst_142 = arith.constant 0.000000e+00 : f32
      %289 = vector.broadcast %cst_142 : f32 to vector<8x128xf32>
      %290 = arith.maximumf %288, %289 : vector<8x128xf32>
      %291 = arith.truncf %290 : vector<8x128xf32> to vector<8x128xbf16>
      %c0_143 = arith.constant 0 : index
      %c3072 = arith.constant 3072 : index
      %292 = vector.load %arg10[%c0_143, %c3072] : memref<8x3200xbf16, #tpu.memory_space<vmem>>, vector<8x128xbf16>
      tpu.vector_store %arg10[%c0_143, %c3072], %291 {strides = array<i32>} : memref<8x3200xbf16, #tpu.memory_space<vmem>>, vector<8x128xbf16>,
    } else {
    }
    %c0 = arith.constant 0 : index
    %c0_1 = arith.constant 0 : index
    %3 = vector.load %arg10[%c0, %c0_1] : memref<8x3200xbf16, #tpu.memory_space<vmem>>, vector<8x3200xbf16>
    %c0_2 = arith.constant 0 : index
    %c0_3 = arith.constant 0 : index
    %4 = vector.load %arg6[%c0_2, %c0_3] : memref<3200x128xbf16, #tpu.memory_space<vmem>>, vector<3200x128xbf16>
    %cst = arith.constant dense<0.000000e+00> : vector<8x128xf32>
    %5 = tpu.matmul %3, %4, %cst {dimension_numbers = #tpu.dot_dimension_numbers<[1], [0], [0], [1], [0, 0, 1, 1], [], []>} : vector<8x3200xbf16>, vector<3200x128xbf16>, vector<8x128xf32> -> vector<8x128xf32>
    %c0_4 = arith.constant 0 : index
    %c0_5 = arith.constant 0 : index
    %6 = vector.load %arg7[%c0_4, %c0_5] : memref<1x128xf32, #tpu.memory_space<vmem>>, vector<1x128xf32>
    %7 = vector.broadcast %6 : vector<1x128xf32> to vector<8x128xf32>
    %8 = arith.mulf %5, %7 : vector<8x128xf32>
    %c0_6 = arith.constant 0 : index
    %c0_7 = arith.constant 0 : index
    %9 = vector.load %arg8[%c0_6, %c0_7] : memref<1x128xf32, #tpu.memory_space<vmem>>, vector<1x128xf32>
    %10 = vector.broadcast %9 : vector<1x128xf32> to vector<8x128xf32>
    %11 = arith.addf %8, %10 : vector<8x128xf32>
    %cst_8 = arith.constant 0.000000e+00 : f32
    %12 = vector.broadcast %cst_8 : f32 to vector<8x128xf32>
    %13 = arith.maximumf %11, %12 : vector<8x128xf32>
    %c0_9 = arith.constant 0 : index
    %c0_10 = arith.constant 0 : index
    %14 = vector.load %arg9[%c0_9, %c0_10] : memref<8x128xf32, #tpu.memory_space<vmem>>, vector<8x128xf32>
    tpu.vector_store %arg9[%c0_9, %c0_10], %13 {strides = array<i32>} : memref<8x128xf32, #tpu.memory_space<vmem>>, vector<8x128xf32>,
    return
  }
  func.func @transform_0(%arg0: i32, %arg1: i32) -> (i32, i32, i32) {
    %c0_i32 = arith.constant 0 : i32
    %c0_i32_0 = arith.constant 0 : i32
    %c0_i32_1 = arith.constant 0 : i32
    %c0_i32_2 = arith.constant 0 : i32
    return %c0_i32, %c0_i32_0, %c0_i32_1 : i32, i32, i32
  }
  func.func @transform_1(%arg0: i32, %arg1: i32) -> (i32, i32) {
    %c0_i32 = arith.constant 0 : i32
    %c0_i32_0 = arith.constant 0 : i32
    %c0_i32_1 = arith.constant 0 : i32
    return %c0_i32, %c0_i32_0 : i32, i32
  }
  func.func @transform_2(%arg0: i32, %arg1: i32) -> (i32, i32) {
    %c0_i32 = arith.constant 0 : i32
    %c0_i32_0 = arith.constant 0 : i32
    %c0_i32_1 = arith.constant 0 : i32
    return %c0_i32, %c0_i32_0 : i32, i32
  }
  func.func @transform_3(%arg0: i32, %arg1: i32) -> (i32, i32) {
    %c0_i32 = arith.constant 0 : i32
    %c0_i32_0 = arith.constant 0 : i32
    %c0_i32_1 = arith.constant 0 : i32
    return %c0_i32, %c0_i32_0 : i32, i32
  }
  func.func @transform_4(%arg0: i32, %arg1: i32) -> (i32, i32) {
    %c3_i32 = arith.constant 3 : i32
    %0 = arith.muli %arg0, %c3_i32 : i32
    %1 = arith.addi %0, %arg1 : i32
    %c0_i32 = arith.constant 0 : i32
    %c0_i32_0 = arith.constant 0 : i32
    return %c0_i32, %1 : i32, i32
  }
  func.func @transform_5(%arg0: i32, %arg1: i32) -> (i32, i32) {
    %c3_i32 = arith.constant 3 : i32
    %0 = arith.muli %arg0, %c3_i32 : i32
    %1 = arith.addi %0, %arg1 : i32
    %c0_i32 = arith.constant 0 : i32
    %c0_i32_0 = arith.constant 0 : i32
    return %c0_i32, %1 : i32, i32
  }
  func.func @transform_6(%arg0: i32, %arg1: i32) -> (i32, i32) {
    %c3_i32 = arith.constant 3 : i32
    %0 = arith.muli %arg0, %c3_i32 : i32
    %1 = arith.addi %0, %arg1 : i32
    %c0_i32 = arith.constant 0 : i32
    %c0_i32_0 = arith.constant 0 : i32
    return %c0_i32, %1 : i32, i32
  }
  func.func @transform_7(%arg0: i32, %arg1: i32) -> (i32, i32) {
    %c3_i32 = arith.constant 3 : i32
    %0 = arith.muli %arg0, %c3_i32 : i32
    %1 = arith.addi %0, %arg1 : i32
    %c0_i32 = arith.constant 0 : i32
    %c0_i32_0 = arith.constant 0 : i32
    return %c0_i32, %1 : i32, i32
  }
}

</mosaic_0001>

<llo_original>
// kernel: inception_aux_forward.1
$region0: #{inception_aux_forward.1}
  #allocation0 [shape = 'u32[]', space=smem, size = 0x4, offset = 0x4, fixed_abs, tag = 'smem constant byte address 0x4 - core index']
  #allocation1 [shape = 'u32[72,128]{1,0:T(1,128)}', space=vmem, size = 0x9000, scoped, tag = 'internal scratch']
  #allocation2 [shape = 'bf16[8,3200]{1,0:T(8,128)(2,1)}', space=vmem, size = 0xc800, scoped, tag = 'scratch operand']
  %s0 = inlined_call_operand.vmem [shape: bf16[25,8,768], index: 0, kind: input, shape index: {}]
  %s1 = inlined_call_operand.vmem [shape: bf16[768,128], index: 1, kind: input, shape index: {}]
  %s2 = inlined_call_operand.vmem [shape: f32[1,128], index: 2, kind: input, shape index: {}]
  %s3 = inlined_call_operand.vmem [shape: f32[1,128], index: 3, kind: input, shape index: {}]
  %s4 = inlined_call_operand.hbm [shape: bf16[3200,768], index: 4, kind: input, shape index: {}]
  %s5 = inlined_call_operand.vmem [shape: f32[1,768], index: 5, kind: input, shape index: {}]
  %s6 = inlined_call_operand.vmem [shape: f32[1,768], index: 6, kind: input, shape index: {}]
  %s7 = inlined_call_operand.vmem [shape: f32[8,768], index: 7, kind: output, shape index: {}]
  %s8 = sld [smem:[#allocation0]]
  $region69: #{inception_aux_forward.1} parent=0
    _
  %s10 = ssub.s32 1, %s8
  %s11 = scalar_select 0, %s10, %s8
  $region1: #{inception_aux_forward.1} parent=0
    #allocation3 [shape = 'u8[1638400]{0}', space=vmem, size = 0x190000, scoped, tag = 'input window, operand 4']
    #allocation4 [shape = 's32[2]{0}', space=sflag, size = 0x8, scoped, tag = 'scoped memory for inception_aux_forward.1']
    %12 = vsyncpa [#allocation4], 0
    %s13 = scalar_lea.sflag [#allocation4], 1
    %14 = vsyncpa %s13, 0
    loop: start=0, step=1, limit=8
    $region2: #{inception_aux_forward.1} parent=1 // loop_pre_header
      _
    $region3: #{inception_aux_forward.1} parent=1 // loop_header
      %s16 = sphi 0, %s20
      %p17 = scmp.ge.s32.totalorder %s16, 8
      %s23 = sphi 0, %s35
      %s24 = sphi 0, %s31
      %s25 = sphi 0, %s23
      %s26 = sphi 0, %s24
      %s27 = sphi 0, %s25
      %s28 = sphi 0, %s26
      %s36 = sphi 0, %s36
      %s38 = sphi 0, %s36
      %s39 = sphi 0, %s38
      %s53 = sphi 0, %s39
      %s57 = sphi 0, %s57
      %s59 = sphi 0, %s57
      %s60 = sphi 0, %s59
      %s74 = sphi 0, %s60
      %s78 = sphi 0, %s78
      %s80 = sphi 0, %s78
      %s81 = sphi 0, %s80
      %s95 = sphi 0, %s81
      %s99 = sphi 0, %s99
      %s101 = sphi 0, %s99
      %s102 = sphi 0, %s101
      %s116 = sphi 0, %s102
      %s126 = sphi 0, %s128
      %s129 = sphi 0, %s126
      %s130 = sphi 0, %s129
      %s146 = sphi 0, %s130
      %s156 = sphi 0, %s158
      %s159 = sphi 0, %s156
      %s160 = sphi 0, %s159
      %s176 = sphi 0, %s160
      %s186 = sphi 0, %s188
      %s189 = sphi 0, %s186
      %s190 = sphi 0, %s189
      %s206 = sphi 0, %s190
      %s216 = sphi 0, %s218
      %s219 = sphi 0, %s216
      %s220 = sphi 0, %s219
      %s236 = sphi 0, %s220
    $region4: #{inception_aux_forward.1} parent=1 // loop_header_branch
      %19 = sbr.rel (%p17) target = $region8
    $region5: #{inception_aux_forward.1} parent=1 // loop_body
      %s21 = ssub.s32 %s16, 1
      %s22 = ssub.s32 %s16, 2
      %s29 = sadd.s32 1, %s24
      %p30 = scmp.ge.s32.totalorder %s29, 3
      %s31 = scalar_select %p30, 0, %s29
      %s32 = sadd.s32 1, %s23
      %s33 = scalar_select %p30, %s32, %s23
      %p34 = scmp.ge.s32.totalorder %s33, 2
      %s35 = scalar_select %p34, 0, %s33
      %s37 = sadd.s32 %s36, 1
      %p40 = scmp.eq.s32.totalorder %s16, 5
      %p41 = scmp.ne.s32.totalorder %s36, %s38
      %p42 = scmp.eq.s32.totalorder %s16, 0
      %p43 = por %p41, %p42
      %p44 = scmp.ne.s32.totalorder %s36, %s38
      %p45 = scmp.eq.s32.totalorder %s21, 5
      %p46 = por %p44, %p45
      %p47 = scmp.ne.s32.totalorder %s38, %s39
      %p48 = scmp.eq.s32.totalorder %s21, 0
      %p49 = por %p47, %p48
      %p50 = scmp.ne.s32.totalorder %s38, %s39
      %p51 = scmp.eq.s32.totalorder %s22, 5
      %p52 = por %p50, %p51
      %p54 = scmp.ne.s32.totalorder %s39, %s53
      %p55 = scmp.eq.s32.totalorder %s22, 0
      %p56 = por %p54, %p55
      %s58 = sadd.s32 %s57, 1
      %p61 = scmp.eq.s32.totalorder %s16, 5
      %p62 = scmp.ne.s32.totalorder %s57, %s59
      %p63 = scmp.eq.s32.totalorder %s16, 0
      %p64 = por %p62, %p63
      %p65 = scmp.ne.s32.totalorder %s57, %s59
      %p66 = scmp.eq.s32.totalorder %s21, 5
      %p67 = por %p65, %p66
      %p68 = scmp.ne.s32.totalorder %s59, %s60
      %p69 = scmp.eq.s32.totalorder %s21, 0
      %p70 = por %p68, %p69
      %p71 = scmp.ne.s32.totalorder %s59, %s60
      %p72 = scmp.eq.s32.totalorder %s22, 5
      %p73 = por %p71, %p72
      %p75 = scmp.ne.s32.totalorder %s60, %s74
      %p76 = scmp.eq.s32.totalorder %s22, 0
      %p77 = por %p75, %p76
      %s79 = sadd.s32 %s78, 1
      %p82 = scmp.eq.s32.totalorder %s16, 5
      %p83 = scmp.ne.s32.totalorder %s78, %s80
      %p84 = scmp.eq.s32.totalorder %s16, 0
      %p85 = por %p83, %p84
      %p86 = scmp.ne.s32.totalorder %s78, %s80
      %p87 = scmp.eq.s32.totalorder %s21, 5
      %p88 = por %p86, %p87
      %p89 = scmp.ne.s32.totalorder %s80, %s81
      %p90 = scmp.eq.s32.totalorder %s21, 0
      %p91 = por %p89, %p90
      %p92 = scmp.ne.s32.totalorder %s80, %s81
      %p93 = scmp.eq.s32.totalorder %s22, 5
      %p94 = por %p92, %p93
      %p96 = scmp.ne.s32.totalorder %s81, %s95
      %p97 = scmp.eq.s32.totalorder %s22, 0
      %p98 = por %p96, %p97
      %s100 = sadd.s32 %s99, 1
      %p103 = scmp.eq.s32.totalorder %s16, 5
      %p104 = scmp.ne.s32.totalorder %s99, %s101
      %p105 = scmp.eq.s32.totalorder %s16, 0
      %p106 = por %p104, %p105
      %p107 = scmp.ne.s32.totalorder %s99, %s101
      %p108 = scmp.eq.s32.totalorder %s21, 5
      %p109 = por %p107, %p108
      %p110 = scmp.ne.s32.totalorder %s101, %s102
      %p111 = scmp.eq.s32.totalorder %s21, 0
      %p112 = por %p110, %p111
      %p113 = scmp.ne.s32.totalorder %s101, %s102
      %p114 = scmp.eq.s32.totalorder %s22, 5
      %p115 = por %p113, %p114
      %p117 = scmp.ne.s32.totalorder %s102, %s116
      %p118 = scmp.eq.s32.totalorder %s22, 0
      %p119 = por %p117, %p118
      %s120 = smul.u32 %s23, 3
      %s121 = sadd.s32 %s120, %s24
      %s122 = smul.u32 %s35, 3
      %s123 = sadd.s32 %s122, %s31
      %s124 = ssub.s32 %s121, %s123
      %p125 = scmp.eq.s32.totalorder %s124, 0
      %s127 = sadd.s32 %s126, 1
      %s128 = scalar_select %p125, %s126, %s127
      %p131 = pneg %p125
      %p132 = scmp.eq.s32.totalorder %s16, 5
      %p133 = por %p131, %p132
      %p134 = scmp.ne.s32.totalorder %s126, %s129
      %p135 = scmp.eq.s32.totalorder %s16, 0
      %p136 = por %p134, %p135
      %p137 = scmp.ne.s32.totalorder %s126, %s129
      %p138 = scmp.eq.s32.totalorder %s21, 5
      %p139 = por %p137, %p138
      %p140 = scmp.ne.s32.totalorder %s129, %s130
      %p141 = scmp.eq.s32.totalorder %s21, 0
      %p142 = por %p140, %p141
      %p143 = scmp.ne.s32.totalorder %s129, %s130
      %p144 = scmp.eq.s32.totalorder %s22, 5
      %p145 = por %p143, %p144
      %p147 = scmp.ne.s32.totalorder %s130, %s146
      %p148 = scmp.eq.s32.totalorder %s22, 0
      %p149 = por %p147, %p148
      %s150 = smul.u32 %s23, 3
      %s151 = sadd.s32 %s150, %s24
      %s152 = smul.u32 %s35, 3
      %s153 = sadd.s32 %s152, %s31
      %s154 = ssub.s32 %s151, %s153
      %p155 = scmp.eq.s32.totalorder %s154, 0
      %s157 = sadd.s32 %s156, 1
      %s158 = scalar_select %p155, %s156, %s157
      %p161 = pneg %p155
      %p162 = scmp.eq.s32.totalorder %s16, 5
      %p163 = por %p161, %p162
      %p164 = scmp.ne.s32.totalorder %s156, %s159
      %p165 = scmp.eq.s32.totalorder %s16, 0
      %p166 = por %p164, %p165
      %p167 = scmp.ne.s32.totalorder %s156, %s159
      %p168 = scmp.eq.s32.totalorder %s21, 5
      %p169 = por %p167, %p168
      %p170 = scmp.ne.s32.totalorder %s159, %s160
      %p171 = scmp.eq.s32.totalorder %s21, 0
      %p172 = por %p170, %p171
      %p173 = scmp.ne.s32.totalorder %s159, %s160
      %p174 = scmp.eq.s32.totalorder %s22, 5
      %p175 = por %p173, %p174
      %p177 = scmp.ne.s32.totalorder %s160, %s176
      %p178 = scmp.eq.s32.totalorder %s22, 0
      %p179 = por %p177, %p178
      %s180 = smul.u32 %s23, 3
      %s181 = sadd.s32 %s180, %s24
      %s182 = smul.u32 %s35, 3
      %s183 = sadd.s32 %s182, %s31
      %s184 = ssub.s32 %s181, %s183
      %p185 = scmp.eq.s32.totalorder %s184, 0
      %s187 = sadd.s32 %s186, 1
      %s188 = scalar_select %p185, %s186, %s187
      %p191 = pneg %p185
      %p192 = scmp.eq.s32.totalorder %s16, 5
      %p193 = por %p191, %p192
      %p194 = scmp.ne.s32.totalorder %s186, %s189
      %p195 = scmp.eq.s32.totalorder %s16, 0
      %p196 = por %p194, %p195
      %p197 = scmp.ne.s32.totalorder %s186, %s189
      %p198 = scmp.eq.s32.totalorder %s21, 5
      %p199 = por %p197, %p198
      %p200 = scmp.ne.s32.totalorder %s189, %s190
      %p201 = scmp.eq.s32.totalorder %s21, 0
      %p202 = por %p200, %p201
      %p203 = scmp.ne.s32.totalorder %s189, %s190
      %p204 = scmp.eq.s32.totalorder %s22, 5
      %p205 = por %p203, %p204
      %p207 = scmp.ne.s32.totalorder %s190, %s206
      %p208 = scmp.eq.s32.totalorder %s22, 0
      %p209 = por %p207, %p208
      %s210 = smul.u32 %s23, 3
      %s211 = sadd.s32 %s210, %s24
      %s212 = smul.u32 %s35, 3
      %s213 = sadd.s32 %s212, %s31
      %s214 = ssub.s32 %s211, %s213
      %p215 = scmp.eq.s32.totalorder %s214, 0
      %s217 = sadd.s32 %s216, 1
      %s218 = scalar_select %p215, %s216, %s217
      %p221 = pneg %p215
      %p222 = scmp.eq.s32.totalorder %s16, 5
      %p223 = por %p221, %p222
      %p224 = scmp.ne.s32.totalorder %s216, %s219
      %p225 = scmp.eq.s32.totalorder %s16, 0
      %p226 = por %p224, %p225
      %p227 = scmp.ne.s32.totalorder %s216, %s219
      %p228 = scmp.eq.s32.totalorder %s21, 5
      %p229 = por %p227, %p228
      %p230 = scmp.ne.s32.totalorder %s219, %s220
      %p231 = scmp.eq.s32.totalorder %s21, 0
      %p232 = por %p230, %p231
      %p233 = scmp.ne.s32.totalorder %s219, %s220
      %p234 = scmp.eq.s32.totalorder %s22, 5
      %p235 = por %p233, %p234
      %p237 = scmp.ne.s32.totalorder %s220, %s236
      %p238 = scmp.eq.s32.totalorder %s22, 0
      %p239 = por %p237, %p238
      %p240 = scmp.le.s32.totalorder 1, %s16
      %p241 = scmp.lt.s32.totalorder %s16, 7
      %p242 = pnand %p240, %p241
      %p243 = pneg %p242
      // Predicated region
      $region9: #{inception_aux_forward.1} parent=5 // pred_check
        _
      $region10: #{inception_aux_forward.1} parent=5 // pred_check_branch
        %245 = sbr.rel (%p242) target = $region12
      $region11: #{inception_aux_forward.1} parent=5 // pred_region
        %s246 = ssub.s32 %s16, 1
        // Predicated region
        $region13: #{inception_aux_forward.1} parent=11 // pred_check
          %p247 = pneg %p49
        $region14: #{inception_aux_forward.1} parent=11 // pred_check_branch
          %249 = sbr.rel (%p247) target = $region16
        $region15: #{inception_aux_forward.1} parent=11 // pred_region
          _
        $region16: #{inception_aux_forward.1} parent=11 // pred_fallthru
          _
        // Predicated region
        $region17: #{inception_aux_forward.1} parent=11 // pred_check
          %p250 = pneg %p70
        $region18: #{inception_aux_forward.1} parent=11 // pred_check_branch
          %252 = sbr.rel (%p250) target = $region20
        $region19: #{inception_aux_forward.1} parent=11 // pred_region
          _
        $region20: #{inception_aux_forward.1} parent=11 // pred_fallthru
          _
        // Predicated region
        $region21: #{inception_aux_forward.1} parent=11 // pred_check
          %p253 = pneg %p91
        $region22: #{inception_aux_forward.1} parent=11 // pred_check_branch
          %255 = sbr.rel (%p253) target = $region24
        $region23: #{inception_aux_forward.1} parent=11 // pred_region
          _
        $region24: #{inception_aux_forward.1} parent=11 // pred_fallthru
          _
        // Predicated region
        $region25: #{inception_aux_forward.1} parent=11 // pred_check
          %p256 = pneg %p112
        $region26: #{inception_aux_forward.1} parent=11 // pred_check_branch
          %258 = sbr.rel (%p256) target = $region28
        $region27: #{inception_aux_forward.1} parent=11 // pred_region
          _
        $region28: #{inception_aux_forward.1} parent=11 // pred_fallthru
          _
      $region12: #{inception_aux_forward.1} parent=5 // pred_fallthru
        _
      %p259 = scmp.lt.s32.totalorder %s16, 6
      // Predicated region
      $region29: #{inception_aux_forward.1} parent=5 // pred_check
        %p260 = pneg %p259
      $region30: #{inception_aux_forward.1} parent=5 // pred_check_branch
        %262 = sbr.rel (%p260) target = $region32
      $region31: #{inception_aux_forward.1} parent=5 // pred_region
        // Predicated region
        $region33: #{inception_aux_forward.1} parent=31 // pred_check
          %p263 = pneg %p136
        $region34: #{inception_aux_forward.1} parent=31 // pred_check_branch
          %265 = sbr.rel (%p263) target = $region36
        $region35: #{inception_aux_forward.1} parent=31 // pred_region
          %s266 = sand.u32 %s126, 1
          %s267 = scalar_lea.sflag [#allocation4], %s266
          %s268 = sand.u32 %s126, 1
          %s269 = smul.addr %s268, 1600
          %s270 = scalar_lea.vmem [#allocation3], %s269
          %s271 = smul.u32 %s23, 3
          %s272 = sadd.s32 %s271, %s24
          %274 = vsyncadd %s267, 0
          %s275 = smul.addr %s272, 4
          %s276 = scalar_lea.hbm %s4, %s275
          %s277 = sshll.u32 %s276, 4
          %s278 = int_to_ptr.hbm [resolvable:$true] %s277
          %s279 = sshll.u32 %s270, 4
          %s280 = int_to_ptr.vmem [resolvable:$true] %s279
          %285 = dma.hbm_to_vmem [thread:$0]  %s278, 25600, %s280, %s267, 384, 64, 4
        $region36: #{inception_aux_forward.1} parent=31 // pred_fallthru
          _
        // Predicated region
        $region37: #{inception_aux_forward.1} parent=31 // pred_check
          %p286 = pneg %p166
        $region38: #{inception_aux_forward.1} parent=31 // pred_check_branch
          %288 = sbr.rel (%p286) target = $region40
        $region39: #{inception_aux_forward.1} parent=31 // pred_region
          %s289 = smul.u32 %s23, 3
          %s290 = sadd.s32 %s289, %s24
          %p291 = scmp.lt.s32.totalorder %s290, 5
          %s292 = scalar_select %p291, %s290, 5
          %s293 = scalar_lea.vmem %s5, %s292
          %s294 = smul.u32 %s23, 3
          %s295 = sadd.s32 %s294, %s24
        $region40: #{inception_aux_forward.1} parent=31 // pred_fallthru
          _
        // Predicated region
        $region41: #{inception_aux_forward.1} parent=31 // pred_check
          %p296 = pneg %p196
        $region42: #{inception_aux_forward.1} parent=31 // pred_check_branch
          %298 = sbr.rel (%p296) target = $region44
        $region43: #{inception_aux_forward.1} parent=31 // pred_region
          %s299 = smul.u32 %s23, 3
          %s300 = sadd.s32 %s299, %s24
          %p301 = scmp.lt.s32.totalorder %s300, 5
          %s302 = scalar_select %p301, %s300, 5
          %s303 = scalar_lea.vmem %s6, %s302
          %s304 = smul.u32 %s23, 3
          %s305 = sadd.s32 %s304, %s24
        $region44: #{inception_aux_forward.1} parent=31 // pred_fallthru
          _
      $region32: #{inception_aux_forward.1} parent=5 // pred_fallthru
        _
      %p306 = scmp.le.s32.totalorder 1, %s16
      %p307 = scmp.lt.s32.totalorder %s16, 7
      %p308 = pnand %p306, %p307
      %p309 = pneg %p308
      // Predicated region
      $region45: #{inception_aux_forward.1} parent=5 // pred_check
        _
      $region46: #{inception_aux_forward.1} parent=5 // pred_check_branch
        %311 = sbr.rel (%p308) target = $region48
      $region47: #{inception_aux_forward.1} parent=5 // pred_region
        %s312 = ssub.s32 %s16, 1
        %s313 = sand.u32 %s129, 1
        %s314 = scalar_lea.sflag [#allocation4], %s313
        %s315 = sand.u32 %s129, 1
        %s316 = smul.addr %s315, 1600
        %s317 = scalar_lea.vmem [#allocation3], %s316
        // Predicated region
        $region49: #{inception_aux_forward.1} parent=47 // pred_check
          %p318 = pneg %p142
        $region50: #{inception_aux_forward.1} parent=47 // pred_check_branch
          %320 = sbr.rel (%p318) target = $region52
        $region51: #{inception_aux_forward.1} parent=47 // pred_region
          %322 = dma.done %s314, 25600
        $region52: #{inception_aux_forward.1} parent=47 // pred_fallthru
          _
        %p323 = pneg %p49
        %p324 = pneg %p46
        %p325 = pneg %p70
        %p326 = pneg %p67
        %p327 = pneg %p91
        %p328 = pneg %p88
        %p329 = pneg %p112
        %p330 = pneg %p109
        %s331 = sand.u32 %s129, 1
        %s332 = scalar_lea.sflag [#allocation4], %s331
        %s333 = sand.u32 %s129, 1
        %s334 = smul.addr %s333, 1600
        %s335 = scalar_lea.vmem [#allocation3], %s334
        %p336 = pneg %p142
        %p337 = pneg %p139
        %s338 = smul.u32 %s25, 3
        %s339 = sadd.s32 %s338, %s26
        %p340 = scmp.lt.s32.totalorder %s339, 5
        %s341 = scalar_select %p340, %s339, 5
        %s342 = scalar_lea.vmem %s5, %s341
        %p343 = pneg %p172
        %p344 = pneg %p169
        %s345 = smul.u32 %s25, 3
        %s346 = sadd.s32 %s345, %s26
        %p347 = scmp.lt.s32.totalorder %s346, 5
        %s348 = scalar_select %p347, %s346, 5
        %s349 = scalar_lea.vmem %s6, %s348
        %p350 = pneg %p202
        %p351 = pneg %p199
        %p352 = pneg %p232
        %p353 = pneg %p229
        %s354 = smul.u32 %s25, 3
        %s355 = sadd.s32 %s354, %s26
        %p356 = scmp.lt.s32.totalorder %s355, 5
        %s357 = scalar_select %p356, %s355, 5
        %s358 = smul.addr %s357, 8
        %s359 = scalar_lea.vmem %s7, %s358
        %s360 = smul.u32 %s25, 3
        %s361 = sadd.s32 %s360, %s26
        %s362 = smul.u32 %s25, 3
        %s363 = sadd.s32 %s362, %s26
        %p364 = scmp.lt.s32.totalorder %s363, 5
        %s365 = scalar_select %p364, %s363, 5
        %s366 = scalar_lea.vmem %s5, %s365
        %s367 = smul.u32 %s25, 3
        %s368 = sadd.s32 %s367, %s26
        %s369 = smul.u32 %s25, 3
        %s370 = sadd.s32 %s369, %s26
        %p371 = scmp.lt.s32.totalorder %s370, 5
        %s372 = scalar_select %p371, %s370, 5
        %s373 = scalar_lea.vmem %s6, %s372
        %s374 = smul.u32 %s25, 3
        %s375 = sadd.s32 %s374, %s26
        %s376 = smul.u32 %s25, 3
        %s377 = sadd.s32 %s376, %s26
        %p378 = scmp.lt.s32.totalorder %s377, 5
        %s379 = scalar_select %p378, %s377, 5
        %s380 = smul.addr %s379, 8
        %s381 = scalar_lea.vmem %s7, %s380
        %s382 = smul.u32 %s25, 3
        %s383 = sadd.s32 %s382, %s26
        %p384 = scmp.eq.s32.totalorder %s26, 0
        // Predicated region
        $region53: #{inception_aux_forward.1} parent=47 // pred_check
          %p385 = pneg %p384
        $region54: #{inception_aux_forward.1} parent=47 // pred_check_branch
          %387 = sbr.rel (%p385) target = $region56
        $region55: #{inception_aux_forward.1} parent=47 // pred_region
          %v388 = vld [vmem:[%s1] sm:$0xf]
          %v389 = vld [vmem:[%s1 + $0x4] sm:$0xf]
          %v390 = vld [vmem:[%s1 + $0x8] sm:$0xf]
          %v391 = vld [vmem:[%s1 + $0xc] sm:$0xf]
          %v392 = vld [vmem:[%s1 + $0x10] sm:$0xf]
          %v393 = vld [vmem:[%s1 + $0x14] sm:$0xf]
          %v394 = vld [vmem:[%s1 + $0x18] sm:$0xf]
          %v395 = vld [vmem:[%s1 + $0x1c] sm:$0xf]
          %v396 = vld [vmem:[%s1 + $0x20] sm:$0xf]
          %v397 = vld [vmem:[%s1 + $0x24] sm:$0xf]
          %v398 = vld [vmem:[%s1 + $0x28] sm:$0xf]
          %v399 = vld [vmem:[%s1 + $0x2c] sm:$0xf]
          %v400 = vld [vmem:[%s1 + $0x30] sm:$0xf]
          %v401 = vld [vmem:[%s1 + $0x34] sm:$0xf]
          %v402 = vld [vmem:[%s1 + $0x38] sm:$0xf]
          %v403 = vld [vmem:[%s1 + $0x3c] sm:$0xf]
          %v404 = vld [vmem:[%s1 + $0x40] sm:$0xf]
          %v405 = vld [vmem:[%s1 + $0x44] sm:$0xf]
          %v406 = vld [vmem:[%s1 + $0x48] sm:$0xf]
          %v407 = vld [vmem:[%s1 + $0x4c] sm:$0xf]
          %v408 = vld [vmem:[%s1 + $0x50] sm:$0xf]
          %v409 = vld [vmem:[%s1 + $0x54] sm:$0xf]
          %v410 = vld [vmem:[%s1 + $0x58] sm:$0xf]
          %v411 = vld [vmem:[%s1 + $0x5c] sm:$0xf]
          %v412 = vld [vmem:[%s1 + $0x60] sm:$0xf]
          %v413 = vld [vmem:[%s1 + $0x64] sm:$0xf]
          %v414 = vld [vmem:[%s1 + $0x68] sm:$0xf]
          %v415 = vld [vmem:[%s1 + $0x6c] sm:$0xf]
          %v416 = vld [vmem:[%s1 + $0x70] sm:$0xf]
          %v417 = vld [vmem:[%s1 + $0x74] sm:$0xf]
          %v418 = vld [vmem:[%s1 + $0x78] sm:$0xf]
          %v419 = vld [vmem:[%s1 + $0x7c] sm:$0xf]
          %v420 = vld [vmem:[%s1 + $0x80] sm:$0xf]
          %v421 = vld [vmem:[%s1 + $0x84] sm:$0xf]
          %v422 = vld [vmem:[%s1 + $0x88] sm:$0xf]
          %v423 = vld [vmem:[%s1 + $0x8c] sm:$0xf]
          %v424 = vld [vmem:[%s1 + $0x90] sm:$0xf]
          %v425 = vld [vmem:[%s1 + $0x94] sm:$0xf]
          %v426 = vld [vmem:[%s1 + $0x98] sm:$0xf]
          %v427 = vld [vmem:[%s1 + $0x9c] sm:$0xf]
          %v428 = vld [vmem:[%s1 + $0xa0] sm:$0xf]
          %v429 = vld [vmem:[%s1 + $0xa4] sm:$0xf]
          %v430 = vld [vmem:[%s1 + $0xa8] sm:$0xf]
          %v431 = vld [vmem:[%s1 + $0xac] sm:$0xf]
          %v432 = vld [vmem:[%s1 + $0xb0] sm:$0xf]
          %v433 = vld [vmem:[%s1 + $0xb4] sm:$0xf]
          %v434 = vld [vmem:[%s1 + $0xb8] sm:$0xf]
          %v435 = vld [vmem:[%s1 + $0xbc] sm:$0xf]
          %v436 = vld [vmem:[%s1 + $0xc0] sm:$0xf]
          %v437 = vld [vmem:[%s1 + $0xc4] sm:$0xf]
          %v438 = vld [vmem:[%s1 + $0xc8] sm:$0xf]
          %v439 = vld [vmem:[%s1 + $0xcc] sm:$0xf]
          %v440 = vld [vmem:[%s1 + $0xd0] sm:$0xf]
          %v441 = vld [vmem:[%s1 + $0xd4] sm:$0xf]
          %v442 = vld [vmem:[%s1 + $0xd8] sm:$0xf]
          %v443 = vld [vmem:[%s1 + $0xdc] sm:$0xf]
          %v444 = vld [vmem:[%s1 + $0xe0] sm:$0xf]
          %v445 = vld [vmem:[%s1 + $0xe4] sm:$0xf]
          %v446 = vld [vmem:[%s1 + $0xe8] sm:$0xf]
          %v447 = vld [vmem:[%s1 + $0xec] sm:$0xf]
          %v448 = vld [vmem:[%s1 + $0xf0] sm:$0xf]
          %v449 = vld [vmem:[%s1 + $0xf4] sm:$0xf]
          %v450 = vld [vmem:[%s1 + $0xf8] sm:$0xf]
          %v451 = vld [vmem:[%s1 + $0xfc] sm:$0xf]
          %v452 = vld [vmem:[%s1 + $0x100] sm:$0xf]
          %v453 = vld [vmem:[%s1 + $0x104] sm:$0xf]
          %v454 = vld [vmem:[%s1 + $0x108] sm:$0xf]
          %v455 = vld [vmem:[%s1 + $0x10c] sm:$0xf]
          %v456 = vld [vmem:[%s1 + $0x110] sm:$0xf]
          %v457 = vld [vmem:[%s1 + $0x114] sm:$0xf]
          %v458 = vld [vmem:[%s1 + $0x118] sm:$0xf]
          %v459 = vld [vmem:[%s1 + $0x11c] sm:$0xf]
          %v460 = vld [vmem:[%s1 + $0x120] sm:$0xf]
          %v461 = vld [vmem:[%s1 + $0x124] sm:$0xf]
          %v462 = vld [vmem:[%s1 + $0x128] sm:$0xf]
          %v463 = vld [vmem:[%s1 + $0x12c] sm:$0xf]
          %v464 = vld [vmem:[%s1 + $0x130] sm:$0xf]
          %v465 = vld [vmem:[%s1 + $0x134] sm:$0xf]
          %v466 = vld [vmem:[%s1 + $0x138] sm:$0xf]
          %v467 = vld [vmem:[%s1 + $0x13c] sm:$0xf]
          %v468 = vld [vmem:[%s1 + $0x140] sm:$0xf]
          %v469 = vld [vmem:[%s1 + $0x144] sm:$0xf]
          %v470 = vld [vmem:[%s1 + $0x148] sm:$0xf]
          %v471 = vld [vmem:[%s1 + $0x14c] sm:$0xf]
          %v472 = vld [vmem:[%s1 + $0x150] sm:$0xf]
          %v473 = vld [vmem:[%s1 + $0x154] sm:$0xf]
          %v474 = vld [vmem:[%s1 + $0x158] sm:$0xf]
          %v475 = vld [vmem:[%s1 + $0x15c] sm:$0xf]
          %v476 = vld [vmem:[%s1 + $0x160] sm:$0xf]
          %v477 = vld [vmem:[%s1 + $0x164] sm:$0xf]
          %v478 = vld [vmem:[%s1 + $0x168] sm:$0xf]
          %v479 = vld [vmem:[%s1 + $0x16c] sm:$0xf]
          %v480 = vld [vmem:[%s1 + $0x170] sm:$0xf]
          %v481 = vld [vmem:[%s1 + $0x174] sm:$0xf]
          %v482 = vld [vmem:[%s1 + $0x178] sm:$0xf]
          %v483 = vld [vmem:[%s1 + $0x17c] sm:$0xf]
          %v484 = vld [vmem:[%s2] sm:$0x1]
          %v485 = vld [vmem:[%s3] sm:$0x1]
          %v486 = vld [vmem:[%s0] sm:$0xff]
          %v487 = vld [vmem:[%s0 + $0x8] sm:$0xff]
          %v488 = vld [vmem:[%s0 + $0x10] sm:$0xff]
          %v492 = vunpack.c.l.b16 %v486
          %v493 = vunpack.c.h.b16 %v486
          %v494 = vunpack.c.l.b16 %v487
          %v495 = vunpack.c.h.b16 %v487
          %v496 = vunpack.c.l.b16 %v488
          %v497 = vunpack.c.h.b16 %v488
          %v498 = vpack.c.b16 %v492, %v492
          %v499 = vpack.c.b16 %v493, %v493
          %v500 = vpack.c.b16 %v494, %v494
          %v501 = vpack.c.b16 %v495, %v495
          %v502 = vpack.c.b16 %v496, %v496
          %v503 = vpack.c.b16 %v497, %v497
          %v606 = vunpack.c.l.b16 %v388
          %v607 = vunpack.c.l.b16 %v389
          %v608 = vunpack.c.l.b16 %v390
          %v609 = vunpack.c.l.b16 %v391
          %v610 = vunpack.c.l.b16 %v392
          %v611 = vunpack.c.l.b16 %v393
          %v612 = vunpack.c.l.b16 %v394
          %v613 = vunpack.c.l.b16 %v395
          %v614 = vunpack.c.l.b16 %v396
          %v615 = vunpack.c.l.b16 %v397
          %v616 = vunpack.c.l.b16 %v398
          %v617 = vunpack.c.l.b16 %v399
          %v618 = vunpack.c.l.b16 %v400
          %v619 = vunpack.c.l.b16 %v401
          %v620 = vunpack.c.l.b16 %v402
          %v621 = vunpack.c.l.b16 %v403
          %v622 = vunpack.c.l.b16 %v404
          %v623 = vunpack.c.l.b16 %v405
          %v624 = vunpack.c.l.b16 %v406
          %v625 = vunpack.c.l.b16 %v407
          %v626 = vunpack.c.l.b16 %v408
          %v627 = vunpack.c.l.b16 %v409
          %v628 = vunpack.c.l.b16 %v410
          %v629 = vunpack.c.l.b16 %v411
          %v630 = vunpack.c.l.b16 %v412
          %v631 = vunpack.c.l.b16 %v413
          %v632 = vunpack.c.l.b16 %v414
          %v633 = vunpack.c.l.b16 %v415
          %v634 = vunpack.c.l.b16 %v416
          %v635 = vunpack.c.l.b16 %v417
          %v636 = vunpack.c.l.b16 %v418
          %v637 = vunpack.c.l.b16 %v419
          %v638 = vunpack.c.l.b16 %v420
          %v639 = vunpack.c.l.b16 %v421
          %v640 = vunpack.c.l.b16 %v422
          %v641 = vunpack.c.l.b16 %v423
          %v642 = vunpack.c.l.b16 %v424
          %v643 = vunpack.c.l.b16 %v425
          %v644 = vunpack.c.l.b16 %v426
          %v645 = vunpack.c.l.b16 %v427
          %v646 = vunpack.c.l.b16 %v428
          %v647 = vunpack.c.l.b16 %v429
          %v648 = vunpack.c.l.b16 %v430
          %v649 = vunpack.c.l.b16 %v431
          %v650 = vunpack.c.l.b16 %v432
          %v651 = vunpack.c.l.b16 %v433
          %v652 = vunpack.c.l.b16 %v434
          %v653 = vunpack.c.l.b16 %v435
          %v654 = vunpack.c.l.b16 %v436
          %v655 = vunpack.c.l.b16 %v437
          %v656 = vunpack.c.l.b16 %v438
          %v657 = vunpack.c.l.b16 %v439
          %v658 = vunpack.c.l.b16 %v440
          %v659 = vunpack.c.l.b16 %v441
          %v660 = vunpack.c.l.b16 %v442
          %v661 = vunpack.c.l.b16 %v443
          %v662 = vunpack.c.l.b16 %v444
          %v663 = vunpack.c.l.b16 %v445
          %v664 = vunpack.c.l.b16 %v446
          %v665 = vunpack.c.l.b16 %v447
          %v666 = vunpack.c.l.b16 %v448
          %v667 = vunpack.c.l.b16 %v449
          %v668 = vunpack.c.l.b16 %v450
          %v669 = vunpack.c.l.b16 %v451
          %v670 = vunpack.c.l.b16 %v452
          %v671 = vunpack.c.l.b16 %v453
          %v672 = vunpack.c.l.b16 %v454
          %v673 = vunpack.c.l.b16 %v455
          %v674 = vunpack.c.l.b16 %v456
          %v675 = vunpack.c.l.b16 %v457
          %v676 = vunpack.c.l.b16 %v458
          %v677 = vunpack.c.l.b16 %v459
          %v678 = vunpack.c.l.b16 %v460
          %v679 = vunpack.c.l.b16 %v461
          %v680 = vunpack.c.l.b16 %v462
          %v681 = vunpack.c.l.b16 %v463
          %v682 = vunpack.c.l.b16 %v464
          %v683 = vunpack.c.l.b16 %v465
          %v684 = vunpack.c.l.b16 %v466
          %v685 = vunpack.c.l.b16 %v467
          %v686 = vunpack.c.l.b16 %v468
          %v687 = vunpack.c.l.b16 %v469
          %v688 = vunpack.c.l.b16 %v470
          %v689 = vunpack.c.l.b16 %v471
          %v690 = vunpack.c.l.b16 %v472
          %v691 = vunpack.c.l.b16 %v473
          %v692 = vunpack.c.l.b16 %v474
          %v693 = vunpack.c.l.b16 %v475
          %v694 = vunpack.c.l.b16 %v476
          %v695 = vunpack.c.l.b16 %v477
          %v696 = vunpack.c.l.b16 %v478
          %v697 = vunpack.c.l.b16 %v479
          %v698 = vunpack.c.l.b16 %v480
          %v699 = vunpack.c.l.b16 %v481
          %v700 = vunpack.c.l.b16 %v482
          %v701 = vunpack.c.l.b16 %v483
          %v702 = vpack.c.b16 %v607, %v606
          %v703 = vpack.c.b16 %v609, %v608
          %v704 = vpack.c.b16 %v611, %v610
          %v705 = vpack.c.b16 %v613, %v612
          %v706 = vpack.c.b16 %v615, %v614
          %v707 = vpack.c.b16 %v617, %v616
          %v708 = vpack.c.b16 %v619, %v618
          %v709 = vpack.c.b16 %v621, %v620
          %v710 = vpack.c.b16 %v623, %v622
          %v711 = vpack.c.b16 %v625, %v624
          %v712 = vpack.c.b16 %v627, %v626
          %v713 = vpack.c.b16 %v629, %v628
          %v714 = vpack.c.b16 %v631, %v630
          %v715 = vpack.c.b16 %v633, %v632
          %v716 = vpack.c.b16 %v635, %v634
          %v717 = vpack.c.b16 %v637, %v636
          %v718 = vpack.c.b16 %v639, %v638
          %v719 = vpack.c.b16 %v641, %v640
          %v720 = vpack.c.b16 %v643, %v642
          %v721 = vpack.c.b16 %v645, %v644
          %v722 = vpack.c.b16 %v647, %v646
          %v723 = vpack.c.b16 %v649, %v648
          %v724 = vpack.c.b16 %v651, %v650
          %v725 = vpack.c.b16 %v653, %v652
          %v726 = vpack.c.b16 %v655, %v654
          %v727 = vpack.c.b16 %v657, %v656
          %v728 = vpack.c.b16 %v659, %v658
          %v729 = vpack.c.b16 %v661, %v660
          %v730 = vpack.c.b16 %v663, %v662
          %v731 = vpack.c.b16 %v665, %v664
          %v732 = vpack.c.b16 %v667, %v666
          %v733 = vpack.c.b16 %v669, %v668
          %v734 = vpack.c.b16 %v671, %v670
          %v735 = vpack.c.b16 %v673, %v672
          %v736 = vpack.c.b16 %v675, %v674
          %v737 = vpack.c.b16 %v677, %v676
          %v738 = vpack.c.b16 %v679, %v678
          %v739 = vpack.c.b16 %v681, %v680
          %v740 = vpack.c.b16 %v683, %v682
          %v741 = vpack.c.b16 %v685, %v684
          %v742 = vpack.c.b16 %v687, %v686
          %v743 = vpack.c.b16 %v689, %v688
          %v744 = vpack.c.b16 %v691, %v690
          %v745 = vpack.c.b16 %v693, %v692
          %v746 = vpack.c.b16 %v695, %v694
          %v747 = vpack.c.b16 %v697, %v696
          %v748 = vpack.c.b16 %v699, %v698
          %v749 = vpack.c.b16 %v701, %v700
          %798 = vmatpush.bf16.msra.mxu0 %v709
          %799 = vmatpush.bf16.msra.mxu0 %v708
          %800 = vmatpush.bf16.msra.mxu0 %v707
          %801 = vmatpush.bf16.msra.mxu0 %v706
          %802 = vmatpush.bf16.msra.mxu0 %v705
          %803 = vmatpush.bf16.msra.mxu0 %v704
          %804 = vmatpush.bf16.msra.mxu0 %v703
          %805 = vmatpush.bf16.msra.mxu0 %v702
          %806 = vmatmul.bf16.gmra.mxu0 %v498
          %v807 = vpop.f32.mrf.mxu0
          %v808 = vadd.f32 0.0, %v807
          %v809 = vpop.f32.mrf.mxu0
          %810 = vdwg.mxu0
          %811 = vmatpush.bf16.msra.mxu0 %v717
          %812 = vmatpush.bf16.msra.mxu0 %v716
          %813 = vmatpush.bf16.msra.mxu0 %v715
          %814 = vmatpush.bf16.msra.mxu0 %v714
          %815 = vmatpush.bf16.msra.mxu0 %v713
          %816 = vmatpush.bf16.msra.mxu0 %v712
          %817 = vmatpush.bf16.msra.mxu0 %v711
          %818 = vmatpush.bf16.msra.mxu0 %v710
          %819 = vmatmul.bf16.gmra.mxu0 %v499
          %v820 = vpop.f32.mrf.mxu0
          %v821 = vadd.f32 %v808, %v820
          %v822 = vpop.f32.mrf.mxu0
          %823 = vdwg.mxu0
          %824 = vmatpush.bf16.msra.mxu0 %v725
          %825 = vmatpush.bf16.msra.mxu0 %v724
          %826 = vmatpush.bf16.msra.mxu0 %v723
          %827 = vmatpush.bf16.msra.mxu0 %v722
          %828 = vmatpush.bf16.msra.mxu0 %v721
          %829 = vmatpush.bf16.msra.mxu0 %v720
          %830 = vmatpush.bf16.msra.mxu0 %v719
          %831 = vmatpush.bf16.msra.mxu0 %v718
          %832 = vmatmul.bf16.gmra.mxu0 %v500
          %v833 = vpop.f32.mrf.mxu0
          %v834 = vadd.f32 %v821, %v833
          %v835 = vpop.f32.mrf.mxu0
          %836 = vdwg.mxu0
          %837 = vmatpush.bf16.msra.mxu0 %v733
          %838 = vmatpush.bf16.msra.mxu0 %v732
          %839 = vmatpush.bf16.msra.mxu0 %v731
          %840 = vmatpush.bf16.msra.mxu0 %v730
          %841 = vmatpush.bf16.msra.mxu0 %v729
          %842 = vmatpush.bf16.msra.mxu0 %v728
          %843 = vmatpush.bf16.msra.mxu0 %v727
          %844 = vmatpush.bf16.msra.mxu0 %v726
          %845 = vmatmul.bf16.gmra.mxu0 %v501
          %v846 = vpop.f32.mrf.mxu0
          %v847 = vadd.f32 %v834, %v846
          %v848 = vpop.f32.mrf.mxu0
          %849 = vdwg.mxu0
          %850 = vmatpush.bf16.msra.mxu0 %v741
          %851 = vmatpush.bf16.msra.mxu0 %v740
          %852 = vmatpush.bf16.msra.mxu0 %v739
          %853 = vmatpush.bf16.msra.mxu0 %v738
          %854 = vmatpush.bf16.msra.mxu0 %v737
          %855 = vmatpush.bf16.msra.mxu0 %v736
          %856 = vmatpush.bf16.msra.mxu0 %v735
          %857 = vmatpush.bf16.msra.mxu0 %v734
          %858 = vmatmul.bf16.gmra.mxu0 %v502
          %v859 = vpop.f32.mrf.mxu0
          %v860 = vadd.f32 %v847, %v859
          %v861 = vpop.f32.mrf.mxu0
          %862 = vdwg.mxu0
          %863 = vmatpush.bf16.msra.mxu0 %v749
          %864 = vmatpush.bf16.msra.mxu0 %v748
          %865 = vmatpush.bf16.msra.mxu0 %v747
          %866 = vmatpush.bf16.msra.mxu0 %v746
          %867 = vmatpush.bf16.msra.mxu0 %v745
          %868 = vmatpush.bf16.msra.mxu0 %v744
          %869 = vmatpush.bf16.msra.mxu0 %v743
          %870 = vmatpush.bf16.msra.mxu0 %v742
          %871 = vmatmul.bf16.gmra.mxu0 %v503
          %v872 = vpop.f32.mrf.mxu0
          %v873 = vadd.f32 %v860, %v872
          %v874 = vpop.f32.mrf.mxu0
          %875 = vdwg.mxu0
          %v877 = vperm.slane %v484, 0
          %v879 = vmul.f32 %v873, %v877
          %v881 = vperm.slane %v485, 0
          %v883 = vadd.f32 %v879, %v881
          %v884 = vmax.f32 %v883, 0.0
          %v885 = vpack.c.bf16 %v884, %v884
          %886 = vst [vmem:[#allocation2] sm:$0xf] %v885
          %s887 = scalar_lea.vmem %s0, 24
          %v888 = vld [vmem:[%s887] sm:$0xff]
          %v889 = vld [vmem:[%s887 + $0x8] sm:$0xff]
          %v890 = vld [vmem:[%s887 + $0x10] sm:$0xff]
          %v894 = vunpack.c.l.b16 %v888
          %v895 = vunpack.c.h.b16 %v888
          %v896 = vunpack.c.l.b16 %v889
          %v897 = vunpack.c.h.b16 %v889
          %v898 = vunpack.c.l.b16 %v890
          %v899 = vunpack.c.h.b16 %v890
          %v900 = vpack.c.b16 %v894, %v894
          %v901 = vpack.c.b16 %v895, %v895
          %v902 = vpack.c.b16 %v896, %v896
          %v903 = vpack.c.b16 %v897, %v897
          %v904 = vpack.c.b16 %v898, %v898
          %v905 = vpack.c.b16 %v899, %v899
          %912 = vmatpush.bf16.msra.mxu0 %v709
          %913 = vmatpush.bf16.msra.mxu0 %v708
          %914 = vmatpush.bf16.msra.mxu0 %v707
          %915 = vmatpush.bf16.msra.mxu0 %v706
          %916 = vmatpush.bf16.msra.mxu0 %v705
          %917 = vmatpush.bf16.msra.mxu0 %v704
          %918 = vmatpush.bf16.msra.mxu0 %v703
          %919 = vmatpush.bf16.msra.mxu0 %v702
          %920 = vmatmul.bf16.gmra.mxu0 %v900
          %v921 = vpop.f32.mrf.mxu0
          %v922 = vadd.f32 0.0, %v921
          %v923 = vpop.f32.mrf.mxu0
          %924 = vdwg.mxu0
          %925 = vmatpush.bf16.msra.mxu0 %v717
          %926 = vmatpush.bf16.msra.mxu0 %v716
          %927 = vmatpush.bf16.msra.mxu0 %v715
          %928 = vmatpush.bf16.msra.mxu0 %v714
          %929 = vmatpush.bf16.msra.mxu0 %v713
          %930 = vmatpush.bf16.msra.mxu0 %v712
          %931 = vmatpush.bf16.msra.mxu0 %v711
          %932 = vmatpush.bf16.msra.mxu0 %v710
          %933 = vmatmul.bf16.gmra.mxu0 %v901
          %v934 = vpop.f32.mrf.mxu0
          %v935 = vadd.f32 %v922, %v934
          %v936 = vpop.f32.mrf.mxu0
          %937 = vdwg.mxu0
          %938 = vmatpush.bf16.msra.mxu0 %v725
          %939 = vmatpush.bf16.msra.mxu0 %v724
          %940 = vmatpush.bf16.msra.mxu0 %v723
          %941 = vmatpush.bf16.msra.mxu0 %v722
          %942 = vmatpush.bf16.msra.mxu0 %v721
          %943 = vmatpush.bf16.msra.mxu0 %v720
          %944 = vmatpush.bf16.msra.mxu0 %v719
          %945 = vmatpush.bf16.msra.mxu0 %v718
          %946 = vmatmul.bf16.gmra.mxu0 %v902
          %v947 = vpop.f32.mrf.mxu0
          %v948 = vadd.f32 %v935, %v947
          %v949 = vpop.f32.mrf.mxu0
          %950 = vdwg.mxu0
          %951 = vmatpush.bf16.msra.mxu0 %v733
          %952 = vmatpush.bf16.msra.mxu0 %v732
          %953 = vmatpush.bf16.msra.mxu0 %v731
          %954 = vmatpush.bf16.msra.mxu0 %v730
          %955 = vmatpush.bf16.msra.mxu0 %v729
          %956 = vmatpush.bf16.msra.mxu0 %v728
          %957 = vmatpush.bf16.msra.mxu0 %v727
          %958 = vmatpush.bf16.msra.mxu0 %v726
          %959 = vmatmul.bf16.gmra.mxu0 %v903
          %v960 = vpop.f32.mrf.mxu0
          %v961 = vadd.f32 %v948, %v960
          %v962 = vpop.f32.mrf.mxu0
          %963 = vdwg.mxu0
          %964 = vmatpush.bf16.msra.mxu0 %v741
          %965 = vmatpush.bf16.msra.mxu0 %v740
          %966 = vmatpush.bf16.msra.mxu0 %v739
          %967 = vmatpush.bf16.msra.mxu0 %v738
          %968 = vmatpush.bf16.msra.mxu0 %v737
          %969 = vmatpush.bf16.msra.mxu0 %v736
          %970 = vmatpush.bf16.msra.mxu0 %v735
          %971 = vmatpush.bf16.msra.mxu0 %v734
          %972 = vmatmul.bf16.gmra.mxu0 %v904
          %v973 = vpop.f32.mrf.mxu0
          %v974 = vadd.f32 %v961, %v973
          %v975 = vpop.f32.mrf.mxu0
          %976 = vdwg.mxu0
          %977 = vmatpush.bf16.msra.mxu0 %v749
          %978 = vmatpush.bf16.msra.mxu0 %v748
          %979 = vmatpush.bf16.msra.mxu0 %v747
          %980 = vmatpush.bf16.msra.mxu0 %v746
          %981 = vmatpush.bf16.msra.mxu0 %v745
          %982 = vmatpush.bf16.msra.mxu0 %v744
          %983 = vmatpush.bf16.msra.mxu0 %v743
          %984 = vmatpush.bf16.msra.mxu0 %v742
          %985 = vmatmul.bf16.gmra.mxu0 %v905
          %v986 = vpop.f32.mrf.mxu0
          %v987 = vadd.f32 %v974, %v986
          %v988 = vpop.f32.mrf.mxu0
          %989 = vdwg.mxu0
          %v990 = vmul.f32 %v987, %v877
          %v991 = vadd.f32 %v990, %v881
          %v992 = vmax.f32 %v991, 0.0
          %v993 = vpack.c.bf16 %v992, %v992
          %994 = vst [vmem:[#allocation2 + $0x4] sm:$0xf] %v993
          %s995 = scalar_lea.vmem %s0, 48
          %v996 = vld [vmem:[%s995] sm:$0xff]
          %v997 = vld [vmem:[%s995 + $0x8] sm:$0xff]
          %v998 = vld [vmem:[%s995 + $0x10] sm:$0xff]
          %v1002 = vunpack.c.l.b16 %v996
          %v1003 = vunpack.c.h.b16 %v996
          %v1004 = vunpack.c.l.b16 %v997
          %v1005 = vunpack.c.h.b16 %v997
          %v1006 = vunpack.c.l.b16 %v998
          %v1007 = vunpack.c.h.b16 %v998
          %v1008 = vpack.c.b16 %v1002, %v1002
          %v1009 = vpack.c.b16 %v1003, %v1003
          %v1010 = vpack.c.b16 %v1004, %v1004
          %v1011 = vpack.c.b16 %v1005, %v1005
          %v1012 = vpack.c.b16 %v1006, %v1006
          %v1013 = vpack.c.b16 %v1007, %v1007
          %1020 = vmatpush.bf16.msra.mxu0 %v709
          %1021 = vmatpush.bf16.msra.mxu0 %v708
          %1022 = vmatpush.bf16.msra.mxu0 %v707
          %1023 = vmatpush.bf16.msra.mxu0 %v706
          %1024 = vmatpush.bf16.msra.mxu0 %v705
          %1025 = vmatpush.bf16.msra.mxu0 %v704
          %1026 = vmatpush.bf16.msra.mxu0 %v703
          %1027 = vmatpush.bf16.msra.mxu0 %v702
          %1028 = vmatmul.bf16.gmra.mxu0 %v1008
          %v1029 = vpop.f32.mrf.mxu0
          %v1030 = vadd.f32 0.0, %v1029
          %v1031 = vpop.f32.mrf.mxu0
          %1032 = vdwg.mxu0
          %1033 = vmatpush.bf16.msra.mxu0 %v717
          %1034 = vmatpush.bf16.msra.mxu0 %v716
          %1035 = vmatpush.bf16.msra.mxu0 %v715
          %1036 = vmatpush.bf16.msra.mxu0 %v714
          %1037 = vmatpush.bf16.msra.mxu0 %v713
          %1038 = vmatpush.bf16.msra.mxu0 %v712
          %1039 = vmatpush.bf16.msra.mxu0 %v711
          %1040 = vmatpush.bf16.msra.mxu0 %v710
          %1041 = vmatmul.bf16.gmra.mxu0 %v1009
          %v1042 = vpop.f32.mrf.mxu0
          %v1043 = vadd.f32 %v1030, %v1042
          %v1044 = vpop.f32.mrf.mxu0
          %1045 = vdwg.mxu0
          %1046 = vmatpush.bf16.msra.mxu0 %v725
          %1047 = vmatpush.bf16.msra.mxu0 %v724
          %1048 = vmatpush.bf16.msra.mxu0 %v723
          %1049 = vmatpush.bf16.msra.mxu0 %v722
          %1050 = vmatpush.bf16.msra.mxu0 %v721
          %1051 = vmatpush.bf16.msra.mxu0 %v720
          %1052 = vmatpush.bf16.msra.mxu0 %v719
          %1053 = vmatpush.bf16.msra.mxu0 %v718
          %1054 = vmatmul.bf16.gmra.mxu0 %v1010
          %v1055 = vpop.f32.mrf.mxu0
          %v1056 = vadd.f32 %v1043, %v1055
          %v1057 = vpop.f32.mrf.mxu0
          %1058 = vdwg.mxu0
          %1059 = vmatpush.bf16.msra.mxu0 %v733
          %1060 = vmatpush.bf16.msra.mxu0 %v732
          %1061 = vmatpush.bf16.msra.mxu0 %v731
          %1062 = vmatpush.bf16.msra.mxu0 %v730
          %1063 = vmatpush.bf16.msra.mxu0 %v729
          %1064 = vmatpush.bf16.msra.mxu0 %v728
          %1065 = vmatpush.bf16.msra.mxu0 %v727
          %1066 = vmatpush.bf16.msra.mxu0 %v726
          %1067 = vmatmul.bf16.gmra.mxu0 %v1011
          %v1068 = vpop.f32.mrf.mxu0
          %v1069 = vadd.f32 %v1056, %v1068
          %v1070 = vpop.f32.mrf.mxu0
          %1071 = vdwg.mxu0
          %1072 = vmatpush.bf16.msra.mxu0 %v741
          %1073 = vmatpush.bf16.msra.mxu0 %v740
          %1074 = vmatpush.bf16.msra.mxu0 %v739
          %1075 = vmatpush.bf16.msra.mxu0 %v738
          %1076 = vmatpush.bf16.msra.mxu0 %v737
          %1077 = vmatpush.bf16.msra.mxu0 %v736
          %1078 = vmatpush.bf16.msra.mxu0 %v735
          %1079 = vmatpush.bf16.msra.mxu0 %v734
          %1080 = vmatmul.bf16.gmra.mxu0 %v1012
          %v1081 = vpop.f32.mrf.mxu0
          %v1082 = vadd.f32 %v1069, %v1081
          %v1083 = vpop.f32.mrf.mxu0
          %1084 = vdwg.mxu0
          %1085 = vmatpush.bf16.msra.mxu0 %v749
          %1086 = vmatpush.bf16.msra.mxu0 %v748
          %1087 = vmatpush.bf16.msra.mxu0 %v747
          %1088 = vmatpush.bf16.msra.mxu0 %v746
          %1089 = vmatpush.bf16.msra.mxu0 %v745
          %1090 = vmatpush.bf16.msra.mxu0 %v744
          %1091 = vmatpush.bf16.msra.mxu0 %v743
          %1092 = vmatpush.bf16.msra.mxu0 %v742
          %1093 = vmatmul.bf16.gmra.mxu0 %v1013
          %v1094 = vpop.f32.mrf.mxu0
          %v1095 = vadd.f32 %v1082, %v1094
          %v1096 = vpop.f32.mrf.mxu0
          %1097 = vdwg.mxu0
          %v1098 = vmul.f32 %v1095, %v877
          %v1099 = vadd.f32 %v1098, %v881
          %v1100 = vmax.f32 %v1099, 0.0
          %v1101 = vpack.c.bf16 %v1100, %v1100
          %1102 = vst [vmem:[#allocation2 + $0x8] sm:$0xf] %v1101
          %s1103 = scalar_lea.vmem %s0, 72
          %v1104 = vld [vmem:[%s1103] sm:$0xff]
          %v1105 = vld [vmem:[%s1103 + $0x8] sm:$0xff]
          %v1106 = vld [vmem:[%s1103 + $0x10] sm:$0xff]
          %v1110 = vunpack.c.l.b16 %v1104
          %v1111 = vunpack.c.h.b16 %v1104
          %v1112 = vunpack.c.l.b16 %v1105
          %v1113 = vunpack.c.h.b16 %v1105
          %v1114 = vunpack.c.l.b16 %v1106
          %v1115 = vunpack.c.h.b16 %v1106
          %v1116 = vpack.c.b16 %v1110, %v1110
          %v1117 = vpack.c.b16 %v1111, %v1111
          %v1118 = vpack.c.b16 %v1112, %v1112
          %v1119 = vpack.c.b16 %v1113, %v1113
          %v1120 = vpack.c.b16 %v1114, %v1114
          %v1121 = vpack.c.b16 %v1115, %v1115
          %1128 = vmatpush.bf16.msra.mxu0 %v709
          %1129 = vmatpush.bf16.msra.mxu0 %v708
          %1130 = vmatpush.bf16.msra.mxu0 %v707
          %1131 = vmatpush.bf16.msra.mxu0 %v706
          %1132 = vmatpush.bf16.msra.mxu0 %v705
          %1133 = vmatpush.bf16.msra.mxu0 %v704
          %1134 = vmatpush.bf16.msra.mxu0 %v703
          %1135 = vmatpush.bf16.msra.mxu0 %v702
          %1136 = vmatmul.bf16.gmra.mxu0 %v1116
          %v1137 = vpop.f32.mrf.mxu0
          %v1138 = vadd.f32 0.0, %v1137
          %v1139 = vpop.f32.mrf.mxu0
          %1140 = vdwg.mxu0
          %1141 = vmatpush.bf16.msra.mxu0 %v717
          %1142 = vmatpush.bf16.msra.mxu0 %v716
          %1143 = vmatpush.bf16.msra.mxu0 %v715
          %1144 = vmatpush.bf16.msra.mxu0 %v714
          %1145 = vmatpush.bf16.msra.mxu0 %v713
          %1146 = vmatpush.bf16.msra.mxu0 %v712
          %1147 = vmatpush.bf16.msra.mxu0 %v711
          %1148 = vmatpush.bf16.msra.mxu0 %v710
          %1149 = vmatmul.bf16.gmra.mxu0 %v1117
          %v1150 = vpop.f32.mrf.mxu0
          %v1151 = vadd.f32 %v1138, %v1150
          %v1152 = vpop.f32.mrf.mxu0
          %1153 = vdwg.mxu0
          %1154 = vmatpush.bf16.msra.mxu0 %v725
          %1155 = vmatpush.bf16.msra.mxu0 %v724
          %1156 = vmatpush.bf16.msra.mxu0 %v723
          %1157 = vmatpush.bf16.msra.mxu0 %v722
          %1158 = vmatpush.bf16.msra.mxu0 %v721
          %1159 = vmatpush.bf16.msra.mxu0 %v720
          %1160 = vmatpush.bf16.msra.mxu0 %v719
          %1161 = vmatpush.bf16.msra.mxu0 %v718
          %1162 = vmatmul.bf16.gmra.mxu0 %v1118
          %v1163 = vpop.f32.mrf.mxu0
          %v1164 = vadd.f32 %v1151, %v1163
          %v1165 = vpop.f32.mrf.mxu0
          %1166 = vdwg.mxu0
          %1167 = vmatpush.bf16.msra.mxu0 %v733
          %1168 = vmatpush.bf16.msra.mxu0 %v732
          %1169 = vmatpush.bf16.msra.mxu0 %v731
          %1170 = vmatpush.bf16.msra.mxu0 %v730
          %1171 = vmatpush.bf16.msra.mxu0 %v729
          %1172 = vmatpush.bf16.msra.mxu0 %v728
          %1173 = vmatpush.bf16.msra.mxu0 %v727
          %1174 = vmatpush.bf16.msra.mxu0 %v726
          %1175 = vmatmul.bf16.gmra.mxu0 %v1119
          %v1176 = vpop.f32.mrf.mxu0
          %v1177 = vadd.f32 %v1164, %v1176
          %v1178 = vpop.f32.mrf.mxu0
          %1179 = vdwg.mxu0
          %1180 = vmatpush.bf16.msra.mxu0 %v741
          %1181 = vmatpush.bf16.msra.mxu0 %v740
          %1182 = vmatpush.bf16.msra.mxu0 %v739
          %1183 = vmatpush.bf16.msra.mxu0 %v738
          %1184 = vmatpush.bf16.msra.mxu0 %v737
          %1185 = vmatpush.bf16.msra.mxu0 %v736
          %1186 = vmatpush.bf16.msra.mxu0 %v735
          %1187 = vmatpush.bf16.msra.mxu0 %v734
          %1188 = vmatmul.bf16.gmra.mxu0 %v1120
          %v1189 = vpop.f32.mrf.mxu0
          %v1190 = vadd.f32 %v1177, %v1189
          %v1191 = vpop.f32.mrf.mxu0
          %1192 = vdwg.mxu0
          %1193 = vmatpush.bf16.msra.mxu0 %v749
          %1194 = vmatpush.bf16.msra.mxu0 %v748
          %1195 = vmatpush.bf16.msra.mxu0 %v747
          %1196 = vmatpush.bf16.msra.mxu0 %v746
          %1197 = vmatpush.bf16.msra.mxu0 %v745
          %1198 = vmatpush.bf16.msra.mxu0 %v744
          %1199 = vmatpush.bf16.msra.mxu0 %v743
          %1200 = vmatpush.bf16.msra.mxu0 %v742
          %1201 = vmatmul.bf16.gmra.mxu0 %v1121
          %v1202 = vpop.f32.mrf.mxu0
          %v1203 = vadd.f32 %v1190, %v1202
          %v1204 = vpop.f32.mrf.mxu0
          %1205 = vdwg.mxu0
          %v1206 = vmul.f32 %v1203, %v877
          %v1207 = vadd.f32 %v1206, %v881
          %v1208 = vmax.f32 %v1207, 0.0
          %v1209 = vpack.c.bf16 %v1208, %v1208
          %1210 = vst [vmem:[#allocation2 + $0xc] sm:$0xf] %v1209
          %s1211 = scalar_lea.vmem %s0, 96
          %v1212 = vld [vmem:[%s1211] sm:$0xff]
          %v1213 = vld [vmem:[%s1211 + $0x8] sm:$0xff]
          %v1214 = vld [vmem:[%s1211 + $0x10] sm:$0xff]
          %v1218 = vunpack.c.l.b16 %v1212
          %v1219 = vunpack.c.h.b16 %v1212
          %v1220 = vunpack.c.l.b16 %v1213
          %v1221 = vunpack.c.h.b16 %v1213
          %v1222 = vunpack.c.l.b16 %v1214
          %v1223 = vunpack.c.h.b16 %v1214
          %v1224 = vpack.c.b16 %v1218, %v1218
          %v1225 = vpack.c.b16 %v1219, %v1219
          %v1226 = vpack.c.b16 %v1220, %v1220
          %v1227 = vpack.c.b16 %v1221, %v1221
          %v1228 = vpack.c.b16 %v1222, %v1222
          %v1229 = vpack.c.b16 %v1223, %v1223
          %1236 = vmatpush.bf16.msra.mxu0 %v709
          %1237 = vmatpush.bf16.msra.mxu0 %v708
          %1238 = vmatpush.bf16.msra.mxu0 %v707
          %1239 = vmatpush.bf16.msra.mxu0 %v706
          %1240 = vmatpush.bf16.msra.mxu0 %v705
          %1241 = vmatpush.bf16.msra.mxu0 %v704
          %1242 = vmatpush.bf16.msra.mxu0 %v703
          %1243 = vmatpush.bf16.msra.mxu0 %v702
          %1244 = vmatmul.bf16.gmra.mxu0 %v1224
          %v1245 = vpop.f32.mrf.mxu0
          %v1246 = vadd.f32 0.0, %v1245
          %v1247 = vpop.f32.mrf.mxu0
          %1248 = vdwg.mxu0
          %1249 = vmatpush.bf16.msra.mxu0 %v717
          %1250 = vmatpush.bf16.msra.mxu0 %v716
          %1251 = vmatpush.bf16.msra.mxu0 %v715
          %1252 = vmatpush.bf16.msra.mxu0 %v714
          %1253 = vmatpush.bf16.msra.mxu0 %v713
          %1254 = vmatpush.bf16.msra.mxu0 %v712
          %1255 = vmatpush.bf16.msra.mxu0 %v711
          %1256 = vmatpush.bf16.msra.mxu0 %v710
          %1257 = vmatmul.bf16.gmra.mxu0 %v1225
          %v1258 = vpop.f32.mrf.mxu0
          %v1259 = vadd.f32 %v1246, %v1258
          %v1260 = vpop.f32.mrf.mxu0
          %1261 = vdwg.mxu0
          %1262 = vmatpush.bf16.msra.mxu0 %v725
          %1263 = vmatpush.bf16.msra.mxu0 %v724
          %1264 = vmatpush.bf16.msra.mxu0 %v723
          %1265 = vmatpush.bf16.msra.mxu0 %v722
          %1266 = vmatpush.bf16.msra.mxu0 %v721
          %1267 = vmatpush.bf16.msra.mxu0 %v720
          %1268 = vmatpush.bf16.msra.mxu0 %v719
          %1269 = vmatpush.bf16.msra.mxu0 %v718
          %1270 = vmatmul.bf16.gmra.mxu0 %v1226
          %v1271 = vpop.f32.mrf.mxu0
          %v1272 = vadd.f32 %v1259, %v1271
          %v1273 = vpop.f32.mrf.mxu0
          %1274 = vdwg.mxu0
          %1275 = vmatpush.bf16.msra.mxu0 %v733
          %1276 = vmatpush.bf16.msra.mxu0 %v732
          %1277 = vmatpush.bf16.msra.mxu0 %v731
          %1278 = vmatpush.bf16.msra.mxu0 %v730
          %1279 = vmatpush.bf16.msra.mxu0 %v729
          %1280 = vmatpush.bf16.msra.mxu0 %v728
          %1281 = vmatpush.bf16.msra.mxu0 %v727
          %1282 = vmatpush.bf16.msra.mxu0 %v726
          %1283 = vmatmul.bf16.gmra.mxu0 %v1227
          %v1284 = vpop.f32.mrf.mxu0
          %v1285 = vadd.f32 %v1272, %v1284
          %v1286 = vpop.f32.mrf.mxu0
          %1287 = vdwg.mxu0
          %1288 = vmatpush.bf16.msra.mxu0 %v741
          %1289 = vmatpush.bf16.msra.mxu0 %v740
          %1290 = vmatpush.bf16.msra.mxu0 %v739
          %1291 = vmatpush.bf16.msra.mxu0 %v738
          %1292 = vmatpush.bf16.msra.mxu0 %v737
          %1293 = vmatpush.bf16.msra.mxu0 %v736
          %1294 = vmatpush.bf16.msra.mxu0 %v735
          %1295 = vmatpush.bf16.msra.mxu0 %v734
          %1296 = vmatmul.bf16.gmra.mxu0 %v1228
          %v1297 = vpop.f32.mrf.mxu0
          %v1298 = vadd.f32 %v1285, %v1297
          %v1299 = vpop.f32.mrf.mxu0
          %1300 = vdwg.mxu0
          %1301 = vmatpush.bf16.msra.mxu0 %v749
          %1302 = vmatpush.bf16.msra.mxu0 %v748
          %1303 = vmatpush.bf16.msra.mxu0 %v747
          %1304 = vmatpush.bf16.msra.mxu0 %v746
          %1305 = vmatpush.bf16.msra.mxu0 %v745
          %1306 = vmatpush.bf16.msra.mxu0 %v744
          %1307 = vmatpush.bf16.msra.mxu0 %v743
          %1308 = vmatpush.bf16.msra.mxu0 %v742
          %1309 = vmatmul.bf16.gmra.mxu0 %v1229
          %v1310 = vpop.f32.mrf.mxu0
          %v1311 = vadd.f32 %v1298, %v1310
          %v1312 = vpop.f32.mrf.mxu0
          %1313 = vdwg.mxu0
          %v1314 = vmul.f32 %v1311, %v877
          %v1315 = vadd.f32 %v1314, %v881
          %v1316 = vmax.f32 %v1315, 0.0
          %v1317 = vpack.c.bf16 %v1316, %v1316
          %1318 = vst [vmem:[#allocation2 + $0x10] sm:$0xf] %v1317
          %s1319 = scalar_lea.vmem %s0, 120
          %v1320 = vld [vmem:[%s1319] sm:$0xff]
          %v1321 = vld [vmem:[%s1319 + $0x8] sm:$0xff]
          %v1322 = vld [vmem:[%s1319 + $0x10] sm:$0xff]
          %v1326 = vunpack.c.l.b16 %v1320
          %v1327 = vunpack.c.h.b16 %v1320
          %v1328 = vunpack.c.l.b16 %v1321
          %v1329 = vunpack.c.h.b16 %v1321
          %v1330 = vunpack.c.l.b16 %v1322
          %v1331 = vunpack.c.h.b16 %v1322
          %v1332 = vpack.c.b16 %v1326, %v1326
          %v1333 = vpack.c.b16 %v1327, %v1327
          %v1334 = vpack.c.b16 %v1328, %v1328
          %v1335 = vpack.c.b16 %v1329, %v1329
          %v1336 = vpack.c.b16 %v1330, %v1330
          %v1337 = vpack.c.b16 %v1331, %v1331
          %1344 = vmatpush.bf16.msra.mxu0 %v709
          %1345 = vmatpush.bf16.msra.mxu0 %v708
          %1346 = vmatpush.bf16.msra.mxu0 %v707
          %1347 = vmatpush.bf16.msra.mxu0 %v706
          %1348 = vmatpush.bf16.msra.mxu0 %v705
          %1349 = vmatpush.bf16.msra.mxu0 %v704
          %1350 = vmatpush.bf16.msra.mxu0 %v703
          %1351 = vmatpush.bf16.msra.mxu0 %v702
          %1352 = vmatmul.bf16.gmra.mxu0 %v1332
          %v1353 = vpop.f32.mrf.mxu0
          %v1354 = vadd.f32 0.0, %v1353
          %v1355 = vpop.f32.mrf.mxu0
          %1356 = vdwg.mxu0
          %1357 = vmatpush.bf16.msra.mxu0 %v717
          %1358 = vmatpush.bf16.msra.mxu0 %v716
          %1359 = vmatpush.bf16.msra.mxu0 %v715
          %1360 = vmatpush.bf16.msra.mxu0 %v714
          %1361 = vmatpush.bf16.msra.mxu0 %v713
          %1362 = vmatpush.bf16.msra.mxu0 %v712
          %1363 = vmatpush.bf16.msra.mxu0 %v711
          %1364 = vmatpush.bf16.msra.mxu0 %v710
          %1365 = vmatmul.bf16.gmra.mxu0 %v1333
          %v1366 = vpop.f32.mrf.mxu0
          %v1367 = vadd.f32 %v1354, %v1366
          %v1368 = vpop.f32.mrf.mxu0
          %1369 = vdwg.mxu0
          %1370 = vmatpush.bf16.msra.mxu0 %v725
          %1371 = vmatpush.bf16.msra.mxu0 %v724
          %1372 = vmatpush.bf16.msra.mxu0 %v723
          %1373 = vmatpush.bf16.msra.mxu0 %v722
          %1374 = vmatpush.bf16.msra.mxu0 %v721
          %1375 = vmatpush.bf16.msra.mxu0 %v720
          %1376 = vmatpush.bf16.msra.mxu0 %v719
          %1377 = vmatpush.bf16.msra.mxu0 %v718
          %1378 = vmatmul.bf16.gmra.mxu0 %v1334
          %v1379 = vpop.f32.mrf.mxu0
          %v1380 = vadd.f32 %v1367, %v1379
          %v1381 = vpop.f32.mrf.mxu0
          %1382 = vdwg.mxu0
          %1383 = vmatpush.bf16.msra.mxu0 %v733
          %1384 = vmatpush.bf16.msra.mxu0 %v732
          %1385 = vmatpush.bf16.msra.mxu0 %v731
          %1386 = vmatpush.bf16.msra.mxu0 %v730
          %1387 = vmatpush.bf16.msra.mxu0 %v729
          %1388 = vmatpush.bf16.msra.mxu0 %v728
          %1389 = vmatpush.bf16.msra.mxu0 %v727
          %1390 = vmatpush.bf16.msra.mxu0 %v726
          %1391 = vmatmul.bf16.gmra.mxu0 %v1335
          %v1392 = vpop.f32.mrf.mxu0
          %v1393 = vadd.f32 %v1380, %v1392
          %v1394 = vpop.f32.mrf.mxu0
          %1395 = vdwg.mxu0
          %1396 = vmatpush.bf16.msra.mxu0 %v741
          %1397 = vmatpush.bf16.msra.mxu0 %v740
          %1398 = vmatpush.bf16.msra.mxu0 %v739
          %1399 = vmatpush.bf16.msra.mxu0 %v738
          %1400 = vmatpush.bf16.msra.mxu0 %v737
          %1401 = vmatpush.bf16.msra.mxu0 %v736
          %1402 = vmatpush.bf16.msra.mxu0 %v735
          %1403 = vmatpush.bf16.msra.mxu0 %v734
          %1404 = vmatmul.bf16.gmra.mxu0 %v1336
          %v1405 = vpop.f32.mrf.mxu0
          %v1406 = vadd.f32 %v1393, %v1405
          %v1407 = vpop.f32.mrf.mxu0
          %1408 = vdwg.mxu0
          %1409 = vmatpush.bf16.msra.mxu0 %v749
          %1410 = vmatpush.bf16.msra.mxu0 %v748
          %1411 = vmatpush.bf16.msra.mxu0 %v747
          %1412 = vmatpush.bf16.msra.mxu0 %v746
          %1413 = vmatpush.bf16.msra.mxu0 %v745
          %1414 = vmatpush.bf16.msra.mxu0 %v744
          %1415 = vmatpush.bf16.msra.mxu0 %v743
          %1416 = vmatpush.bf16.msra.mxu0 %v742
          %1417 = vmatmul.bf16.gmra.mxu0 %v1337
          %v1418 = vpop.f32.mrf.mxu0
          %v1419 = vadd.f32 %v1406, %v1418
          %v1420 = vpop.f32.mrf.mxu0
          %1421 = vdwg.mxu0
          %v1422 = vmul.f32 %v1419, %v877
          %v1423 = vadd.f32 %v1422, %v881
          %v1424 = vmax.f32 %v1423, 0.0
          %v1425 = vpack.c.bf16 %v1424, %v1424
          %1426 = vst [vmem:[#allocation2 + $0x14] sm:$0xf] %v1425
          %s1427 = scalar_lea.vmem %s0, 144
          %v1428 = vld [vmem:[%s1427] sm:$0xff]
          %v1429 = vld [vmem:[%s1427 + $0x8] sm:$0xff]
          %v1430 = vld [vmem:[%s1427 + $0x10] sm:$0xff]
          %v1434 = vunpack.c.l.b16 %v1428
          %v1435 = vunpack.c.h.b16 %v1428
          %v1436 = vunpack.c.l.b16 %v1429
          %v1437 = vunpack.c.h.b16 %v1429
          %v1438 = vunpack.c.l.b16 %v1430
          %v1439 = vunpack.c.h.b16 %v1430
          %v1440 = vpack.c.b16 %v1434, %v1434
          %v1441 = vpack.c.b16 %v1435, %v1435
          %v1442 = vpack.c.b16 %v1436, %v1436
          %v1443 = vpack.c.b16 %v1437, %v1437
          %v1444 = vpack.c.b16 %v1438, %v1438
          %v1445 = vpack.c.b16 %v1439, %v1439
          %1452 = vmatpush.bf16.msra.mxu0 %v709
          %1453 = vmatpush.bf16.msra.mxu0 %v708
          %1454 = vmatpush.bf16.msra.mxu0 %v707
          %1455 = vmatpush.bf16.msra.mxu0 %v706
          %1456 = vmatpush.bf16.msra.mxu0 %v705
          %1457 = vmatpush.bf16.msra.mxu0 %v704
          %1458 = vmatpush.bf16.msra.mxu0 %v703
          %1459 = vmatpush.bf16.msra.mxu0 %v702
          %1460 = vmatmul.bf16.gmra.mxu0 %v1440
          %v1461 = vpop.f32.mrf.mxu0
          %v1462 = vadd.f32 0.0, %v1461
          %v1463 = vpop.f32.mrf.mxu0
          %1464 = vdwg.mxu0
          %1465 = vmatpush.bf16.msra.mxu0 %v717
          %1466 = vmatpush.bf16.msra.mxu0 %v716
          %1467 = vmatpush.bf16.msra.mxu0 %v715
          %1468 = vmatpush.bf16.msra.mxu0 %v714
          %1469 = vmatpush.bf16.msra.mxu0 %v713
          %1470 = vmatpush.bf16.msra.mxu0 %v712
          %1471 = vmatpush.bf16.msra.mxu0 %v711
          %1472 = vmatpush.bf16.msra.mxu0 %v710
          %1473 = vmatmul.bf16.gmra.mxu0 %v1441
          %v1474 = vpop.f32.mrf.mxu0
          %v1475 = vadd.f32 %v1462, %v1474
          %v1476 = vpop.f32.mrf.mxu0
          %1477 = vdwg.mxu0
          %1478 = vmatpush.bf16.msra.mxu0 %v725
          %1479 = vmatpush.bf16.msra.mxu0 %v724
          %1480 = vmatpush.bf16.msra.mxu0 %v723
          %1481 = vmatpush.bf16.msra.mxu0 %v722
          %1482 = vmatpush.bf16.msra.mxu0 %v721
          %1483 = vmatpush.bf16.msra.mxu0 %v720
          %1484 = vmatpush.bf16.msra.mxu0 %v719
          %1485 = vmatpush.bf16.msra.mxu0 %v718
          %1486 = vmatmul.bf16.gmra.mxu0 %v1442
          %v1487 = vpop.f32.mrf.mxu0
          %v1488 = vadd.f32 %v1475, %v1487
          %v1489 = vpop.f32.mrf.mxu0
          %1490 = vdwg.mxu0
          %1491 = vmatpush.bf16.msra.mxu0 %v733
          %1492 = vmatpush.bf16.msra.mxu0 %v732
          %1493 = vmatpush.bf16.msra.mxu0 %v731
          %1494 = vmatpush.bf16.msra.mxu0 %v730
          %1495 = vmatpush.bf16.msra.mxu0 %v729
          %1496 = vmatpush.bf16.msra.mxu0 %v728
          %1497 = vmatpush.bf16.msra.mxu0 %v727
          %1498 = vmatpush.bf16.msra.mxu0 %v726
          %1499 = vmatmul.bf16.gmra.mxu0 %v1443
          %v1500 = vpop.f32.mrf.mxu0
          %v1501 = vadd.f32 %v1488, %v1500
          %v1502 = vpop.f32.mrf.mxu0
          %1503 = vdwg.mxu0
          %1504 = vmatpush.bf16.msra.mxu0 %v741
          %1505 = vmatpush.bf16.msra.mxu0 %v740
          %1506 = vmatpush.bf16.msra.mxu0 %v739
          %1507 = vmatpush.bf16.msra.mxu0 %v738
          %1508 = vmatpush.bf16.msra.mxu0 %v737
          %1509 = vmatpush.bf16.msra.mxu0 %v736
          %1510 = vmatpush.bf16.msra.mxu0 %v735
          %1511 = vmatpush.bf16.msra.mxu0 %v734
          %1512 = vmatmul.bf16.gmra.mxu0 %v1444
          %v1513 = vpop.f32.mrf.mxu0
          %v1514 = vadd.f32 %v1501, %v1513
          %v1515 = vpop.f32.mrf.mxu0
          %1516 = vdwg.mxu0
          %1517 = vmatpush.bf16.msra.mxu0 %v749
          %1518 = vmatpush.bf16.msra.mxu0 %v748
          %1519 = vmatpush.bf16.msra.mxu0 %v747
          %1520 = vmatpush.bf16.msra.mxu0 %v746
          %1521 = vmatpush.bf16.msra.mxu0 %v745
          %1522 = vmatpush.bf16.msra.mxu0 %v744
          %1523 = vmatpush.bf16.msra.mxu0 %v743
          %1524 = vmatpush.bf16.msra.mxu0 %v742
          %1525 = vmatmul.bf16.gmra.mxu0 %v1445
          %v1526 = vpop.f32.mrf.mxu0
          %v1527 = vadd.f32 %v1514, %v1526
          %v1528 = vpop.f32.mrf.mxu0
          %1529 = vdwg.mxu0
          %v1530 = vmul.f32 %v1527, %v877
          %v1531 = vadd.f32 %v1530, %v881
          %v1532 = vmax.f32 %v1531, 0.0
          %v1533 = vpack.c.bf16 %v1532, %v1532
          %1534 = vst [vmem:[#allocation2 + $0x18] sm:$0xf] %v1533
          %s1535 = scalar_lea.vmem %s0, 168
          %v1536 = vld [vmem:[%s1535] sm:$0xff]
          %v1537 = vld [vmem:[%s1535 + $0x8] sm:$0xff]
          %v1538 = vld [vmem:[%s1535 + $0x10] sm:$0xff]
          %v1542 = vunpack.c.l.b16 %v1536
          %v1543 = vunpack.c.h.b16 %v1536
          %v1544 = vunpack.c.l.b16 %v1537
          %v1545 = vunpack.c.h.b16 %v1537
          %v1546 = vunpack.c.l.b16 %v1538
          %v1547 = vunpack.c.h.b16 %v1538
          %v1548 = vpack.c.b16 %v1542, %v1542
          %v1549 = vpack.c.b16 %v1543, %v1543
          %v1550 = vpack.c.b16 %v1544, %v1544
          %v1551 = vpack.c.b16 %v1545, %v1545
          %v1552 = vpack.c.b16 %v1546, %v1546
          %v1553 = vpack.c.b16 %v1547, %v1547
          %1560 = vmatpush.bf16.msra.mxu0 %v709
          %1561 = vmatpush.bf16.msra.mxu0 %v708
          %1562 = vmatpush.bf16.msra.mxu0 %v707
          %1563 = vmatpush.bf16.msra.mxu0 %v706
          %1564 = vmatpush.bf16.msra.mxu0 %v705
          %1565 = vmatpush.bf16.msra.mxu0 %v704
          %1566 = vmatpush.bf16.msra.mxu0 %v703
          %1567 = vmatpush.bf16.msra.mxu0 %v702
          %1568 = vmatmul.bf16.gmra.mxu0 %v1548
          %v1569 = vpop.f32.mrf.mxu0
          %v1570 = vadd.f32 0.0, %v1569
          %v1571 = vpop.f32.mrf.mxu0
          %1572 = vdwg.mxu0
          %1573 = vmatpush.bf16.msra.mxu0 %v717
          %1574 = vmatpush.bf16.msra.mxu0 %v716
          %1575 = vmatpush.bf16.msra.mxu0 %v715
          %1576 = vmatpush.bf16.msra.mxu0 %v714
          %1577 = vmatpush.bf16.msra.mxu0 %v713
          %1578 = vmatpush.bf16.msra.mxu0 %v712
          %1579 = vmatpush.bf16.msra.mxu0 %v711
          %1580 = vmatpush.bf16.msra.mxu0 %v710
          %1581 = vmatmul.bf16.gmra.mxu0 %v1549
          %v1582 = vpop.f32.mrf.mxu0
          %v1583 = vadd.f32 %v1570, %v1582
          %v1584 = vpop.f32.mrf.mxu0
          %1585 = vdwg.mxu0
          %1586 = vmatpush.bf16.msra.mxu0 %v725
          %1587 = vmatpush.bf16.msra.mxu0 %v724
          %1588 = vmatpush.bf16.msra.mxu0 %v723
          %1589 = vmatpush.bf16.msra.mxu0 %v722
          %1590 = vmatpush.bf16.msra.mxu0 %v721
          %1591 = vmatpush.bf16.msra.mxu0 %v720
          %1592 = vmatpush.bf16.msra.mxu0 %v719
          %1593 = vmatpush.bf16.msra.mxu0 %v718
          %1594 = vmatmul.bf16.gmra.mxu0 %v1550
          %v1595 = vpop.f32.mrf.mxu0
          %v1596 = vadd.f32 %v1583, %v1595
          %v1597 = vpop.f32.mrf.mxu0
          %1598 = vdwg.mxu0
          %1599 = vmatpush.bf16.msra.mxu0 %v733
          %1600 = vmatpush.bf16.msra.mxu0 %v732
          %1601 = vmatpush.bf16.msra.mxu0 %v731
          %1602 = vmatpush.bf16.msra.mxu0 %v730
          %1603 = vmatpush.bf16.msra.mxu0 %v729
          %1604 = vmatpush.bf16.msra.mxu0 %v728
          %1605 = vmatpush.bf16.msra.mxu0 %v727
          %1606 = vmatpush.bf16.msra.mxu0 %v726
          %1607 = vmatmul.bf16.gmra.mxu0 %v1551
          %v1608 = vpop.f32.mrf.mxu0
          %v1609 = vadd.f32 %v1596, %v1608
          %v1610 = vpop.f32.mrf.mxu0
          %1611 = vdwg.mxu0
          %1612 = vmatpush.bf16.msra.mxu0 %v741
          %1613 = vmatpush.bf16.msra.mxu0 %v740
          %1614 = vmatpush.bf16.msra.mxu0 %v739
          %1615 = vmatpush.bf16.msra.mxu0 %v738
          %1616 = vmatpush.bf16.msra.mxu0 %v737
          %1617 = vmatpush.bf16.msra.mxu0 %v736
          %1618 = vmatpush.bf16.msra.mxu0 %v735
          %1619 = vmatpush.bf16.msra.mxu0 %v734
          %1620 = vmatmul.bf16.gmra.mxu0 %v1552
          %v1621 = vpop.f32.mrf.mxu0
          %v1622 = vadd.f32 %v1609, %v1621
          %v1623 = vpop.f32.mrf.mxu0
          %1624 = vdwg.mxu0
          %1625 = vmatpush.bf16.msra.mxu0 %v749
          %1626 = vmatpush.bf16.msra.mxu0 %v748
          %1627 = vmatpush.bf16.msra.mxu0 %v747
          %1628 = vmatpush.bf16.msra.mxu0 %v746
          %1629 = vmatpush.bf16.msra.mxu0 %v745
          %1630 = vmatpush.bf16.msra.mxu0 %v744
          %1631 = vmatpush.bf16.msra.mxu0 %v743
          %1632 = vmatpush.bf16.msra.mxu0 %v742
          %1633 = vmatmul.bf16.gmra.mxu0 %v1553
          %v1634 = vpop.f32.mrf.mxu0
          %v1635 = vadd.f32 %v1622, %v1634
          %v1636 = vpop.f32.mrf.mxu0
          %1637 = vdwg.mxu0
          %v1638 = vmul.f32 %v1635, %v877
          %v1639 = vadd.f32 %v1638, %v881
          %v1640 = vmax.f32 %v1639, 0.0
          %v1641 = vpack.c.bf16 %v1640, %v1640
          %1642 = vst [vmem:[#allocation2 + $0x1c] sm:$0xf] %v1641
          %s1643 = scalar_lea.vmem %s0, 192
          %v1644 = vld [vmem:[%s1643] sm:$0xff]
          %v1645 = vld [vmem:[%s1643 + $0x8] sm:$0xff]
          %v1646 = vld [vmem:[%s1643 + $0x10] sm:$0xff]
          %v1650 = vunpack.c.l.b16 %v1644
          %v1651 = vunpack.c.h.b16 %v1644
          %v1652 = vunpack.c.l.b16 %v1645
          %v1653 = vunpack.c.h.b16 %v1645
          %v1654 = vunpack.c.l.b16 %v1646
          %v1655 = vunpack.c.h.b16 %v1646
          %v1656 = vpack.c.b16 %v1650, %v1650
          %v1657 = vpack.c.b16 %v1651, %v1651
          %v1658 = vpack.c.b16 %v1652, %v1652
          %v1659 = vpack.c.b16 %v1653, %v1653
          %v1660 = vpack.c.b16 %v1654, %v1654
          %v1661 = vpack.c.b16 %v1655, %v1655
          %1668 = vmatpush.bf16.msra.mxu0 %v709
          %1669 = vmatpush.bf16.msra.mxu0 %v708
          %1670 = vmatpush.bf16.msra.mxu0 %v707
          %1671 = vmatpush.bf16.msra.mxu0 %v706
          %1672 = vmatpush.bf16.msra.mxu0 %v705
          %1673 = vmatpush.bf16.msra.mxu0 %v704
          %1674 = vmatpush.bf16.msra.mxu0 %v703
          %1675 = vmatpush.bf16.msra.mxu0 %v702
          %1676 = vmatmul.bf16.gmra.mxu0 %v1656
          %v1677 = vpop.f32.mrf.mxu0
          %v1678 = vadd.f32 0.0, %v1677
          %v1679 = vpop.f32.mrf.mxu0
          %1680 = vdwg.mxu0
          %1681 = vmatpush.bf16.msra.mxu0 %v717
          %1682 = vmatpush.bf16.msra.mxu0 %v716
          %1683 = vmatpush.bf16.msra.mxu0 %v715
          %1684 = vmatpush.bf16.msra.mxu0 %v714
          %1685 = vmatpush.bf16.msra.mxu0 %v713
          %1686 = vmatpush.bf16.msra.mxu0 %v712
          %1687 = vmatpush.bf16.msra.mxu0 %v711
          %1688 = vmatpush.bf16.msra.mxu0 %v710
          %1689 = vmatmul.bf16.gmra.mxu0 %v1657
          %v1690 = vpop.f32.mrf.mxu0
          %v1691 = vadd.f32 %v1678, %v1690
          %v1692 = vpop.f32.mrf.mxu0
          %1693 = vdwg.mxu0
          %1694 = vmatpush.bf16.msra.mxu0 %v725
          %1695 = vmatpush.bf16.msra.mxu0 %v724
          %1696 = vmatpush.bf16.msra.mxu0 %v723
          %1697 = vmatpush.bf16.msra.mxu0 %v722
          %1698 = vmatpush.bf16.msra.mxu0 %v721
          %1699 = vmatpush.bf16.msra.mxu0 %v720
          %1700 = vmatpush.bf16.msra.mxu0 %v719
          %1701 = vmatpush.bf16.msra.mxu0 %v718
          %1702 = vmatmul.bf16.gmra.mxu0 %v1658
          %v1703 = vpop.f32.mrf.mxu0
          %v1704 = vadd.f32 %v1691, %v1703
          %v1705 = vpop.f32.mrf.mxu0
          %1706 = vdwg.mxu0
          %1707 = vmatpush.bf16.msra.mxu0 %v733
          %1708 = vmatpush.bf16.msra.mxu0 %v732
          %1709 = vmatpush.bf16.msra.mxu0 %v731
          %1710 = vmatpush.bf16.msra.mxu0 %v730
          %1711 = vmatpush.bf16.msra.mxu0 %v729
          %1712 = vmatpush.bf16.msra.mxu0 %v728
          %1713 = vmatpush.bf16.msra.mxu0 %v727
          %1714 = vmatpush.bf16.msra.mxu0 %v726
          %1715 = vmatmul.bf16.gmra.mxu0 %v1659
          %v1716 = vpop.f32.mrf.mxu0
          %v1717 = vadd.f32 %v1704, %v1716
          %v1718 = vpop.f32.mrf.mxu0
          %1719 = vdwg.mxu0
          %1720 = vmatpush.bf16.msra.mxu0 %v741
          %1721 = vmatpush.bf16.msra.mxu0 %v740
          %1722 = vmatpush.bf16.msra.mxu0 %v739
          %1723 = vmatpush.bf16.msra.mxu0 %v738
          %1724 = vmatpush.bf16.msra.mxu0 %v737
          %1725 = vmatpush.bf16.msra.mxu0 %v736
          %1726 = vmatpush.bf16.msra.mxu0 %v735
          %1727 = vmatpush.bf16.msra.mxu0 %v734
          %1728 = vmatmul.bf16.gmra.mxu0 %v1660
          %v1729 = vpop.f32.mrf.mxu0
          %v1730 = vadd.f32 %v1717, %v1729
          %v1731 = vpop.f32.mrf.mxu0
          %1732 = vdwg.mxu0
          %1733 = vmatpush.bf16.msra.mxu0 %v749
          %1734 = vmatpush.bf16.msra.mxu0 %v748
          %1735 = vmatpush.bf16.msra.mxu0 %v747
          %1736 = vmatpush.bf16.msra.mxu0 %v746
          %1737 = vmatpush.bf16.msra.mxu0 %v745
          %1738 = vmatpush.bf16.msra.mxu0 %v744
          %1739 = vmatpush.bf16.msra.mxu0 %v743
          %1740 = vmatpush.bf16.msra.mxu0 %v742
          %1741 = vmatmul.bf16.gmra.mxu0 %v1661
          %v1742 = vpop.f32.mrf.mxu0
          %v1743 = vadd.f32 %v1730, %v1742
          %v1744 = vpop.f32.mrf.mxu0
          %1745 = vdwg.mxu0
          %v1746 = vmul.f32 %v1743, %v877
          %v1747 = vadd.f32 %v1746, %v881
          %v1748 = vmax.f32 %v1747, 0.0
          %v1749 = vpack.c.bf16 %v1748, %v1748
          %1750 = vst [vmem:[#allocation2 + $0x20] sm:$0xf] %v1749
          %s1751 = scalar_lea.vmem %s0, 216
          %v1752 = vld [vmem:[%s1751] sm:$0xff]
          %v1753 = vld [vmem:[%s1751 + $0x8] sm:$0xff]
          %v1754 = vld [vmem:[%s1751 + $0x10] sm:$0xff]
          %v1758 = vunpack.c.l.b16 %v1752
          %v1759 = vunpack.c.h.b16 %v1752
          %v1760 = vunpack.c.l.b16 %v1753
          %v1761 = vunpack.c.h.b16 %v1753
          %v1762 = vunpack.c.l.b16 %v1754
          %v1763 = vunpack.c.h.b16 %v1754
          %v1764 = vpack.c.b16 %v1758, %v1758
          %v1765 = vpack.c.b16 %v1759, %v1759
          %v1766 = vpack.c.b16 %v1760, %v1760
          %v1767 = vpack.c.b16 %v1761, %v1761
          %v1768 = vpack.c.b16 %v1762, %v1762
          %v1769 = vpack.c.b16 %v1763, %v1763
          %1776 = vmatpush.bf16.msra.mxu0 %v709
          %1777 = vmatpush.bf16.msra.mxu0 %v708
          %1778 = vmatpush.bf16.msra.mxu0 %v707
          %1779 = vmatpush.bf16.msra.mxu0 %v706
          %1780 = vmatpush.bf16.msra.mxu0 %v705
          %1781 = vmatpush.bf16.msra.mxu0 %v704
          %1782 = vmatpush.bf16.msra.mxu0 %v703
          %1783 = vmatpush.bf16.msra.mxu0 %v702
          %1784 = vmatmul.bf16.gmra.mxu0 %v1764
          %v1785 = vpop.f32.mrf.mxu0
          %v1786 = vadd.f32 0.0, %v1785
          %v1787 = vpop.f32.mrf.mxu0
          %1788 = vdwg.mxu0
          %1789 = vmatpush.bf16.msra.mxu0 %v717
          %1790 = vmatpush.bf16.msra.mxu0 %v716
          %1791 = vmatpush.bf16.msra.mxu0 %v715
          %1792 = vmatpush.bf16.msra.mxu0 %v714
          %1793 = vmatpush.bf16.msra.mxu0 %v713
          %1794 = vmatpush.bf16.msra.mxu0 %v712
          %1795 = vmatpush.bf16.msra.mxu0 %v711
          %1796 = vmatpush.bf16.msra.mxu0 %v710
          %1797 = vmatmul.bf16.gmra.mxu0 %v1765
          %v1798 = vpop.f32.mrf.mxu0
          %v1799 = vadd.f32 %v1786, %v1798
          %v1800 = vpop.f32.mrf.mxu0
          %1801 = vdwg.mxu0
          %1802 = vmatpush.bf16.msra.mxu0 %v725
          %1803 = vmatpush.bf16.msra.mxu0 %v724
          %1804 = vmatpush.bf16.msra.mxu0 %v723
          %1805 = vmatpush.bf16.msra.mxu0 %v722
          %1806 = vmatpush.bf16.msra.mxu0 %v721
          %1807 = vmatpush.bf16.msra.mxu0 %v720
          %1808 = vmatpush.bf16.msra.mxu0 %v719
          %1809 = vmatpush.bf16.msra.mxu0 %v718
          %1810 = vmatmul.bf16.gmra.mxu0 %v1766
          %v1811 = vpop.f32.mrf.mxu0
          %v1812 = vadd.f32 %v1799, %v1811
          %v1813 = vpop.f32.mrf.mxu0
          %1814 = vdwg.mxu0
          %1815 = vmatpush.bf16.msra.mxu0 %v733
          %1816 = vmatpush.bf16.msra.mxu0 %v732
          %1817 = vmatpush.bf16.msra.mxu0 %v731
          %1818 = vmatpush.bf16.msra.mxu0 %v730
          %1819 = vmatpush.bf16.msra.mxu0 %v729
          %1820 = vmatpush.bf16.msra.mxu0 %v728
          %1821 = vmatpush.bf16.msra.mxu0 %v727
          %1822 = vmatpush.bf16.msra.mxu0 %v726
          %1823 = vmatmul.bf16.gmra.mxu0 %v1767
          %v1824 = vpop.f32.mrf.mxu0
          %v1825 = vadd.f32 %v1812, %v1824
          %v1826 = vpop.f32.mrf.mxu0
          %1827 = vdwg.mxu0
          %1828 = vmatpush.bf16.msra.mxu0 %v741
          %1829 = vmatpush.bf16.msra.mxu0 %v740
          %1830 = vmatpush.bf16.msra.mxu0 %v739
          %1831 = vmatpush.bf16.msra.mxu0 %v738
          %1832 = vmatpush.bf16.msra.mxu0 %v737
          %1833 = vmatpush.bf16.msra.mxu0 %v736
          %1834 = vmatpush.bf16.msra.mxu0 %v735
          %1835 = vmatpush.bf16.msra.mxu0 %v734
          %1836 = vmatmul.bf16.gmra.mxu0 %v1768
          %v1837 = vpop.f32.mrf.mxu0
          %v1838 = vadd.f32 %v1825, %v1837
          %v1839 = vpop.f32.mrf.mxu0
          %1840 = vdwg.mxu0
          %1841 = vmatpush.bf16.msra.mxu0 %v749
          %1842 = vmatpush.bf16.msra.mxu0 %v748
          %1843 = vmatpush.bf16.msra.mxu0 %v747
          %1844 = vmatpush.bf16.msra.mxu0 %v746
          %1845 = vmatpush.bf16.msra.mxu0 %v745
          %1846 = vmatpush.bf16.msra.mxu0 %v744
          %1847 = vmatpush.bf16.msra.mxu0 %v743
          %1848 = vmatpush.bf16.msra.mxu0 %v742
          %1849 = vmatmul.bf16.gmra.mxu0 %v1769
          %v1850 = vpop.f32.mrf.mxu0
          %v1851 = vadd.f32 %v1838, %v1850
          %v1852 = vpop.f32.mrf.mxu0
          %1853 = vdwg.mxu0
          %v1854 = vmul.f32 %v1851, %v877
          %v1855 = vadd.f32 %v1854, %v881
          %v1856 = vmax.f32 %v1855, 0.0
          %v1857 = vpack.c.bf16 %v1856, %v1856
          %1858 = vst [vmem:[#allocation2 + $0x24] sm:$0xf] %v1857
          %s1859 = scalar_lea.vmem %s0, 240
          %v1860 = vld [vmem:[%s1859] sm:$0xff]
          %v1861 = vld [vmem:[%s1859 + $0x8] sm:$0xff]
          %v1862 = vld [vmem:[%s1859 + $0x10] sm:$0xff]
          %v1866 = vunpack.c.l.b16 %v1860
          %v1867 = vunpack.c.h.b16 %v1860
          %v1868 = vunpack.c.l.b16 %v1861
          %v1869 = vunpack.c.h.b16 %v1861
          %v1870 = vunpack.c.l.b16 %v1862
          %v1871 = vunpack.c.h.b16 %v1862
          %v1872 = vpack.c.b16 %v1866, %v1866
          %v1873 = vpack.c.b16 %v1867, %v1867
          %v1874 = vpack.c.b16 %v1868, %v1868
          %v1875 = vpack.c.b16 %v1869, %v1869
          %v1876 = vpack.c.b16 %v1870, %v1870
          %v1877 = vpack.c.b16 %v1871, %v1871
          %1884 = vmatpush.bf16.msra.mxu0 %v709
          %1885 = vmatpush.bf16.msra.mxu0 %v708
          %1886 = vmatpush.bf16.msra.mxu0 %v707
          %1887 = vmatpush.bf16.msra.mxu0 %v706
          %1888 = vmatpush.bf16.msra.mxu0 %v705
          %1889 = vmatpush.bf16.msra.mxu0 %v704
          %1890 = vmatpush.bf16.msra.mxu0 %v703
          %1891 = vmatpush.bf16.msra.mxu0 %v702
          %1892 = vmatmul.bf16.gmra.mxu0 %v1872
          %v1893 = vpop.f32.mrf.mxu0
          %v1894 = vadd.f32 0.0, %v1893
          %v1895 = vpop.f32.mrf.mxu0
          %1896 = vdwg.mxu0
          %1897 = vmatpush.bf16.msra.mxu0 %v717
          %1898 = vmatpush.bf16.msra.mxu0 %v716
          %1899 = vmatpush.bf16.msra.mxu0 %v715
          %1900 = vmatpush.bf16.msra.mxu0 %v714
          %1901 = vmatpush.bf16.msra.mxu0 %v713
          %1902 = vmatpush.bf16.msra.mxu0 %v712
          %1903 = vmatpush.bf16.msra.mxu0 %v711
          %1904 = vmatpush.bf16.msra.mxu0 %v710
          %1905 = vmatmul.bf16.gmra.mxu0 %v1873
          %v1906 = vpop.f32.mrf.mxu0
          %v1907 = vadd.f32 %v1894, %v1906
          %v1908 = vpop.f32.mrf.mxu0
          %1909 = vdwg.mxu0
          %1910 = vmatpush.bf16.msra.mxu0 %v725
          %1911 = vmatpush.bf16.msra.mxu0 %v724
          %1912 = vmatpush.bf16.msra.mxu0 %v723
          %1913 = vmatpush.bf16.msra.mxu0 %v722
          %1914 = vmatpush.bf16.msra.mxu0 %v721
          %1915 = vmatpush.bf16.msra.mxu0 %v720
          %1916 = vmatpush.bf16.msra.mxu0 %v719
          %1917 = vmatpush.bf16.msra.mxu0 %v718
          %1918 = vmatmul.bf16.gmra.mxu0 %v1874
          %v1919 = vpop.f32.mrf.mxu0
          %v1920 = vadd.f32 %v1907, %v1919
          %v1921 = vpop.f32.mrf.mxu0
          %1922 = vdwg.mxu0
          %1923 = vmatpush.bf16.msra.mxu0 %v733
          %1924 = vmatpush.bf16.msra.mxu0 %v732
          %1925 = vmatpush.bf16.msra.mxu0 %v731
          %1926 = vmatpush.bf16.msra.mxu0 %v730
          %1927 = vmatpush.bf16.msra.mxu0 %v729
          %1928 = vmatpush.bf16.msra.mxu0 %v728
          %1929 = vmatpush.bf16.msra.mxu0 %v727
          %1930 = vmatpush.bf16.msra.mxu0 %v726
          %1931 = vmatmul.bf16.gmra.mxu0 %v1875
          %v1932 = vpop.f32.mrf.mxu0
          %v1933 = vadd.f32 %v1920, %v1932
          %v1934 = vpop.f32.mrf.mxu0
          %1935 = vdwg.mxu0
          %1936 = vmatpush.bf16.msra.mxu0 %v741
          %1937 = vmatpush.bf16.msra.mxu0 %v740
          %1938 = vmatpush.bf16.msra.mxu0 %v739
          %1939 = vmatpush.bf16.msra.mxu0 %v738
          %1940 = vmatpush.bf16.msra.mxu0 %v737
          %1941 = vmatpush.bf16.msra.mxu0 %v736
          %1942 = vmatpush.bf16.msra.mxu0 %v735
          %1943 = vmatpush.bf16.msra.mxu0 %v734
          %1944 = vmatmul.bf16.gmra.mxu0 %v1876
          %v1945 = vpop.f32.mrf.mxu0
          %v1946 = vadd.f32 %v1933, %v1945
          %v1947 = vpop.f32.mrf.mxu0
          %1948 = vdwg.mxu0
          %1949 = vmatpush.bf16.msra.mxu0 %v749
          %1950 = vmatpush.bf16.msra.mxu0 %v748
          %1951 = vmatpush.bf16.msra.mxu0 %v747
          %1952 = vmatpush.bf16.msra.mxu0 %v746
          %1953 = vmatpush.bf16.msra.mxu0 %v745
          %1954 = vmatpush.bf16.msra.mxu0 %v744
          %1955 = vmatpush.bf16.msra.mxu0 %v743
          %1956 = vmatpush.bf16.msra.mxu0 %v742
          %1957 = vmatmul.bf16.gmra.mxu0 %v1877
          %v1958 = vpop.f32.mrf.mxu0
          %v1959 = vadd.f32 %v1946, %v1958
          %v1960 = vpop.f32.mrf.mxu0
          %1961 = vdwg.mxu0
          %v1962 = vmul.f32 %v1959, %v877
          %v1963 = vadd.f32 %v1962, %v881
          %v1964 = vmax.f32 %v1963, 0.0
          %v1965 = vpack.c.bf16 %v1964, %v1964
          %1966 = vst [vmem:[#allocation2 + $0x28] sm:$0xf] %v1965
          %s1967 = scalar_lea.vmem %s0, 264
          %v1968 = vld [vmem:[%s1967] sm:$0xff]
          %v1969 = vld [vmem:[%s1967 + $0x8] sm:$0xff]
          %v1970 = vld [vmem:[%s1967 + $0x10] sm:$0xff]
          %v1974 = vunpack.c.l.b16 %v1968
          %v1975 = vunpack.c.h.b16 %v1968
          %v1976 = vunpack.c.l.b16 %v1969
          %v1977 = vunpack.c.h.b16 %v1969
          %v1978 = vunpack.c.l.b16 %v1970
          %v1979 = vunpack.c.h.b16 %v1970
          %v1980 = vpack.c.b16 %v1974, %v1974
          %v1981 = vpack.c.b16 %v1975, %v1975
          %v1982 = vpack.c.b16 %v1976, %v1976
          %v1983 = vpack.c.b16 %v1977, %v1977
          %v1984 = vpack.c.b16 %v1978, %v1978
          %v1985 = vpack.c.b16 %v1979, %v1979
          %1992 = vmatpush.bf16.msra.mxu0 %v709
          %1993 = vmatpush.bf16.msra.mxu0 %v708
          %1994 = vmatpush.bf16.msra.mxu0 %v707
          %1995 = vmatpush.bf16.msra.mxu0 %v706
          %1996 = vmatpush.bf16.msra.mxu0 %v705
          %1997 = vmatpush.bf16.msra.mxu0 %v704
          %1998 = vmatpush.bf16.msra.mxu0 %v703
          %1999 = vmatpush.bf16.msra.mxu0 %v702
          %2000 = vmatmul.bf16.gmra.mxu0 %v1980
          %v2001 = vpop.f32.mrf.mxu0
          %v2002 = vadd.f32 0.0, %v2001
          %v2003 = vpop.f32.mrf.mxu0
          %2004 = vdwg.mxu0
          %2005 = vmatpush.bf16.msra.mxu0 %v717
          %2006 = vmatpush.bf16.msra.mxu0 %v716
          %2007 = vmatpush.bf16.msra.mxu0 %v715
          %2008 = vmatpush.bf16.msra.mxu0 %v714
          %2009 = vmatpush.bf16.msra.mxu0 %v713
          %2010 = vmatpush.bf16.msra.mxu0 %v712
          %2011 = vmatpush.bf16.msra.mxu0 %v711
          %2012 = vmatpush.bf16.msra.mxu0 %v710
          %2013 = vmatmul.bf16.gmra.mxu0 %v1981
          %v2014 = vpop.f32.mrf.mxu0
          %v2015 = vadd.f32 %v2002, %v2014
          %v2016 = vpop.f32.mrf.mxu0
          %2017 = vdwg.mxu0
          %2018 = vmatpush.bf16.msra.mxu0 %v725
          %2019 = vmatpush.bf16.msra.mxu0 %v724
          %2020 = vmatpush.bf16.msra.mxu0 %v723
          %2021 = vmatpush.bf16.msra.mxu0 %v722
          %2022 = vmatpush.bf16.msra.mxu0 %v721
          %2023 = vmatpush.bf16.msra.mxu0 %v720
          %2024 = vmatpush.bf16.msra.mxu0 %v719
          %2025 = vmatpush.bf16.msra.mxu0 %v718
          %2026 = vmatmul.bf16.gmra.mxu0 %v1982
          %v2027 = vpop.f32.mrf.mxu0
          %v2028 = vadd.f32 %v2015, %v2027
          %v2029 = vpop.f32.mrf.mxu0
          %2030 = vdwg.mxu0
          %2031 = vmatpush.bf16.msra.mxu0 %v733
          %2032 = vmatpush.bf16.msra.mxu0 %v732
          %2033 = vmatpush.bf16.msra.mxu0 %v731
          %2034 = vmatpush.bf16.msra.mxu0 %v730
          %2035 = vmatpush.bf16.msra.mxu0 %v729
          %2036 = vmatpush.bf16.msra.mxu0 %v728
          %2037 = vmatpush.bf16.msra.mxu0 %v727
          %2038 = vmatpush.bf16.msra.mxu0 %v726
          %2039 = vmatmul.bf16.gmra.mxu0 %v1983
          %v2040 = vpop.f32.mrf.mxu0
          %v2041 = vadd.f32 %v2028, %v2040
          %v2042 = vpop.f32.mrf.mxu0
          %2043 = vdwg.mxu0
          %2044 = vmatpush.bf16.msra.mxu0 %v741
          %2045 = vmatpush.bf16.msra.mxu0 %v740
          %2046 = vmatpush.bf16.msra.mxu0 %v739
          %2047 = vmatpush.bf16.msra.mxu0 %v738
          %2048 = vmatpush.bf16.msra.mxu0 %v737
          %2049 = vmatpush.bf16.msra.mxu0 %v736
          %2050 = vmatpush.bf16.msra.mxu0 %v735
          %2051 = vmatpush.bf16.msra.mxu0 %v734
          %2052 = vmatmul.bf16.gmra.mxu0 %v1984
          %v2053 = vpop.f32.mrf.mxu0
          %v2054 = vadd.f32 %v2041, %v2053
          %v2055 = vpop.f32.mrf.mxu0
          %2056 = vdwg.mxu0
          %2057 = vmatpush.bf16.msra.mxu0 %v749
          %2058 = vmatpush.bf16.msra.mxu0 %v748
          %2059 = vmatpush.bf16.msra.mxu0 %v747
          %2060 = vmatpush.bf16.msra.mxu0 %v746
          %2061 = vmatpush.bf16.msra.mxu0 %v745
          %2062 = vmatpush.bf16.msra.mxu0 %v744
          %2063 = vmatpush.bf16.msra.mxu0 %v743
          %2064 = vmatpush.bf16.msra.mxu0 %v742
          %2065 = vmatmul.bf16.gmra.mxu0 %v1985
          %v2066 = vpop.f32.mrf.mxu0
          %v2067 = vadd.f32 %v2054, %v2066
          %v2068 = vpop.f32.mrf.mxu0
          %2069 = vdwg.mxu0
          %v2070 = vmul.f32 %v2067, %v877
          %v2071 = vadd.f32 %v2070, %v881
          %v2072 = vmax.f32 %v2071, 0.0
          %v2073 = vpack.c.bf16 %v2072, %v2072
          %2074 = vst [vmem:[#allocation2 + $0x2c] sm:$0xf] %v2073
          %s2075 = scalar_lea.vmem %s0, 288
          %v2076 = vld [vmem:[%s2075] sm:$0xff]
          %v2077 = vld [vmem:[%s2075 + $0x8] sm:$0xff]
          %v2078 = vld [vmem:[%s2075 + $0x10] sm:$0xff]
          %v2082 = vunpack.c.l.b16 %v2076
          %v2083 = vunpack.c.h.b16 %v2076
          %v2084 = vunpack.c.l.b16 %v2077
          %v2085 = vunpack.c.h.b16 %v2077
          %v2086 = vunpack.c.l.b16 %v2078
          %v2087 = vunpack.c.h.b16 %v2078
          %v2088 = vpack.c.b16 %v2082, %v2082
          %v2089 = vpack.c.b16 %v2083, %v2083
          %v2090 = vpack.c.b16 %v2084, %v2084
          %v2091 = vpack.c.b16 %v2085, %v2085
          %v2092 = vpack.c.b16 %v2086, %v2086
          %v2093 = vpack.c.b16 %v2087, %v2087
          %2100 = vmatpush.bf16.msra.mxu0 %v709
          %2101 = vmatpush.bf16.msra.mxu0 %v708
          %2102 = vmatpush.bf16.msra.mxu0 %v707
          %2103 = vmatpush.bf16.msra.mxu0 %v706
          %2104 = vmatpush.bf16.msra.mxu0 %v705
          %2105 = vmatpush.bf16.msra.mxu0 %v704
          %2106 = vmatpush.bf16.msra.mxu0 %v703
          %2107 = vmatpush.bf16.msra.mxu0 %v702
          %2108 = vmatmul.bf16.gmra.mxu0 %v2088
          %v2109 = vpop.f32.mrf.mxu0
          %v2110 = vadd.f32 0.0, %v2109
          %v2111 = vpop.f32.mrf.mxu0
          %2112 = vdwg.mxu0
          %2113 = vmatpush.bf16.msra.mxu0 %v717
          %2114 = vmatpush.bf16.msra.mxu0 %v716
          %2115 = vmatpush.bf16.msra.mxu0 %v715
          %2116 = vmatpush.bf16.msra.mxu0 %v714
          %2117 = vmatpush.bf16.msra.mxu0 %v713
          %2118 = vmatpush.bf16.msra.mxu0 %v712
          %2119 = vmatpush.bf16.msra.mxu0 %v711
          %2120 = vmatpush.bf16.msra.mxu0 %v710
          %2121 = vmatmul.bf16.gmra.mxu0 %v2089
          %v2122 = vpop.f32.mrf.mxu0
          %v2123 = vadd.f32 %v2110, %v2122
          %v2124 = vpop.f32.mrf.mxu0
          %2125 = vdwg.mxu0
          %2126 = vmatpush.bf16.msra.mxu0 %v725
          %2127 = vmatpush.bf16.msra.mxu0 %v724
          %2128 = vmatpush.bf16.msra.mxu0 %v723
          %2129 = vmatpush.bf16.msra.mxu0 %v722
          %2130 = vmatpush.bf16.msra.mxu0 %v721
          %2131 = vmatpush.bf16.msra.mxu0 %v720
          %2132 = vmatpush.bf16.msra.mxu0 %v719
          %2133 = vmatpush.bf16.msra.mxu0 %v718
          %2134 = vmatmul.bf16.gmra.mxu0 %v2090
          %v2135 = vpop.f32.mrf.mxu0
          %v2136 = vadd.f32 %v2123, %v2135
          %v2137 = vpop.f32.mrf.mxu0
          %2138 = vdwg.mxu0
          %2139 = vmatpush.bf16.msra.mxu0 %v733
          %2140 = vmatpush.bf16.msra.mxu0 %v732
          %2141 = vmatpush.bf16.msra.mxu0 %v731
          %2142 = vmatpush.bf16.msra.mxu0 %v730
          %2143 = vmatpush.bf16.msra.mxu0 %v729
          %2144 = vmatpush.bf16.msra.mxu0 %v728
          %2145 = vmatpush.bf16.msra.mxu0 %v727
          %2146 = vmatpush.bf16.msra.mxu0 %v726
          %2147 = vmatmul.bf16.gmra.mxu0 %v2091
          %v2148 = vpop.f32.mrf.mxu0
          %v2149 = vadd.f32 %v2136, %v2148
          %v2150 = vpop.f32.mrf.mxu0
          %2151 = vdwg.mxu0
          %2152 = vmatpush.bf16.msra.mxu0 %v741
          %2153 = vmatpush.bf16.msra.mxu0 %v740
          %2154 = vmatpush.bf16.msra.mxu0 %v739
          %2155 = vmatpush.bf16.msra.mxu0 %v738
          %2156 = vmatpush.bf16.msra.mxu0 %v737
          %2157 = vmatpush.bf16.msra.mxu0 %v736
          %2158 = vmatpush.bf16.msra.mxu0 %v735
          %2159 = vmatpush.bf16.msra.mxu0 %v734
          %2160 = vmatmul.bf16.gmra.mxu0 %v2092
          %v2161 = vpop.f32.mrf.mxu0
          %v2162 = vadd.f32 %v2149, %v2161
          %v2163 = vpop.f32.mrf.mxu0
          %2164 = vdwg.mxu0
          %2165 = vmatpush.bf16.msra.mxu0 %v749
          %2166 = vmatpush.bf16.msra.mxu0 %v748
          %2167 = vmatpush.bf16.msra.mxu0 %v747
          %2168 = vmatpush.bf16.msra.mxu0 %v746
          %2169 = vmatpush.bf16.msra.mxu0 %v745
          %2170 = vmatpush.bf16.msra.mxu0 %v744
          %2171 = vmatpush.bf16.msra.mxu0 %v743
          %2172 = vmatpush.bf16.msra.mxu0 %v742
          %2173 = vmatmul.bf16.gmra.mxu0 %v2093
          %v2174 = vpop.f32.mrf.mxu0
          %v2175 = vadd.f32 %v2162, %v2174
          %v2176 = vpop.f32.mrf.mxu0
          %2177 = vdwg.mxu0
          %v2178 = vmul.f32 %v2175, %v877
          %v2179 = vadd.f32 %v2178, %v881
          %v2180 = vmax.f32 %v2179, 0.0
          %v2181 = vpack.c.bf16 %v2180, %v2180
          %2182 = vst [vmem:[#allocation2 + $0x30] sm:$0xf] %v2181
          %s2183 = scalar_lea.vmem %s0, 312
          %v2184 = vld [vmem:[%s2183] sm:$0xff]
          %v2185 = vld [vmem:[%s2183 + $0x8] sm:$0xff]
          %v2186 = vld [vmem:[%s2183 + $0x10] sm:$0xff]
          %v2190 = vunpack.c.l.b16 %v2184
          %v2191 = vunpack.c.h.b16 %v2184
          %v2192 = vunpack.c.l.b16 %v2185
          %v2193 = vunpack.c.h.b16 %v2185
          %v2194 = vunpack.c.l.b16 %v2186
          %v2195 = vunpack.c.h.b16 %v2186
          %v2196 = vpack.c.b16 %v2190, %v2190
          %v2197 = vpack.c.b16 %v2191, %v2191
          %v2198 = vpack.c.b16 %v2192, %v2192
          %v2199 = vpack.c.b16 %v2193, %v2193
          %v2200 = vpack.c.b16 %v2194, %v2194
          %v2201 = vpack.c.b16 %v2195, %v2195
          %2208 = vmatpush.bf16.msra.mxu0 %v709
          %2209 = vmatpush.bf16.msra.mxu0 %v708
          %2210 = vmatpush.bf16.msra.mxu0 %v707
          %2211 = vmatpush.bf16.msra.mxu0 %v706
          %2212 = vmatpush.bf16.msra.mxu0 %v705
          %2213 = vmatpush.bf16.msra.mxu0 %v704
          %2214 = vmatpush.bf16.msra.mxu0 %v703
          %2215 = vmatpush.bf16.msra.mxu0 %v702
          %2216 = vmatmul.bf16.gmra.mxu0 %v2196
          %v2217 = vpop.f32.mrf.mxu0
          %v2218 = vadd.f32 0.0, %v2217
          %v2219 = vpop.f32.mrf.mxu0
          %2220 = vdwg.mxu0
          %2221 = vmatpush.bf16.msra.mxu0 %v717
          %2222 = vmatpush.bf16.msra.mxu0 %v716
          %2223 = vmatpush.bf16.msra.mxu0 %v715
          %2224 = vmatpush.bf16.msra.mxu0 %v714
          %2225 = vmatpush.bf16.msra.mxu0 %v713
          %2226 = vmatpush.bf16.msra.mxu0 %v712
          %2227 = vmatpush.bf16.msra.mxu0 %v711
          %2228 = vmatpush.bf16.msra.mxu0 %v710
          %2229 = vmatmul.bf16.gmra.mxu0 %v2197
          %v2230 = vpop.f32.mrf.mxu0
          %v2231 = vadd.f32 %v2218, %v2230
          %v2232 = vpop.f32.mrf.mxu0
          %2233 = vdwg.mxu0
          %2234 = vmatpush.bf16.msra.mxu0 %v725
          %2235 = vmatpush.bf16.msra.mxu0 %v724
          %2236 = vmatpush.bf16.msra.mxu0 %v723
          %2237 = vmatpush.bf16.msra.mxu0 %v722
          %2238 = vmatpush.bf16.msra.mxu0 %v721
          %2239 = vmatpush.bf16.msra.mxu0 %v720
          %2240 = vmatpush.bf16.msra.mxu0 %v719
          %2241 = vmatpush.bf16.msra.mxu0 %v718
          %2242 = vmatmul.bf16.gmra.mxu0 %v2198
          %v2243 = vpop.f32.mrf.mxu0
          %v2244 = vadd.f32 %v2231, %v2243
          %v2245 = vpop.f32.mrf.mxu0
          %2246 = vdwg.mxu0
          %2247 = vmatpush.bf16.msra.mxu0 %v733
          %2248 = vmatpush.bf16.msra.mxu0 %v732
          %2249 = vmatpush.bf16.msra.mxu0 %v731
          %2250 = vmatpush.bf16.msra.mxu0 %v730
          %2251 = vmatpush.bf16.msra.mxu0 %v729
          %2252 = vmatpush.bf16.msra.mxu0 %v728
          %2253 = vmatpush.bf16.msra.mxu0 %v727
          %2254 = vmatpush.bf16.msra.mxu0 %v726
          %2255 = vmatmul.bf16.gmra.mxu0 %v2199
          %v2256 = vpop.f32.mrf.mxu0
          %v2257 = vadd.f32 %v2244, %v2256
          %v2258 = vpop.f32.mrf.mxu0
          %2259 = vdwg.mxu0
          %2260 = vmatpush.bf16.msra.mxu0 %v741
          %2261 = vmatpush.bf16.msra.mxu0 %v740
          %2262 = vmatpush.bf16.msra.mxu0 %v739
          %2263 = vmatpush.bf16.msra.mxu0 %v738
          %2264 = vmatpush.bf16.msra.mxu0 %v737
          %2265 = vmatpush.bf16.msra.mxu0 %v736
          %2266 = vmatpush.bf16.msra.mxu0 %v735
          %2267 = vmatpush.bf16.msra.mxu0 %v734
          %2268 = vmatmul.bf16.gmra.mxu0 %v2200
          %v2269 = vpop.f32.mrf.mxu0
          %v2270 = vadd.f32 %v2257, %v2269
          %v2271 = vpop.f32.mrf.mxu0
          %2272 = vdwg.mxu0
          %2273 = vmatpush.bf16.msra.mxu0 %v749
          %2274 = vmatpush.bf16.msra.mxu0 %v748
          %2275 = vmatpush.bf16.msra.mxu0 %v747
          %2276 = vmatpush.bf16.msra.mxu0 %v746
          %2277 = vmatpush.bf16.msra.mxu0 %v745
          %2278 = vmatpush.bf16.msra.mxu0 %v744
          %2279 = vmatpush.bf16.msra.mxu0 %v743
          %2280 = vmatpush.bf16.msra.mxu0 %v742
          %2281 = vmatmul.bf16.gmra.mxu0 %v2201
          %v2282 = vpop.f32.mrf.mxu0
          %v2283 = vadd.f32 %v2270, %v2282
          %v2284 = vpop.f32.mrf.mxu0
          %2285 = vdwg.mxu0
          %v2286 = vmul.f32 %v2283, %v877
          %v2287 = vadd.f32 %v2286, %v881
          %v2288 = vmax.f32 %v2287, 0.0
          %v2289 = vpack.c.bf16 %v2288, %v2288
          %2290 = vst [vmem:[#allocation2 + $0x34] sm:$0xf] %v2289
          %s2291 = scalar_lea.vmem %s0, 336
          %v2292 = vld [vmem:[%s2291] sm:$0xff]
          %v2293 = vld [vmem:[%s2291 + $0x8] sm:$0xff]
          %v2294 = vld [vmem:[%s2291 + $0x10] sm:$0xff]
          %v2298 = vunpack.c.l.b16 %v2292
          %v2299 = vunpack.c.h.b16 %v2292
          %v2300 = vunpack.c.l.b16 %v2293
          %v2301 = vunpack.c.h.b16 %v2293
          %v2302 = vunpack.c.l.b16 %v2294
          %v2303 = vunpack.c.h.b16 %v2294
          %v2304 = vpack.c.b16 %v2298, %v2298
          %v2305 = vpack.c.b16 %v2299, %v2299
          %v2306 = vpack.c.b16 %v2300, %v2300
          %v2307 = vpack.c.b16 %v2301, %v2301
          %v2308 = vpack.c.b16 %v2302, %v2302
          %v2309 = vpack.c.b16 %v2303, %v2303
          %2316 = vmatpush.bf16.msra.mxu0 %v709
          %2317 = vmatpush.bf16.msra.mxu0 %v708
          %2318 = vmatpush.bf16.msra.mxu0 %v707
          %2319 = vmatpush.bf16.msra.mxu0 %v706
          %2320 = vmatpush.bf16.msra.mxu0 %v705
          %2321 = vmatpush.bf16.msra.mxu0 %v704
          %2322 = vmatpush.bf16.msra.mxu0 %v703
          %2323 = vmatpush.bf16.msra.mxu0 %v702
          %2324 = vmatmul.bf16.gmra.mxu0 %v2304
          %v2325 = vpop.f32.mrf.mxu0
          %v2326 = vadd.f32 0.0, %v2325
          %v2327 = vpop.f32.mrf.mxu0
          %2328 = vdwg.mxu0
          %2329 = vmatpush.bf16.msra.mxu0 %v717
          %2330 = vmatpush.bf16.msra.mxu0 %v716
          %2331 = vmatpush.bf16.msra.mxu0 %v715
          %2332 = vmatpush.bf16.msra.mxu0 %v714
          %2333 = vmatpush.bf16.msra.mxu0 %v713
          %2334 = vmatpush.bf16.msra.mxu0 %v712
          %2335 = vmatpush.bf16.msra.mxu0 %v711
          %2336 = vmatpush.bf16.msra.mxu0 %v710
          %2337 = vmatmul.bf16.gmra.mxu0 %v2305
          %v2338 = vpop.f32.mrf.mxu0
          %v2339 = vadd.f32 %v2326, %v2338
          %v2340 = vpop.f32.mrf.mxu0
          %2341 = vdwg.mxu0
          %2342 = vmatpush.bf16.msra.mxu0 %v725
          %2343 = vmatpush.bf16.msra.mxu0 %v724
          %2344 = vmatpush.bf16.msra.mxu0 %v723
          %2345 = vmatpush.bf16.msra.mxu0 %v722
          %2346 = vmatpush.bf16.msra.mxu0 %v721
          %2347 = vmatpush.bf16.msra.mxu0 %v720
          %2348 = vmatpush.bf16.msra.mxu0 %v719
          %2349 = vmatpush.bf16.msra.mxu0 %v718
          %2350 = vmatmul.bf16.gmra.mxu0 %v2306
          %v2351 = vpop.f32.mrf.mxu0
          %v2352 = vadd.f32 %v2339, %v2351
          %v2353 = vpop.f32.mrf.mxu0
          %2354 = vdwg.mxu0
          %2355 = vmatpush.bf16.msra.mxu0 %v733
          %2356 = vmatpush.bf16.msra.mxu0 %v732
          %2357 = vmatpush.bf16.msra.mxu0 %v731
          %2358 = vmatpush.bf16.msra.mxu0 %v730
          %2359 = vmatpush.bf16.msra.mxu0 %v729
          %2360 = vmatpush.bf16.msra.mxu0 %v728
          %2361 = vmatpush.bf16.msra.mxu0 %v727
          %2362 = vmatpush.bf16.msra.mxu0 %v726
          %2363 = vmatmul.bf16.gmra.mxu0 %v2307
          %v2364 = vpop.f32.mrf.mxu0
          %v2365 = vadd.f32 %v2352, %v2364
          %v2366 = vpop.f32.mrf.mxu0
          %2367 = vdwg.mxu0
          %2368 = vmatpush.bf16.msra.mxu0 %v741
          %2369 = vmatpush.bf16.msra.mxu0 %v740
          %2370 = vmatpush.bf16.msra.mxu0 %v739
          %2371 = vmatpush.bf16.msra.mxu0 %v738
          %2372 = vmatpush.bf16.msra.mxu0 %v737
          %2373 = vmatpush.bf16.msra.mxu0 %v736
          %2374 = vmatpush.bf16.msra.mxu0 %v735
          %2375 = vmatpush.bf16.msra.mxu0 %v734
          %2376 = vmatmul.bf16.gmra.mxu0 %v2308
          %v2377 = vpop.f32.mrf.mxu0
          %v2378 = vadd.f32 %v2365, %v2377
          %v2379 = vpop.f32.mrf.mxu0
          %2380 = vdwg.mxu0
          %2381 = vmatpush.bf16.msra.mxu0 %v749
          %2382 = vmatpush.bf16.msra.mxu0 %v748
          %2383 = vmatpush.bf16.msra.mxu0 %v747
          %2384 = vmatpush.bf16.msra.mxu0 %v746
          %2385 = vmatpush.bf16.msra.mxu0 %v745
          %2386 = vmatpush.bf16.msra.mxu0 %v744
          %2387 = vmatpush.bf16.msra.mxu0 %v743
          %2388 = vmatpush.bf16.msra.mxu0 %v742
          %2389 = vmatmul.bf16.gmra.mxu0 %v2309
          %v2390 = vpop.f32.mrf.mxu0
          %v2391 = vadd.f32 %v2378, %v2390
          %v2392 = vpop.f32.mrf.mxu0
          %2393 = vdwg.mxu0
          %v2394 = vmul.f32 %v2391, %v877
          %v2395 = vadd.f32 %v2394, %v881
          %v2396 = vmax.f32 %v2395, 0.0
          %v2397 = vpack.c.bf16 %v2396, %v2396
          %2398 = vst [vmem:[#allocation2 + $0x38] sm:$0xf] %v2397
          %s2399 = scalar_lea.vmem %s0, 360
          %v2400 = vld [vmem:[%s2399] sm:$0xff]
          %v2401 = vld [vmem:[%s2399 + $0x8] sm:$0xff]
          %v2402 = vld [vmem:[%s2399 + $0x10] sm:$0xff]
          %v2406 = vunpack.c.l.b16 %v2400
          %v2407 = vunpack.c.h.b16 %v2400
          %v2408 = vunpack.c.l.b16 %v2401
          %v2409 = vunpack.c.h.b16 %v2401
          %v2410 = vunpack.c.l.b16 %v2402
          %v2411 = vunpack.c.h.b16 %v2402
          %v2412 = vpack.c.b16 %v2406, %v2406
          %v2413 = vpack.c.b16 %v2407, %v2407
          %v2414 = vpack.c.b16 %v2408, %v2408
          %v2415 = vpack.c.b16 %v2409, %v2409
          %v2416 = vpack.c.b16 %v2410, %v2410
          %v2417 = vpack.c.b16 %v2411, %v2411
          %2424 = vmatpush.bf16.msra.mxu0 %v709
          %2425 = vmatpush.bf16.msra.mxu0 %v708
          %2426 = vmatpush.bf16.msra.mxu0 %v707
          %2427 = vmatpush.bf16.msra.mxu0 %v706
          %2428 = vmatpush.bf16.msra.mxu0 %v705
          %2429 = vmatpush.bf16.msra.mxu0 %v704
          %2430 = vmatpush.bf16.msra.mxu0 %v703
          %2431 = vmatpush.bf16.msra.mxu0 %v702
          %2432 = vmatmul.bf16.gmra.mxu0 %v2412
          %v2433 = vpop.f32.mrf.mxu0
          %v2434 = vadd.f32 0.0, %v2433
          %v2435 = vpop.f32.mrf.mxu0
          %2436 = vdwg.mxu0
          %2437 = vmatpush.bf16.msra.mxu0 %v717
          %2438 = vmatpush.bf16.msra.mxu0 %v716
          %2439 = vmatpush.bf16.msra.mxu0 %v715
          %2440 = vmatpush.bf16.msra.mxu0 %v714
          %2441 = vmatpush.bf16.msra.mxu0 %v713
          %2442 = vmatpush.bf16.msra.mxu0 %v712
          %2443 = vmatpush.bf16.msra.mxu0 %v711
          %2444 = vmatpush.bf16.msra.mxu0 %v710
          %2445 = vmatmul.bf16.gmra.mxu0 %v2413
          %v2446 = vpop.f32.mrf.mxu0
          %v2447 = vadd.f32 %v2434, %v2446
          %v2448 = vpop.f32.mrf.mxu0
          %2449 = vdwg.mxu0
          %2450 = vmatpush.bf16.msra.mxu0 %v725
          %2451 = vmatpush.bf16.msra.mxu0 %v724
          %2452 = vmatpush.bf16.msra.mxu0 %v723
          %2453 = vmatpush.bf16.msra.mxu0 %v722
          %2454 = vmatpush.bf16.msra.mxu0 %v721
          %2455 = vmatpush.bf16.msra.mxu0 %v720
          %2456 = vmatpush.bf16.msra.mxu0 %v719
          %2457 = vmatpush.bf16.msra.mxu0 %v718
          %2458 = vmatmul.bf16.gmra.mxu0 %v2414
          %v2459 = vpop.f32.mrf.mxu0
          %v2460 = vadd.f32 %v2447, %v2459
          %v2461 = vpop.f32.mrf.mxu0
          %2462 = vdwg.mxu0
          %2463 = vmatpush.bf16.msra.mxu0 %v733
          %2464 = vmatpush.bf16.msra.mxu0 %v732
          %2465 = vmatpush.bf16.msra.mxu0 %v731
          %2466 = vmatpush.bf16.msra.mxu0 %v730
          %2467 = vmatpush.bf16.msra.mxu0 %v729
          %2468 = vmatpush.bf16.msra.mxu0 %v728
          %2469 = vmatpush.bf16.msra.mxu0 %v727
          %2470 = vmatpush.bf16.msra.mxu0 %v726
          %2471 = vmatmul.bf16.gmra.mxu0 %v2415
          %v2472 = vpop.f32.mrf.mxu0
          %v2473 = vadd.f32 %v2460, %v2472
          %v2474 = vpop.f32.mrf.mxu0
          %2475 = vdwg.mxu0
          %2476 = vmatpush.bf16.msra.mxu0 %v741
          %2477 = vmatpush.bf16.msra.mxu0 %v740
          %2478 = vmatpush.bf16.msra.mxu0 %v739
          %2479 = vmatpush.bf16.msra.mxu0 %v738
          %2480 = vmatpush.bf16.msra.mxu0 %v737
          %2481 = vmatpush.bf16.msra.mxu0 %v736
          %2482 = vmatpush.bf16.msra.mxu0 %v735
          %2483 = vmatpush.bf16.msra.mxu0 %v734
          %2484 = vmatmul.bf16.gmra.mxu0 %v2416
          %v2485 = vpop.f32.mrf.mxu0
          %v2486 = vadd.f32 %v2473, %v2485
          %v2487 = vpop.f32.mrf.mxu0
          %2488 = vdwg.mxu0
          %2489 = vmatpush.bf16.msra.mxu0 %v749
          %2490 = vmatpush.bf16.msra.mxu0 %v748
          %2491 = vmatpush.bf16.msra.mxu0 %v747
          %2492 = vmatpush.bf16.msra.mxu0 %v746
          %2493 = vmatpush.bf16.msra.mxu0 %v745
          %2494 = vmatpush.bf16.msra.mxu0 %v744
          %2495 = vmatpush.bf16.msra.mxu0 %v743
          %2496 = vmatpush.bf16.msra.mxu0 %v742
          %2497 = vmatmul.bf16.gmra.mxu0 %v2417
          %v2498 = vpop.f32.mrf.mxu0
          %v2499 = vadd.f32 %v2486, %v2498
          %v2500 = vpop.f32.mrf.mxu0
          %2501 = vdwg.mxu0
          %v2502 = vmul.f32 %v2499, %v877
          %v2503 = vadd.f32 %v2502, %v881
          %v2504 = vmax.f32 %v2503, 0.0
          %v2505 = vpack.c.bf16 %v2504, %v2504
          %2506 = vst [vmem:[#allocation2 + $0x3c] sm:$0xf] %v2505
          %s2507 = scalar_lea.vmem %s0, 384
          %v2508 = vld [vmem:[%s2507] sm:$0xff]
          %v2509 = vld [vmem:[%s2507 + $0x8] sm:$0xff]
          %v2510 = vld [vmem:[%s2507 + $0x10] sm:$0xff]
          %v2514 = vunpack.c.l.b16 %v2508
          %v2515 = vunpack.c.h.b16 %v2508
          %v2516 = vunpack.c.l.b16 %v2509
          %v2517 = vunpack.c.h.b16 %v2509
          %v2518 = vunpack.c.l.b16 %v2510
          %v2519 = vunpack.c.h.b16 %v2510
          %v2520 = vpack.c.b16 %v2514, %v2514
          %v2521 = vpack.c.b16 %v2515, %v2515
          %v2522 = vpack.c.b16 %v2516, %v2516
          %v2523 = vpack.c.b16 %v2517, %v2517
          %v2524 = vpack.c.b16 %v2518, %v2518
          %v2525 = vpack.c.b16 %v2519, %v2519
          %2532 = vmatpush.bf16.msra.mxu0 %v709
          %2533 = vmatpush.bf16.msra.mxu0 %v708
          %2534 = vmatpush.bf16.msra.mxu0 %v707
          %2535 = vmatpush.bf16.msra.mxu0 %v706
          %2536 = vmatpush.bf16.msra.mxu0 %v705
          %2537 = vmatpush.bf16.msra.mxu0 %v704
          %2538 = vmatpush.bf16.msra.mxu0 %v703
          %2539 = vmatpush.bf16.msra.mxu0 %v702
          %2540 = vmatmul.bf16.gmra.mxu0 %v2520
          %v2541 = vpop.f32.mrf.mxu0
          %v2542 = vadd.f32 0.0, %v2541
          %v2543 = vpop.f32.mrf.mxu0
          %2544 = vdwg.mxu0
          %2545 = vmatpush.bf16.msra.mxu0 %v717
          %2546 = vmatpush.bf16.msra.mxu0 %v716
          %2547 = vmatpush.bf16.msra.mxu0 %v715
          %2548 = vmatpush.bf16.msra.mxu0 %v714
          %2549 = vmatpush.bf16.msra.mxu0 %v713
          %2550 = vmatpush.bf16.msra.mxu0 %v712
          %2551 = vmatpush.bf16.msra.mxu0 %v711
          %2552 = vmatpush.bf16.msra.mxu0 %v710
          %2553 = vmatmul.bf16.gmra.mxu0 %v2521
          %v2554 = vpop.f32.mrf.mxu0
          %v2555 = vadd.f32 %v2542, %v2554
          %v2556 = vpop.f32.mrf.mxu0
          %2557 = vdwg.mxu0
          %2558 = vmatpush.bf16.msra.mxu0 %v725
          %2559 = vmatpush.bf16.msra.mxu0 %v724
          %2560 = vmatpush.bf16.msra.mxu0 %v723
          %2561 = vmatpush.bf16.msra.mxu0 %v722
          %2562 = vmatpush.bf16.msra.mxu0 %v721
          %2563 = vmatpush.bf16.msra.mxu0 %v720
          %2564 = vmatpush.bf16.msra.mxu0 %v719
          %2565 = vmatpush.bf16.msra.mxu0 %v718
          %2566 = vmatmul.bf16.gmra.mxu0 %v2522
          %v2567 = vpop.f32.mrf.mxu0
          %v2568 = vadd.f32 %v2555, %v2567
          %v2569 = vpop.f32.mrf.mxu0
          %2570 = vdwg.mxu0
          %2571 = vmatpush.bf16.msra.mxu0 %v733
          %2572 = vmatpush.bf16.msra.mxu0 %v732
          %2573 = vmatpush.bf16.msra.mxu0 %v731
          %2574 = vmatpush.bf16.msra.mxu0 %v730
          %2575 = vmatpush.bf16.msra.mxu0 %v729
          %2576 = vmatpush.bf16.msra.mxu0 %v728
          %2577 = vmatpush.bf16.msra.mxu0 %v727
          %2578 = vmatpush.bf16.msra.mxu0 %v726
          %2579 = vmatmul.bf16.gmra.mxu0 %v2523
          %v2580 = vpop.f32.mrf.mxu0
          %v2581 = vadd.f32 %v2568, %v2580
          %v2582 = vpop.f32.mrf.mxu0
          %2583 = vdwg.mxu0
          %2584 = vmatpush.bf16.msra.mxu0 %v741
          %2585 = vmatpush.bf16.msra.mxu0 %v740
          %2586 = vmatpush.bf16.msra.mxu0 %v739
          %2587 = vmatpush.bf16.msra.mxu0 %v738
          %2588 = vmatpush.bf16.msra.mxu0 %v737
          %2589 = vmatpush.bf16.msra.mxu0 %v736
          %2590 = vmatpush.bf16.msra.mxu0 %v735
          %2591 = vmatpush.bf16.msra.mxu0 %v734
          %2592 = vmatmul.bf16.gmra.mxu0 %v2524
          %v2593 = vpop.f32.mrf.mxu0
          %v2594 = vadd.f32 %v2581, %v2593
          %v2595 = vpop.f32.mrf.mxu0
          %2596 = vdwg.mxu0
          %2597 = vmatpush.bf16.msra.mxu0 %v749
          %2598 = vmatpush.bf16.msra.mxu0 %v748
          %2599 = vmatpush.bf16.msra.mxu0 %v747
          %2600 = vmatpush.bf16.msra.mxu0 %v746
          %2601 = vmatpush.bf16.msra.mxu0 %v745
          %2602 = vmatpush.bf16.msra.mxu0 %v744
          %2603 = vmatpush.bf16.msra.mxu0 %v743
          %2604 = vmatpush.bf16.msra.mxu0 %v742
          %2605 = vmatmul.bf16.gmra.mxu0 %v2525
          %v2606 = vpop.f32.mrf.mxu0
          %v2607 = vadd.f32 %v2594, %v2606
          %v2608 = vpop.f32.mrf.mxu0
          %2609 = vdwg.mxu0
          %v2610 = vmul.f32 %v2607, %v877
          %v2611 = vadd.f32 %v2610, %v881
          %v2612 = vmax.f32 %v2611, 0.0
          %v2613 = vpack.c.bf16 %v2612, %v2612
          %2614 = vst [vmem:[#allocation2 + $0x40] sm:$0xf] %v2613
          %s2615 = scalar_lea.vmem %s0, 408
          %v2616 = vld [vmem:[%s2615] sm:$0xff]
          %v2617 = vld [vmem:[%s2615 + $0x8] sm:$0xff]
          %v2618 = vld [vmem:[%s2615 + $0x10] sm:$0xff]
          %v2622 = vunpack.c.l.b16 %v2616
          %v2623 = vunpack.c.h.b16 %v2616
          %v2624 = vunpack.c.l.b16 %v2617
          %v2625 = vunpack.c.h.b16 %v2617
          %v2626 = vunpack.c.l.b16 %v2618
          %v2627 = vunpack.c.h.b16 %v2618
          %v2628 = vpack.c.b16 %v2622, %v2622
          %v2629 = vpack.c.b16 %v2623, %v2623
          %v2630 = vpack.c.b16 %v2624, %v2624
          %v2631 = vpack.c.b16 %v2625, %v2625
          %v2632 = vpack.c.b16 %v2626, %v2626
          %v2633 = vpack.c.b16 %v2627, %v2627
          %2640 = vmatpush.bf16.msra.mxu0 %v709
          %2641 = vmatpush.bf16.msra.mxu0 %v708
          %2642 = vmatpush.bf16.msra.mxu0 %v707
          %2643 = vmatpush.bf16.msra.mxu0 %v706
          %2644 = vmatpush.bf16.msra.mxu0 %v705
          %2645 = vmatpush.bf16.msra.mxu0 %v704
          %2646 = vmatpush.bf16.msra.mxu0 %v703
          %2647 = vmatpush.bf16.msra.mxu0 %v702
          %2648 = vmatmul.bf16.gmra.mxu0 %v2628
          %v2649 = vpop.f32.mrf.mxu0
          %v2650 = vadd.f32 0.0, %v2649
          %v2651 = vpop.f32.mrf.mxu0
          %2652 = vdwg.mxu0
          %2653 = vmatpush.bf16.msra.mxu0 %v717
          %2654 = vmatpush.bf16.msra.mxu0 %v716
          %2655 = vmatpush.bf16.msra.mxu0 %v715
          %2656 = vmatpush.bf16.msra.mxu0 %v714
          %2657 = vmatpush.bf16.msra.mxu0 %v713
          %2658 = vmatpush.bf16.msra.mxu0 %v712
          %2659 = vmatpush.bf16.msra.mxu0 %v711
          %2660 = vmatpush.bf16.msra.mxu0 %v710
          %2661 = vmatmul.bf16.gmra.mxu0 %v2629
          %v2662 = vpop.f32.mrf.mxu0
          %v2663 = vadd.f32 %v2650, %v2662
          %v2664 = vpop.f32.mrf.mxu0
          %2665 = vdwg.mxu0
          %2666 = vmatpush.bf16.msra.mxu0 %v725
          %2667 = vmatpush.bf16.msra.mxu0 %v724
          %2668 = vmatpush.bf16.msra.mxu0 %v723
          %2669 = vmatpush.bf16.msra.mxu0 %v722
          %2670 = vmatpush.bf16.msra.mxu0 %v721
          %2671 = vmatpush.bf16.msra.mxu0 %v720
          %2672 = vmatpush.bf16.msra.mxu0 %v719
          %2673 = vmatpush.bf16.msra.mxu0 %v718
          %2674 = vmatmul.bf16.gmra.mxu0 %v2630
          %v2675 = vpop.f32.mrf.mxu0
          %v2676 = vadd.f32 %v2663, %v2675
          %v2677 = vpop.f32.mrf.mxu0
          %2678 = vdwg.mxu0
          %2679 = vmatpush.bf16.msra.mxu0 %v733
          %2680 = vmatpush.bf16.msra.mxu0 %v732
          %2681 = vmatpush.bf16.msra.mxu0 %v731
          %2682 = vmatpush.bf16.msra.mxu0 %v730
          %2683 = vmatpush.bf16.msra.mxu0 %v729
          %2684 = vmatpush.bf16.msra.mxu0 %v728
          %2685 = vmatpush.bf16.msra.mxu0 %v727
          %2686 = vmatpush.bf16.msra.mxu0 %v726
          %2687 = vmatmul.bf16.gmra.mxu0 %v2631
          %v2688 = vpop.f32.mrf.mxu0
          %v2689 = vadd.f32 %v2676, %v2688
          %v2690 = vpop.f32.mrf.mxu0
          %2691 = vdwg.mxu0
          %2692 = vmatpush.bf16.msra.mxu0 %v741
          %2693 = vmatpush.bf16.msra.mxu0 %v740
          %2694 = vmatpush.bf16.msra.mxu0 %v739
          %2695 = vmatpush.bf16.msra.mxu0 %v738
          %2696 = vmatpush.bf16.msra.mxu0 %v737
          %2697 = vmatpush.bf16.msra.mxu0 %v736
          %2698 = vmatpush.bf16.msra.mxu0 %v735
          %2699 = vmatpush.bf16.msra.mxu0 %v734
          %2700 = vmatmul.bf16.gmra.mxu0 %v2632
          %v2701 = vpop.f32.mrf.mxu0
          %v2702 = vadd.f32 %v2689, %v2701
          %v2703 = vpop.f32.mrf.mxu0
          %2704 = vdwg.mxu0
          %2705 = vmatpush.bf16.msra.mxu0 %v749
          %2706 = vmatpush.bf16.msra.mxu0 %v748
          %2707 = vmatpush.bf16.msra.mxu0 %v747
          %2708 = vmatpush.bf16.msra.mxu0 %v746
          %2709 = vmatpush.bf16.msra.mxu0 %v745
          %2710 = vmatpush.bf16.msra.mxu0 %v744
          %2711 = vmatpush.bf16.msra.mxu0 %v743
          %2712 = vmatpush.bf16.msra.mxu0 %v742
          %2713 = vmatmul.bf16.gmra.mxu0 %v2633
          %v2714 = vpop.f32.mrf.mxu0
          %v2715 = vadd.f32 %v2702, %v2714
          %v2716 = vpop.f32.mrf.mxu0
          %2717 = vdwg.mxu0
          %v2718 = vmul.f32 %v2715, %v877
          %v2719 = vadd.f32 %v2718, %v881
          %v2720 = vmax.f32 %v2719, 0.0
          %v2721 = vpack.c.bf16 %v2720, %v2720
          %2722 = vst [vmem:[#allocation2 + $0x44] sm:$0xf] %v2721
          %s2723 = scalar_lea.vmem %s0, 432
          %v2724 = vld [vmem:[%s2723] sm:$0xff]
          %v2725 = vld [vmem:[%s2723 + $0x8] sm:$0xff]
          %v2726 = vld [vmem:[%s2723 + $0x10] sm:$0xff]
          %v2730 = vunpack.c.l.b16 %v2724
          %v2731 = vunpack.c.h.b16 %v2724
          %v2732 = vunpack.c.l.b16 %v2725
          %v2733 = vunpack.c.h.b16 %v2725
          %v2734 = vunpack.c.l.b16 %v2726
          %v2735 = vunpack.c.h.b16 %v2726
          %v2736 = vpack.c.b16 %v2730, %v2730
          %v2737 = vpack.c.b16 %v2731, %v2731
          %v2738 = vpack.c.b16 %v2732, %v2732
          %v2739 = vpack.c.b16 %v2733, %v2733
          %v2740 = vpack.c.b16 %v2734, %v2734
          %v2741 = vpack.c.b16 %v2735, %v2735
          %2748 = vmatpush.bf16.msra.mxu0 %v709
          %2749 = vmatpush.bf16.msra.mxu0 %v708
          %2750 = vmatpush.bf16.msra.mxu0 %v707
          %2751 = vmatpush.bf16.msra.mxu0 %v706
          %2752 = vmatpush.bf16.msra.mxu0 %v705
          %2753 = vmatpush.bf16.msra.mxu0 %v704
          %2754 = vmatpush.bf16.msra.mxu0 %v703
          %2755 = vmatpush.bf16.msra.mxu0 %v702
          %2756 = vmatmul.bf16.gmra.mxu0 %v2736
          %v2757 = vpop.f32.mrf.mxu0
          %v2758 = vadd.f32 0.0, %v2757
          %v2759 = vpop.f32.mrf.mxu0
          %2760 = vdwg.mxu0
          %2761 = vmatpush.bf16.msra.mxu0 %v717
          %2762 = vmatpush.bf16.msra.mxu0 %v716
          %2763 = vmatpush.bf16.msra.mxu0 %v715
          %2764 = vmatpush.bf16.msra.mxu0 %v714
          %2765 = vmatpush.bf16.msra.mxu0 %v713
          %2766 = vmatpush.bf16.msra.mxu0 %v712
          %2767 = vmatpush.bf16.msra.mxu0 %v711
          %2768 = vmatpush.bf16.msra.mxu0 %v710
          %2769 = vmatmul.bf16.gmra.mxu0 %v2737
          %v2770 = vpop.f32.mrf.mxu0
          %v2771 = vadd.f32 %v2758, %v2770
          %v2772 = vpop.f32.mrf.mxu0
          %2773 = vdwg.mxu0
          %2774 = vmatpush.bf16.msra.mxu0 %v725
          %2775 = vmatpush.bf16.msra.mxu0 %v724
          %2776 = vmatpush.bf16.msra.mxu0 %v723
          %2777 = vmatpush.bf16.msra.mxu0 %v722
          %2778 = vmatpush.bf16.msra.mxu0 %v721
          %2779 = vmatpush.bf16.msra.mxu0 %v720
          %2780 = vmatpush.bf16.msra.mxu0 %v719
          %2781 = vmatpush.bf16.msra.mxu0 %v718
          %2782 = vmatmul.bf16.gmra.mxu0 %v2738
          %v2783 = vpop.f32.mrf.mxu0
          %v2784 = vadd.f32 %v2771, %v2783
          %v2785 = vpop.f32.mrf.mxu0
          %2786 = vdwg.mxu0
          %2787 = vmatpush.bf16.msra.mxu0 %v733
          %2788 = vmatpush.bf16.msra.mxu0 %v732
          %2789 = vmatpush.bf16.msra.mxu0 %v731
          %2790 = vmatpush.bf16.msra.mxu0 %v730
          %2791 = vmatpush.bf16.msra.mxu0 %v729
          %2792 = vmatpush.bf16.msra.mxu0 %v728
          %2793 = vmatpush.bf16.msra.mxu0 %v727
          %2794 = vmatpush.bf16.msra.mxu0 %v726
          %2795 = vmatmul.bf16.gmra.mxu0 %v2739
          %v2796 = vpop.f32.mrf.mxu0
          %v2797 = vadd.f32 %v2784, %v2796
          %v2798 = vpop.f32.mrf.mxu0
          %2799 = vdwg.mxu0
          %2800 = vmatpush.bf16.msra.mxu0 %v741
          %2801 = vmatpush.bf16.msra.mxu0 %v740
          %2802 = vmatpush.bf16.msra.mxu0 %v739
          %2803 = vmatpush.bf16.msra.mxu0 %v738
          %2804 = vmatpush.bf16.msra.mxu0 %v737
          %2805 = vmatpush.bf16.msra.mxu0 %v736
          %2806 = vmatpush.bf16.msra.mxu0 %v735
          %2807 = vmatpush.bf16.msra.mxu0 %v734
          %2808 = vmatmul.bf16.gmra.mxu0 %v2740
          %v2809 = vpop.f32.mrf.mxu0
          %v2810 = vadd.f32 %v2797, %v2809
          %v2811 = vpop.f32.mrf.mxu0
          %2812 = vdwg.mxu0
          %2813 = vmatpush.bf16.msra.mxu0 %v749
          %2814 = vmatpush.bf16.msra.mxu0 %v748
          %2815 = vmatpush.bf16.msra.mxu0 %v747
          %2816 = vmatpush.bf16.msra.mxu0 %v746
          %2817 = vmatpush.bf16.msra.mxu0 %v745
          %2818 = vmatpush.bf16.msra.mxu0 %v744
          %2819 = vmatpush.bf16.msra.mxu0 %v743
          %2820 = vmatpush.bf16.msra.mxu0 %v742
          %2821 = vmatmul.bf16.gmra.mxu0 %v2741
          %v2822 = vpop.f32.mrf.mxu0
          %v2823 = vadd.f32 %v2810, %v2822
          %v2824 = vpop.f32.mrf.mxu0
          %2825 = vdwg.mxu0
          %v2826 = vmul.f32 %v2823, %v877
          %v2827 = vadd.f32 %v2826, %v881
          %v2828 = vmax.f32 %v2827, 0.0
          %v2829 = vpack.c.bf16 %v2828, %v2828
          %2830 = vst [vmem:[#allocation2 + $0x48] sm:$0xf] %v2829
          %s2831 = scalar_lea.vmem %s0, 456
          %v2832 = vld [vmem:[%s2831] sm:$0xff]
          %v2833 = vld [vmem:[%s2831 + $0x8] sm:$0xff]
          %v2834 = vld [vmem:[%s2831 + $0x10] sm:$0xff]
          %v2838 = vunpack.c.l.b16 %v2832
          %v2839 = vunpack.c.h.b16 %v2832
          %v2840 = vunpack.c.l.b16 %v2833
          %v2841 = vunpack.c.h.b16 %v2833
          %v2842 = vunpack.c.l.b16 %v2834
          %v2843 = vunpack.c.h.b16 %v2834
          %v2844 = vpack.c.b16 %v2838, %v2838
          %v2845 = vpack.c.b16 %v2839, %v2839
          %v2846 = vpack.c.b16 %v2840, %v2840
          %v2847 = vpack.c.b16 %v2841, %v2841
          %v2848 = vpack.c.b16 %v2842, %v2842
          %v2849 = vpack.c.b16 %v2843, %v2843
          %2856 = vmatpush.bf16.msra.mxu0 %v709
          %2857 = vmatpush.bf16.msra.mxu0 %v708
          %2858 = vmatpush.bf16.msra.mxu0 %v707
          %2859 = vmatpush.bf16.msra.mxu0 %v706
          %2860 = vmatpush.bf16.msra.mxu0 %v705
          %2861 = vmatpush.bf16.msra.mxu0 %v704
          %2862 = vmatpush.bf16.msra.mxu0 %v703
          %2863 = vmatpush.bf16.msra.mxu0 %v702
          %2864 = vmatmul.bf16.gmra.mxu0 %v2844
          %v2865 = vpop.f32.mrf.mxu0
          %v2866 = vadd.f32 0.0, %v2865
          %v2867 = vpop.f32.mrf.mxu0
          %2868 = vdwg.mxu0
          %2869 = vmatpush.bf16.msra.mxu0 %v717
          %2870 = vmatpush.bf16.msra.mxu0 %v716
          %2871 = vmatpush.bf16.msra.mxu0 %v715
          %2872 = vmatpush.bf16.msra.mxu0 %v714
          %2873 = vmatpush.bf16.msra.mxu0 %v713
          %2874 = vmatpush.bf16.msra.mxu0 %v712
          %2875 = vmatpush.bf16.msra.mxu0 %v711
          %2876 = vmatpush.bf16.msra.mxu0 %v710
          %2877 = vmatmul.bf16.gmra.mxu0 %v2845
          %v2878 = vpop.f32.mrf.mxu0
          %v2879 = vadd.f32 %v2866, %v2878
          %v2880 = vpop.f32.mrf.mxu0
          %2881 = vdwg.mxu0
          %2882 = vmatpush.bf16.msra.mxu0 %v725
          %2883 = vmatpush.bf16.msra.mxu0 %v724
          %2884 = vmatpush.bf16.msra.mxu0 %v723
          %2885 = vmatpush.bf16.msra.mxu0 %v722
          %2886 = vmatpush.bf16.msra.mxu0 %v721
          %2887 = vmatpush.bf16.msra.mxu0 %v720
          %2888 = vmatpush.bf16.msra.mxu0 %v719
          %2889 = vmatpush.bf16.msra.mxu0 %v718
          %2890 = vmatmul.bf16.gmra.mxu0 %v2846
          %v2891 = vpop.f32.mrf.mxu0
          %v2892 = vadd.f32 %v2879, %v2891
          %v2893 = vpop.f32.mrf.mxu0
          %2894 = vdwg.mxu0
          %2895 = vmatpush.bf16.msra.mxu0 %v733
          %2896 = vmatpush.bf16.msra.mxu0 %v732
          %2897 = vmatpush.bf16.msra.mxu0 %v731
          %2898 = vmatpush.bf16.msra.mxu0 %v730
          %2899 = vmatpush.bf16.msra.mxu0 %v729
          %2900 = vmatpush.bf16.msra.mxu0 %v728
          %2901 = vmatpush.bf16.msra.mxu0 %v727
          %2902 = vmatpush.bf16.msra.mxu0 %v726
          %2903 = vmatmul.bf16.gmra.mxu0 %v2847
          %v2904 = vpop.f32.mrf.mxu0
          %v2905 = vadd.f32 %v2892, %v2904
          %v2906 = vpop.f32.mrf.mxu0
          %2907 = vdwg.mxu0
          %2908 = vmatpush.bf16.msra.mxu0 %v741
          %2909 = vmatpush.bf16.msra.mxu0 %v740
          %2910 = vmatpush.bf16.msra.mxu0 %v739
          %2911 = vmatpush.bf16.msra.mxu0 %v738
          %2912 = vmatpush.bf16.msra.mxu0 %v737
          %2913 = vmatpush.bf16.msra.mxu0 %v736
          %2914 = vmatpush.bf16.msra.mxu0 %v735
          %2915 = vmatpush.bf16.msra.mxu0 %v734
          %2916 = vmatmul.bf16.gmra.mxu0 %v2848
          %v2917 = vpop.f32.mrf.mxu0
          %v2918 = vadd.f32 %v2905, %v2917
          %v2919 = vpop.f32.mrf.mxu0
          %2920 = vdwg.mxu0
          %2921 = vmatpush.bf16.msra.mxu0 %v749
          %2922 = vmatpush.bf16.msra.mxu0 %v748
          %2923 = vmatpush.bf16.msra.mxu0 %v747
          %2924 = vmatpush.bf16.msra.mxu0 %v746
          %2925 = vmatpush.bf16.msra.mxu0 %v745
          %2926 = vmatpush.bf16.msra.mxu0 %v744
          %2927 = vmatpush.bf16.msra.mxu0 %v743
          %2928 = vmatpush.bf16.msra.mxu0 %v742
          %2929 = vmatmul.bf16.gmra.mxu0 %v2849
          %v2930 = vpop.f32.mrf.mxu0
          %v2931 = vadd.f32 %v2918, %v2930
          %v2932 = vpop.f32.mrf.mxu0
          %2933 = vdwg.mxu0
          %v2934 = vmul.f32 %v2931, %v877
          %v2935 = vadd.f32 %v2934, %v881
          %v2936 = vmax.f32 %v2935, 0.0
          %v2937 = vpack.c.bf16 %v2936, %v2936
          %2938 = vst [vmem:[#allocation2 + $0x4c] sm:$0xf] %v2937
          %s2939 = scalar_lea.vmem %s0, 480
          %v2940 = vld [vmem:[%s2939] sm:$0xff]
          %v2941 = vld [vmem:[%s2939 + $0x8] sm:$0xff]
          %v2942 = vld [vmem:[%s2939 + $0x10] sm:$0xff]
          %v2946 = vunpack.c.l.b16 %v2940
          %v2947 = vunpack.c.h.b16 %v2940
          %v2948 = vunpack.c.l.b16 %v2941
          %v2949 = vunpack.c.h.b16 %v2941
          %v2950 = vunpack.c.l.b16 %v2942
          %v2951 = vunpack.c.h.b16 %v2942
          %v2952 = vpack.c.b16 %v2946, %v2946
          %v2953 = vpack.c.b16 %v2947, %v2947
          %v2954 = vpack.c.b16 %v2948, %v2948
          %v2955 = vpack.c.b16 %v2949, %v2949
          %v2956 = vpack.c.b16 %v2950, %v2950
          %v2957 = vpack.c.b16 %v2951, %v2951
          %2964 = vmatpush.bf16.msra.mxu0 %v709
          %2965 = vmatpush.bf16.msra.mxu0 %v708
          %2966 = vmatpush.bf16.msra.mxu0 %v707
          %2967 = vmatpush.bf16.msra.mxu0 %v706
          %2968 = vmatpush.bf16.msra.mxu0 %v705
          %2969 = vmatpush.bf16.msra.mxu0 %v704
          %2970 = vmatpush.bf16.msra.mxu0 %v703
          %2971 = vmatpush.bf16.msra.mxu0 %v702
          %2972 = vmatmul.bf16.gmra.mxu0 %v2952
          %v2973 = vpop.f32.mrf.mxu0
          %v2974 = vadd.f32 0.0, %v2973
          %v2975 = vpop.f32.mrf.mxu0
          %2976 = vdwg.mxu0
          %2977 = vmatpush.bf16.msra.mxu0 %v717
          %2978 = vmatpush.bf16.msra.mxu0 %v716
          %2979 = vmatpush.bf16.msra.mxu0 %v715
          %2980 = vmatpush.bf16.msra.mxu0 %v714
          %2981 = vmatpush.bf16.msra.mxu0 %v713
          %2982 = vmatpush.bf16.msra.mxu0 %v712
          %2983 = vmatpush.bf16.msra.mxu0 %v711
          %2984 = vmatpush.bf16.msra.mxu0 %v710
          %2985 = vmatmul.bf16.gmra.mxu0 %v2953
          %v2986 = vpop.f32.mrf.mxu0
          %v2987 = vadd.f32 %v2974, %v2986
          %v2988 = vpop.f32.mrf.mxu0
          %2989 = vdwg.mxu0
          %2990 = vmatpush.bf16.msra.mxu0 %v725
          %2991 = vmatpush.bf16.msra.mxu0 %v724
          %2992 = vmatpush.bf16.msra.mxu0 %v723
          %2993 = vmatpush.bf16.msra.mxu0 %v722
          %2994 = vmatpush.bf16.msra.mxu0 %v721
          %2995 = vmatpush.bf16.msra.mxu0 %v720
          %2996 = vmatpush.bf16.msra.mxu0 %v719
          %2997 = vmatpush.bf16.msra.mxu0 %v718
          %2998 = vmatmul.bf16.gmra.mxu0 %v2954
          %v2999 = vpop.f32.mrf.mxu0
          %v3000 = vadd.f32 %v2987, %v2999
          %v3001 = vpop.f32.mrf.mxu0
          %3002 = vdwg.mxu0
          %3003 = vmatpush.bf16.msra.mxu0 %v733
          %3004 = vmatpush.bf16.msra.mxu0 %v732
          %3005 = vmatpush.bf16.msra.mxu0 %v731
          %3006 = vmatpush.bf16.msra.mxu0 %v730
          %3007 = vmatpush.bf16.msra.mxu0 %v729
          %3008 = vmatpush.bf16.msra.mxu0 %v728
          %3009 = vmatpush.bf16.msra.mxu0 %v727
          %3010 = vmatpush.bf16.msra.mxu0 %v726
          %3011 = vmatmul.bf16.gmra.mxu0 %v2955
          %v3012 = vpop.f32.mrf.mxu0
          %v3013 = vadd.f32 %v3000, %v3012
          %v3014 = vpop.f32.mrf.mxu0
          %3015 = vdwg.mxu0
          %3016 = vmatpush.bf16.msra.mxu0 %v741
          %3017 = vmatpush.bf16.msra.mxu0 %v740
          %3018 = vmatpush.bf16.msra.mxu0 %v739
          %3019 = vmatpush.bf16.msra.mxu0 %v738
          %3020 = vmatpush.bf16.msra.mxu0 %v737
          %3021 = vmatpush.bf16.msra.mxu0 %v736
          %3022 = vmatpush.bf16.msra.mxu0 %v735
          %3023 = vmatpush.bf16.msra.mxu0 %v734
          %3024 = vmatmul.bf16.gmra.mxu0 %v2956
          %v3025 = vpop.f32.mrf.mxu0
          %v3026 = vadd.f32 %v3013, %v3025
          %v3027 = vpop.f32.mrf.mxu0
          %3028 = vdwg.mxu0
          %3029 = vmatpush.bf16.msra.mxu0 %v749
          %3030 = vmatpush.bf16.msra.mxu0 %v748
          %3031 = vmatpush.bf16.msra.mxu0 %v747
          %3032 = vmatpush.bf16.msra.mxu0 %v746
          %3033 = vmatpush.bf16.msra.mxu0 %v745
          %3034 = vmatpush.bf16.msra.mxu0 %v744
          %3035 = vmatpush.bf16.msra.mxu0 %v743
          %3036 = vmatpush.bf16.msra.mxu0 %v742
          %3037 = vmatmul.bf16.gmra.mxu0 %v2957
          %v3038 = vpop.f32.mrf.mxu0
          %v3039 = vadd.f32 %v3026, %v3038
          %v3040 = vpop.f32.mrf.mxu0
          %3041 = vdwg.mxu0
          %v3042 = vmul.f32 %v3039, %v877
          %v3043 = vadd.f32 %v3042, %v881
          %v3044 = vmax.f32 %v3043, 0.0
          %v3045 = vpack.c.bf16 %v3044, %v3044
          %3046 = vst [vmem:[#allocation2 + $0x50] sm:$0xf] %v3045
          %s3047 = scalar_lea.vmem %s0, 504
          %v3048 = vld [vmem:[%s3047] sm:$0xff]
          %v3049 = vld [vmem:[%s3047 + $0x8] sm:$0xff]
          %v3050 = vld [vmem:[%s3047 + $0x10] sm:$0xff]
          %v3054 = vunpack.c.l.b16 %v3048
          %v3055 = vunpack.c.h.b16 %v3048
          %v3056 = vunpack.c.l.b16 %v3049
          %v3057 = vunpack.c.h.b16 %v3049
          %v3058 = vunpack.c.l.b16 %v3050
          %v3059 = vunpack.c.h.b16 %v3050
          %v3060 = vpack.c.b16 %v3054, %v3054
          %v3061 = vpack.c.b16 %v3055, %v3055
          %v3062 = vpack.c.b16 %v3056, %v3056
          %v3063 = vpack.c.b16 %v3057, %v3057
          %v3064 = vpack.c.b16 %v3058, %v3058
          %v3065 = vpack.c.b16 %v3059, %v3059
          %3072 = vmatpush.bf16.msra.mxu0 %v709
          %3073 = vmatpush.bf16.msra.mxu0 %v708
          %3074 = vmatpush.bf16.msra.mxu0 %v707
          %3075 = vmatpush.bf16.msra.mxu0 %v706
          %3076 = vmatpush.bf16.msra.mxu0 %v705
          %3077 = vmatpush.bf16.msra.mxu0 %v704
          %3078 = vmatpush.bf16.msra.mxu0 %v703
          %3079 = vmatpush.bf16.msra.mxu0 %v702
          %3080 = vmatmul.bf16.gmra.mxu0 %v3060
          %v3081 = vpop.f32.mrf.mxu0
          %v3082 = vadd.f32 0.0, %v3081
          %v3083 = vpop.f32.mrf.mxu0
          %3084 = vdwg.mxu0
          %3085 = vmatpush.bf16.msra.mxu0 %v717
          %3086 = vmatpush.bf16.msra.mxu0 %v716
          %3087 = vmatpush.bf16.msra.mxu0 %v715
          %3088 = vmatpush.bf16.msra.mxu0 %v714
          %3089 = vmatpush.bf16.msra.mxu0 %v713
          %3090 = vmatpush.bf16.msra.mxu0 %v712
          %3091 = vmatpush.bf16.msra.mxu0 %v711
          %3092 = vmatpush.bf16.msra.mxu0 %v710
          %3093 = vmatmul.bf16.gmra.mxu0 %v3061
          %v3094 = vpop.f32.mrf.mxu0
          %v3095 = vadd.f32 %v3082, %v3094
          %v3096 = vpop.f32.mrf.mxu0
          %3097 = vdwg.mxu0
          %3098 = vmatpush.bf16.msra.mxu0 %v725
          %3099 = vmatpush.bf16.msra.mxu0 %v724
          %3100 = vmatpush.bf16.msra.mxu0 %v723
          %3101 = vmatpush.bf16.msra.mxu0 %v722
          %3102 = vmatpush.bf16.msra.mxu0 %v721
          %3103 = vmatpush.bf16.msra.mxu0 %v720
          %3104 = vmatpush.bf16.msra.mxu0 %v719
          %3105 = vmatpush.bf16.msra.mxu0 %v718
          %3106 = vmatmul.bf16.gmra.mxu0 %v3062
          %v3107 = vpop.f32.mrf.mxu0
          %v3108 = vadd.f32 %v3095, %v3107
          %v3109 = vpop.f32.mrf.mxu0
          %3110 = vdwg.mxu0
          %3111 = vmatpush.bf16.msra.mxu0 %v733
          %3112 = vmatpush.bf16.msra.mxu0 %v732
          %3113 = vmatpush.bf16.msra.mxu0 %v731
          %3114 = vmatpush.bf16.msra.mxu0 %v730
          %3115 = vmatpush.bf16.msra.mxu0 %v729
          %3116 = vmatpush.bf16.msra.mxu0 %v728
          %3117 = vmatpush.bf16.msra.mxu0 %v727
          %3118 = vmatpush.bf16.msra.mxu0 %v726
          %3119 = vmatmul.bf16.gmra.mxu0 %v3063
          %v3120 = vpop.f32.mrf.mxu0
          %v3121 = vadd.f32 %v3108, %v3120
          %v3122 = vpop.f32.mrf.mxu0
          %3123 = vdwg.mxu0
          %3124 = vmatpush.bf16.msra.mxu0 %v741
          %3125 = vmatpush.bf16.msra.mxu0 %v740
          %3126 = vmatpush.bf16.msra.mxu0 %v739
          %3127 = vmatpush.bf16.msra.mxu0 %v738
          %3128 = vmatpush.bf16.msra.mxu0 %v737
          %3129 = vmatpush.bf16.msra.mxu0 %v736
          %3130 = vmatpush.bf16.msra.mxu0 %v735
          %3131 = vmatpush.bf16.msra.mxu0 %v734
          %3132 = vmatmul.bf16.gmra.mxu0 %v3064
          %v3133 = vpop.f32.mrf.mxu0
          %v3134 = vadd.f32 %v3121, %v3133
          %v3135 = vpop.f32.mrf.mxu0
          %3136 = vdwg.mxu0
          %3137 = vmatpush.bf16.msra.mxu0 %v749
          %3138 = vmatpush.bf16.msra.mxu0 %v748
          %3139 = vmatpush.bf16.msra.mxu0 %v747
          %3140 = vmatpush.bf16.msra.mxu0 %v746
          %3141 = vmatpush.bf16.msra.mxu0 %v745
          %3142 = vmatpush.bf16.msra.mxu0 %v744
          %3143 = vmatpush.bf16.msra.mxu0 %v743
          %3144 = vmatpush.bf16.msra.mxu0 %v742
          %3145 = vmatmul.bf16.gmra.mxu0 %v3065
          %v3146 = vpop.f32.mrf.mxu0
          %v3147 = vadd.f32 %v3134, %v3146
          %v3148 = vpop.f32.mrf.mxu0
          %3149 = vdwg.mxu0
          %v3150 = vmul.f32 %v3147, %v877
          %v3151 = vadd.f32 %v3150, %v881
          %v3152 = vmax.f32 %v3151, 0.0
          %v3153 = vpack.c.bf16 %v3152, %v3152
          %3154 = vst [vmem:[#allocation2 + $0x54] sm:$0xf] %v3153
          %s3155 = scalar_lea.vmem %s0, 528
          %v3156 = vld [vmem:[%s3155] sm:$0xff]
          %v3157 = vld [vmem:[%s3155 + $0x8] sm:$0xff]
          %v3158 = vld [vmem:[%s3155 + $0x10] sm:$0xff]
          %v3162 = vunpack.c.l.b16 %v3156
          %v3163 = vunpack.c.h.b16 %v3156
          %v3164 = vunpack.c.l.b16 %v3157
          %v3165 = vunpack.c.h.b16 %v3157
          %v3166 = vunpack.c.l.b16 %v3158
          %v3167 = vunpack.c.h.b16 %v3158
          %v3168 = vpack.c.b16 %v3162, %v3162
          %v3169 = vpack.c.b16 %v3163, %v3163
          %v3170 = vpack.c.b16 %v3164, %v3164
          %v3171 = vpack.c.b16 %v3165, %v3165
          %v3172 = vpack.c.b16 %v3166, %v3166
          %v3173 = vpack.c.b16 %v3167, %v3167
          %3180 = vmatpush.bf16.msra.mxu0 %v709
          %3181 = vmatpush.bf16.msra.mxu0 %v708
          %3182 = vmatpush.bf16.msra.mxu0 %v707
          %3183 = vmatpush.bf16.msra.mxu0 %v706
          %3184 = vmatpush.bf16.msra.mxu0 %v705
          %3185 = vmatpush.bf16.msra.mxu0 %v704
          %3186 = vmatpush.bf16.msra.mxu0 %v703
          %3187 = vmatpush.bf16.msra.mxu0 %v702
          %3188 = vmatmul.bf16.gmra.mxu0 %v3168
          %v3189 = vpop.f32.mrf.mxu0
          %v3190 = vadd.f32 0.0, %v3189
          %v3191 = vpop.f32.mrf.mxu0
          %3192 = vdwg.mxu0
          %3193 = vmatpush.bf16.msra.mxu0 %v717
          %3194 = vmatpush.bf16.msra.mxu0 %v716
          %3195 = vmatpush.bf16.msra.mxu0 %v715
          %3196 = vmatpush.bf16.msra.mxu0 %v714
          %3197 = vmatpush.bf16.msra.mxu0 %v713
          %3198 = vmatpush.bf16.msra.mxu0 %v712
          %3199 = vmatpush.bf16.msra.mxu0 %v711
          %3200 = vmatpush.bf16.msra.mxu0 %v710
          %3201 = vmatmul.bf16.gmra.mxu0 %v3169
          %v3202 = vpop.f32.mrf.mxu0
          %v3203 = vadd.f32 %v3190, %v3202
          %v3204 = vpop.f32.mrf.mxu0
          %3205 = vdwg.mxu0
          %3206 = vmatpush.bf16.msra.mxu0 %v725
          %3207 = vmatpush.bf16.msra.mxu0 %v724
          %3208 = vmatpush.bf16.msra.mxu0 %v723
          %3209 = vmatpush.bf16.msra.mxu0 %v722
          %3210 = vmatpush.bf16.msra.mxu0 %v721
          %3211 = vmatpush.bf16.msra.mxu0 %v720
          %3212 = vmatpush.bf16.msra.mxu0 %v719
          %3213 = vmatpush.bf16.msra.mxu0 %v718
          %3214 = vmatmul.bf16.gmra.mxu0 %v3170
          %v3215 = vpop.f32.mrf.mxu0
          %v3216 = vadd.f32 %v3203, %v3215
          %v3217 = vpop.f32.mrf.mxu0
          %3218 = vdwg.mxu0
          %3219 = vmatpush.bf16.msra.mxu0 %v733
          %3220 = vmatpush.bf16.msra.mxu0 %v732
          %3221 = vmatpush.bf16.msra.mxu0 %v731
          %3222 = vmatpush.bf16.msra.mxu0 %v730
          %3223 = vmatpush.bf16.msra.mxu0 %v729
          %3224 = vmatpush.bf16.msra.mxu0 %v728
          %3225 = vmatpush.bf16.msra.mxu0 %v727
          %3226 = vmatpush.bf16.msra.mxu0 %v726
          %3227 = vmatmul.bf16.gmra.mxu0 %v3171
          %v3228 = vpop.f32.mrf.mxu0
          %v3229 = vadd.f32 %v3216, %v3228
          %v3230 = vpop.f32.mrf.mxu0
          %3231 = vdwg.mxu0
          %3232 = vmatpush.bf16.msra.mxu0 %v741
          %3233 = vmatpush.bf16.msra.mxu0 %v740
          %3234 = vmatpush.bf16.msra.mxu0 %v739
          %3235 = vmatpush.bf16.msra.mxu0 %v738
          %3236 = vmatpush.bf16.msra.mxu0 %v737
          %3237 = vmatpush.bf16.msra.mxu0 %v736
          %3238 = vmatpush.bf16.msra.mxu0 %v735
          %3239 = vmatpush.bf16.msra.mxu0 %v734
          %3240 = vmatmul.bf16.gmra.mxu0 %v3172
          %v3241 = vpop.f32.mrf.mxu0
          %v3242 = vadd.f32 %v3229, %v3241
          %v3243 = vpop.f32.mrf.mxu0
          %3244 = vdwg.mxu0
          %3245 = vmatpush.bf16.msra.mxu0 %v749
          %3246 = vmatpush.bf16.msra.mxu0 %v748
          %3247 = vmatpush.bf16.msra.mxu0 %v747
          %3248 = vmatpush.bf16.msra.mxu0 %v746
          %3249 = vmatpush.bf16.msra.mxu0 %v745
          %3250 = vmatpush.bf16.msra.mxu0 %v744
          %3251 = vmatpush.bf16.msra.mxu0 %v743
          %3252 = vmatpush.bf16.msra.mxu0 %v742
          %3253 = vmatmul.bf16.gmra.mxu0 %v3173
          %v3254 = vpop.f32.mrf.mxu0
          %v3255 = vadd.f32 %v3242, %v3254
          %v3256 = vpop.f32.mrf.mxu0
          %3257 = vdwg.mxu0
          %v3258 = vmul.f32 %v3255, %v877
          %v3259 = vadd.f32 %v3258, %v881
          %v3260 = vmax.f32 %v3259, 0.0
          %v3261 = vpack.c.bf16 %v3260, %v3260
          %3262 = vst [vmem:[#allocation2 + $0x58] sm:$0xf] %v3261
          %s3263 = scalar_lea.vmem %s0, 552
          %v3264 = vld [vmem:[%s3263] sm:$0xff]
          %v3265 = vld [vmem:[%s3263 + $0x8] sm:$0xff]
          %v3266 = vld [vmem:[%s3263 + $0x10] sm:$0xff]
          %v3270 = vunpack.c.l.b16 %v3264
          %v3271 = vunpack.c.h.b16 %v3264
          %v3272 = vunpack.c.l.b16 %v3265
          %v3273 = vunpack.c.h.b16 %v3265
          %v3274 = vunpack.c.l.b16 %v3266
          %v3275 = vunpack.c.h.b16 %v3266
          %v3276 = vpack.c.b16 %v3270, %v3270
          %v3277 = vpack.c.b16 %v3271, %v3271
          %v3278 = vpack.c.b16 %v3272, %v3272
          %v3279 = vpack.c.b16 %v3273, %v3273
          %v3280 = vpack.c.b16 %v3274, %v3274
          %v3281 = vpack.c.b16 %v3275, %v3275
          %3288 = vmatpush.bf16.msra.mxu0 %v709
          %3289 = vmatpush.bf16.msra.mxu0 %v708
          %3290 = vmatpush.bf16.msra.mxu0 %v707
          %3291 = vmatpush.bf16.msra.mxu0 %v706
          %3292 = vmatpush.bf16.msra.mxu0 %v705
          %3293 = vmatpush.bf16.msra.mxu0 %v704
          %3294 = vmatpush.bf16.msra.mxu0 %v703
          %3295 = vmatpush.bf16.msra.mxu0 %v702
          %3296 = vmatmul.bf16.gmra.mxu0 %v3276
          %v3297 = vpop.f32.mrf.mxu0
          %v3298 = vadd.f32 0.0, %v3297
          %v3299 = vpop.f32.mrf.mxu0
          %3300 = vdwg.mxu0
          %3301 = vmatpush.bf16.msra.mxu0 %v717
          %3302 = vmatpush.bf16.msra.mxu0 %v716
          %3303 = vmatpush.bf16.msra.mxu0 %v715
          %3304 = vmatpush.bf16.msra.mxu0 %v714
          %3305 = vmatpush.bf16.msra.mxu0 %v713
          %3306 = vmatpush.bf16.msra.mxu0 %v712
          %3307 = vmatpush.bf16.msra.mxu0 %v711
          %3308 = vmatpush.bf16.msra.mxu0 %v710
          %3309 = vmatmul.bf16.gmra.mxu0 %v3277
          %v3310 = vpop.f32.mrf.mxu0
          %v3311 = vadd.f32 %v3298, %v3310
          %v3312 = vpop.f32.mrf.mxu0
          %3313 = vdwg.mxu0
          %3314 = vmatpush.bf16.msra.mxu0 %v725
          %3315 = vmatpush.bf16.msra.mxu0 %v724
          %3316 = vmatpush.bf16.msra.mxu0 %v723
          %3317 = vmatpush.bf16.msra.mxu0 %v722
          %3318 = vmatpush.bf16.msra.mxu0 %v721
          %3319 = vmatpush.bf16.msra.mxu0 %v720
          %3320 = vmatpush.bf16.msra.mxu0 %v719
          %3321 = vmatpush.bf16.msra.mxu0 %v718
          %3322 = vmatmul.bf16.gmra.mxu0 %v3278
          %v3323 = vpop.f32.mrf.mxu0
          %v3324 = vadd.f32 %v3311, %v3323
          %v3325 = vpop.f32.mrf.mxu0
          %3326 = vdwg.mxu0
          %3327 = vmatpush.bf16.msra.mxu0 %v733
          %3328 = vmatpush.bf16.msra.mxu0 %v732
          %3329 = vmatpush.bf16.msra.mxu0 %v731
          %3330 = vmatpush.bf16.msra.mxu0 %v730
          %3331 = vmatpush.bf16.msra.mxu0 %v729
          %3332 = vmatpush.bf16.msra.mxu0 %v728
          %3333 = vmatpush.bf16.msra.mxu0 %v727
          %3334 = vmatpush.bf16.msra.mxu0 %v726
          %3335 = vmatmul.bf16.gmra.mxu0 %v3279
          %v3336 = vpop.f32.mrf.mxu0
          %v3337 = vadd.f32 %v3324, %v3336
          %v3338 = vpop.f32.mrf.mxu0
          %3339 = vdwg.mxu0
          %3340 = vmatpush.bf16.msra.mxu0 %v741
          %3341 = vmatpush.bf16.msra.mxu0 %v740
          %3342 = vmatpush.bf16.msra.mxu0 %v739
          %3343 = vmatpush.bf16.msra.mxu0 %v738
          %3344 = vmatpush.bf16.msra.mxu0 %v737
          %3345 = vmatpush.bf16.msra.mxu0 %v736
          %3346 = vmatpush.bf16.msra.mxu0 %v735
          %3347 = vmatpush.bf16.msra.mxu0 %v734
          %3348 = vmatmul.bf16.gmra.mxu0 %v3280
          %v3349 = vpop.f32.mrf.mxu0
          %v3350 = vadd.f32 %v3337, %v3349
          %v3351 = vpop.f32.mrf.mxu0
          %3352 = vdwg.mxu0
          %3353 = vmatpush.bf16.msra.mxu0 %v749
          %3354 = vmatpush.bf16.msra.mxu0 %v748
          %3355 = vmatpush.bf16.msra.mxu0 %v747
          %3356 = vmatpush.bf16.msra.mxu0 %v746
          %3357 = vmatpush.bf16.msra.mxu0 %v745
          %3358 = vmatpush.bf16.msra.mxu0 %v744
          %3359 = vmatpush.bf16.msra.mxu0 %v743
          %3360 = vmatpush.bf16.msra.mxu0 %v742
          %3361 = vmatmul.bf16.gmra.mxu0 %v3281
          %v3362 = vpop.f32.mrf.mxu0
          %v3363 = vadd.f32 %v3350, %v3362
          %v3364 = vpop.f32.mrf.mxu0
          %3365 = vdwg.mxu0
          %v3366 = vmul.f32 %v3363, %v877
          %v3367 = vadd.f32 %v3366, %v881
          %v3368 = vmax.f32 %v3367, 0.0
          %v3369 = vpack.c.bf16 %v3368, %v3368
          %3370 = vst [vmem:[#allocation2 + $0x5c] sm:$0xf] %v3369
          %s3371 = scalar_lea.vmem %s0, 576
          %v3372 = vld [vmem:[%s3371] sm:$0xff]
          %v3373 = vld [vmem:[%s3371 + $0x8] sm:$0xff]
          %v3374 = vld [vmem:[%s3371 + $0x10] sm:$0xff]
          %v3378 = vunpack.c.l.b16 %v3372
          %v3379 = vunpack.c.h.b16 %v3372
          %v3380 = vunpack.c.l.b16 %v3373
          %v3381 = vunpack.c.h.b16 %v3373
          %v3382 = vunpack.c.l.b16 %v3374
          %v3383 = vunpack.c.h.b16 %v3374
          %v3384 = vpack.c.b16 %v3378, %v3378
          %v3385 = vpack.c.b16 %v3379, %v3379
          %v3386 = vpack.c.b16 %v3380, %v3380
          %v3387 = vpack.c.b16 %v3381, %v3381
          %v3388 = vpack.c.b16 %v3382, %v3382
          %v3389 = vpack.c.b16 %v3383, %v3383
          %3396 = vmatpush.bf16.msra.mxu0 %v709
          %3397 = vmatpush.bf16.msra.mxu0 %v708
          %3398 = vmatpush.bf16.msra.mxu0 %v707
          %3399 = vmatpush.bf16.msra.mxu0 %v706
          %3400 = vmatpush.bf16.msra.mxu0 %v705
          %3401 = vmatpush.bf16.msra.mxu0 %v704
          %3402 = vmatpush.bf16.msra.mxu0 %v703
          %3403 = vmatpush.bf16.msra.mxu0 %v702
          %3404 = vmatmul.bf16.gmra.mxu0 %v3384
          %v3405 = vpop.f32.mrf.mxu0
          %v3406 = vadd.f32 0.0, %v3405
          %v3407 = vpop.f32.mrf.mxu0
          %3408 = vdwg.mxu0
          %3409 = vmatpush.bf16.msra.mxu0 %v717
          %3410 = vmatpush.bf16.msra.mxu0 %v716
          %3411 = vmatpush.bf16.msra.mxu0 %v715
          %3412 = vmatpush.bf16.msra.mxu0 %v714
          %3413 = vmatpush.bf16.msra.mxu0 %v713
          %3414 = vmatpush.bf16.msra.mxu0 %v712
          %3415 = vmatpush.bf16.msra.mxu0 %v711
          %3416 = vmatpush.bf16.msra.mxu0 %v710
          %3417 = vmatmul.bf16.gmra.mxu0 %v3385
          %v3418 = vpop.f32.mrf.mxu0
          %v3419 = vadd.f32 %v3406, %v3418
          %v3420 = vpop.f32.mrf.mxu0
          %3421 = vdwg.mxu0
          %3422 = vmatpush.bf16.msra.mxu0 %v725
          %3423 = vmatpush.bf16.msra.mxu0 %v724
          %3424 = vmatpush.bf16.msra.mxu0 %v723
          %3425 = vmatpush.bf16.msra.mxu0 %v722
          %3426 = vmatpush.bf16.msra.mxu0 %v721
          %3427 = vmatpush.bf16.msra.mxu0 %v720
          %3428 = vmatpush.bf16.msra.mxu0 %v719
          %3429 = vmatpush.bf16.msra.mxu0 %v718
          %3430 = vmatmul.bf16.gmra.mxu0 %v3386
          %v3431 = vpop.f32.mrf.mxu0
          %v3432 = vadd.f32 %v3419, %v3431
          %v3433 = vpop.f32.mrf.mxu0
          %3434 = vdwg.mxu0
          %3435 = vmatpush.bf16.msra.mxu0 %v733
          %3436 = vmatpush.bf16.msra.mxu0 %v732
          %3437 = vmatpush.bf16.msra.mxu0 %v731
          %3438 = vmatpush.bf16.msra.mxu0 %v730
          %3439 = vmatpush.bf16.msra.mxu0 %v729
          %3440 = vmatpush.bf16.msra.mxu0 %v728
          %3441 = vmatpush.bf16.msra.mxu0 %v727
          %3442 = vmatpush.bf16.msra.mxu0 %v726
          %3443 = vmatmul.bf16.gmra.mxu0 %v3387
          %v3444 = vpop.f32.mrf.mxu0
          %v3445 = vadd.f32 %v3432, %v3444
          %v3446 = vpop.f32.mrf.mxu0
          %3447 = vdwg.mxu0
          %3448 = vmatpush.bf16.msra.mxu0 %v741
          %3449 = vmatpush.bf16.msra.mxu0 %v740
          %3450 = vmatpush.bf16.msra.mxu0 %v739
          %3451 = vmatpush.bf16.msra.mxu0 %v738
          %3452 = vmatpush.bf16.msra.mxu0 %v737
          %3453 = vmatpush.bf16.msra.mxu0 %v736
          %3454 = vmatpush.bf16.msra.mxu0 %v735
          %3455 = vmatpush.bf16.msra.mxu0 %v734
          %3456 = vmatmul.bf16.gmra.mxu0 %v3388
          %v3457 = vpop.f32.mrf.mxu0
          %v3458 = vadd.f32 %v3445, %v3457
          %v3459 = vpop.f32.mrf.mxu0
          %3460 = vdwg.mxu0
          %3461 = vmatpush.bf16.msra.mxu0 %v749
          %3462 = vmatpush.bf16.msra.mxu0 %v748
          %3463 = vmatpush.bf16.msra.mxu0 %v747
          %3464 = vmatpush.bf16.msra.mxu0 %v746
          %3465 = vmatpush.bf16.msra.mxu0 %v745
          %3466 = vmatpush.bf16.msra.mxu0 %v744
          %3467 = vmatpush.bf16.msra.mxu0 %v743
          %3468 = vmatpush.bf16.msra.mxu0 %v742
          %3469 = vmatmul.bf16.gmra.mxu0 %v3389
          %v3470 = vpop.f32.mrf.mxu0
          %v3471 = vadd.f32 %v3458, %v3470
          %v3472 = vpop.f32.mrf.mxu0
          %3473 = vdwg.mxu0
          %v3474 = vmul.f32 %v3471, %v877
          %v3475 = vadd.f32 %v3474, %v881
          %v3476 = vmax.f32 %v3475, 0.0
          %v3477 = vpack.c.bf16 %v3476, %v3476
          %3478 = vst [vmem:[#allocation2 + $0x60] sm:$0xf] %v3477
        $region56: #{inception_aux_forward.1} parent=47 // pred_fallthru
          _
        %v3479 = vld [vmem:[#allocation2] sm:$0xff]
        %v3480 = vld [vmem:[#allocation2 + $0x8] sm:$0xff]
        %v3481 = vld [vmem:[#allocation2 + $0x10] sm:$0xff]
        %v3482 = vld [vmem:[#allocation2 + $0x18] sm:$0xff]
        %v3483 = vld [vmem:[#allocation2 + $0x20] sm:$0xff]
        %v3484 = vld [vmem:[#allocation2 + $0x28] sm:$0xff]
        %v3485 = vld [vmem:[#allocation2 + $0x30] sm:$0xff]
        %v3486 = vld [vmem:[#allocation2 + $0x38] sm:$0xff]
        %v3487 = vld [vmem:[#allocation2 + $0x40] sm:$0xff]
        %v3488 = vld [vmem:[#allocation2 + $0x48] sm:$0xff]
        %v3489 = vld [vmem:[#allocation2 + $0x50] sm:$0xff]
        %v3490 = vld [vmem:[#allocation2 + $0x58] sm:$0xff]
        %v3491 = vld [vmem:[#allocation2 + $0x60] sm:$0xf]
        %v3492 = vld [vmem:[%s317] sm:$0xf]
        %v3493 = vld [vmem:[%s317 + $0x4] sm:$0xf]
        %v3494 = vld [vmem:[%s317 + $0x8] sm:$0xf]
        %v3495 = vld [vmem:[%s317 + $0xc] sm:$0xf]
        %v3496 = vld [vmem:[%s317 + $0x10] sm:$0xf]
        %v3497 = vld [vmem:[%s317 + $0x14] sm:$0xf]
        %v3498 = vld [vmem:[%s317 + $0x18] sm:$0xf]
        %v3499 = vld [vmem:[%s317 + $0x1c] sm:$0xf]
        %v3500 = vld [vmem:[%s317 + $0x20] sm:$0xf]
        %v3501 = vld [vmem:[%s317 + $0x24] sm:$0xf]
        %v3502 = vld [vmem:[%s317 + $0x28] sm:$0xf]
        %v3503 = vld [vmem:[%s317 + $0x2c] sm:$0xf]
        %v3504 = vld [vmem:[%s317 + $0x30] sm:$0xf]
        %v3505 = vld [vmem:[%s317 + $0x34] sm:$0xf]
        %v3506 = vld [vmem:[%s317 + $0x38] sm:$0xf]
        %v3507 = vld [vmem:[%s317 + $0x3c] sm:$0xf]
        %v3508 = vld [vmem:[%s317 + $0x40] sm:$0xf]
        %v3509 = vld [vmem:[%s317 + $0x44] sm:$0xf]
        %v3510 = vld [vmem:[%s317 + $0x48] sm:$0xf]
        %v3511 = vld [vmem:[%s317 + $0x4c] sm:$0xf]
        %v3512 = vld [vmem:[%s317 + $0x50] sm:$0xf]
        %v3513 = vld [vmem:[%s317 + $0x54] sm:$0xf]
        %v3514 = vld [vmem:[%s317 + $0x58] sm:$0xf]
        %v3515 = vld [vmem:[%s317 + $0x5c] sm:$0xf]
        %v3516 = vld [vmem:[%s317 + $0x60] sm:$0xf]
        %v3517 = vld [vmem:[%s317 + $0x64] sm:$0xf]
        %v3518 = vld [vmem:[%s317 + $0x68] sm:$0xf]
        %v3519 = vld [vmem:[%s317 + $0x6c] sm:$0xf]
        %v3520 = vld [vmem:[%s317 + $0x70] sm:$0xf]
        %v3521 = vld [vmem:[%s317 + $0x74] sm:$0xf]
        %v3522 = vld [vmem:[%s317 + $0x78] sm:$0xf]
        %v3523 = vld [vmem:[%s317 + $0x7c] sm:$0xf]
        %v3524 = vld [vmem:[%s317 + $0x80] sm:$0xf]
        %v3525 = vld [vmem:[%s317 + $0x84] sm:$0xf]
        %v3526 = vld [vmem:[%s317 + $0x88] sm:$0xf]
        %v3527 = vld [vmem:[%s317 + $0x8c] sm:$0xf]
        %v3528 = vld [vmem:[%s317 + $0x90] sm:$0xf]
        %v3529 = vld [vmem:[%s317 + $0x94] sm:$0xf]
        %v3530 = vld [vmem:[%s317 + $0x98] sm:$0xf]
        %v3531 = vld [vmem:[%s317 + $0x9c] sm:$0xf]
        %v3532 = vld [vmem:[%s317 + $0xa0] sm:$0xf]
        %v3533 = vld [vmem:[%s317 + $0xa4] sm:$0xf]
        %v3534 = vld [vmem:[%s317 + $0xa8] sm:$0xf]
        %v3535 = vld [vmem:[%s317 + $0xac] sm:$0xf]
        %v3536 = vld [vmem:[%s317 + $0xb0] sm:$0xf]
        %v3537 = vld [vmem:[%s317 + $0xb4] sm:$0xf]
        %v3538 = vld [vmem:[%s317 + $0xb8] sm:$0xf]
        %v3539 = vld [vmem:[%s317 + $0xbc] sm:$0xf]
        %v3540 = vld [vmem:[%s317 + $0xc0] sm:$0xf]
        %v3541 = vld [vmem:[%s317 + $0xc4] sm:$0xf]
        %v3542 = vld [vmem:[%s317 + $0xc8] sm:$0xf]
        %v3543 = vld [vmem:[%s317 + $0xcc] sm:$0xf]
        %v3544 = vld [vmem:[%s317 + $0xd0] sm:$0xf]
        %v3545 = vld [vmem:[%s317 + $0xd4] sm:$0xf]
        %v3546 = vld [vmem:[%s317 + $0xd8] sm:$0xf]
        %v3547 = vld [vmem:[%s317 + $0xdc] sm:$0xf]
        %v3548 = vld [vmem:[%s317 + $0xe0] sm:$0xf]
        %v3549 = vld [vmem:[%s317 + $0xe4] sm:$0xf]
        %v3550 = vld [vmem:[%s317 + $0xe8] sm:$0xf]
        %v3551 = vld [vmem:[%s317 + $0xec] sm:$0xf]
        %v3552 = vld [vmem:[%s317 + $0xf0] sm:$0xf]
        %v3553 = vld [vmem:[%s317 + $0xf4] sm:$0xf]
        %v3554 = vld [vmem:[%s317 + $0xf8] sm:$0xf]
        %v3555 = vld [vmem:[%s317 + $0xfc] sm:$0xf]
        %v3556 = vld [vmem:[%s317 + $0x100] sm:$0xf]
        %v3557 = vld [vmem:[%s317 + $0x104] sm:$0xf]
        %v3558 = vld [vmem:[%s317 + $0x108] sm:$0xf]
        %v3559 = vld [vmem:[%s317 + $0x10c] sm:$0xf]
        %v3560 = vld [vmem:[%s317 + $0x110] sm:$0xf]
        %v3561 = vld [vmem:[%s317 + $0x114] sm:$0xf]
        %v3562 = vld [vmem:[%s317 + $0x118] sm:$0xf]
        %v3563 = vld [vmem:[%s317 + $0x11c] sm:$0xf]
        %v3564 = vld [vmem:[%s317 + $0x120] sm:$0xf]
        %v3565 = vld [vmem:[%s317 + $0x124] sm:$0xf]
        %v3566 = vld [vmem:[%s317 + $0x128] sm:$0xf]
        %v3567 = vld [vmem:[%s317 + $0x12c] sm:$0xf]
        %v3568 = vld [vmem:[%s317 + $0x130] sm:$0xf]
        %v3569 = vld [vmem:[%s317 + $0x134] sm:$0xf]
        %v3570 = vld [vmem:[%s317 + $0x138] sm:$0xf]
        %v3571 = vld [vmem:[%s317 + $0x13c] sm:$0xf]
        %v3572 = vld [vmem:[%s317 + $0x140] sm:$0xf]
        %v3573 = vld [vmem:[%s317 + $0x144] sm:$0xf]
        %v3574 = vld [vmem:[%s317 + $0x148] sm:$0xf]
        %v3575 = vld [vmem:[%s317 + $0x14c] sm:$0xf]
        %v3576 = vld [vmem:[%s317 + $0x150] sm:$0xf]
        %v3577 = vld [vmem:[%s317 + $0x154] sm:$0xf]
        %v3578 = vld [vmem:[%s317 + $0x158] sm:$0xf]
        %v3579 = vld [vmem:[%s317 + $0x15c] sm:$0xf]
        %v3580 = vld [vmem:[%s317 + $0x160] sm:$0xf]
        %v3581 = vld [vmem:[%s317 + $0x164] sm:$0xf]
        %v3582 = vld [vmem:[%s317 + $0x168] sm:$0xf]
        %v3583 = vld [vmem:[%s317 + $0x16c] sm:$0xf]
        %v3584 = vld [vmem:[%s317 + $0x170] sm:$0xf]
        %v3585 = vld [vmem:[%s317 + $0x174] sm:$0xf]
        %v3586 = vld [vmem:[%s317 + $0x178] sm:$0xf]
        %v3587 = vld [vmem:[%s317 + $0x17c] sm:$0xf]
        %v3588 = vld [vmem:[%s317 + $0x180] sm:$0xf]
        %v3589 = vld [vmem:[%s317 + $0x184] sm:$0xf]
        %v3590 = vld [vmem:[%s317 + $0x188] sm:$0xf]
        %v3591 = vld [vmem:[%s317 + $0x18c] sm:$0xf]
        %v3592 = vld [vmem:[%s317 + $0x190] sm:$0xf]
        %v3593 = vld [vmem:[%s317 + $0x194] sm:$0xf]
        %v3594 = vld [vmem:[%s317 + $0x198] sm:$0xf]
        %v3595 = vld [vmem:[%s317 + $0x19c] sm:$0xf]
        %v3596 = vld [vmem:[%s317 + $0x1a0] sm:$0xf]
        %v3597 = vld [vmem:[%s317 + $0x1a4] sm:$0xf]
        %v3598 = vld [vmem:[%s317 + $0x1a8] sm:$0xf]
        %v3599 = vld [vmem:[%s317 + $0x1ac] sm:$0xf]
        %v3600 = vld [vmem:[%s317 + $0x1b0] sm:$0xf]
        %v3601 = vld [vmem:[%s317 + $0x1b4] sm:$0xf]
        %v3602 = vld [vmem:[%s317 + $0x1b8] sm:$0xf]
        %v3603 = vld [vmem:[%s317 + $0x1bc] sm:$0xf]
        %v3604 = vld [vmem:[%s317 + $0x1c0] sm:$0xf]
        %v3605 = vld [vmem:[%s317 + $0x1c4] sm:$0xf]
        %v3606 = vld [vmem:[%s317 + $0x1c8] sm:$0xf]
        %v3607 = vld [vmem:[%s317 + $0x1cc] sm:$0xf]
        %v3608 = vld [vmem:[%s317 + $0x1d0] sm:$0xf]
        %v3609 = vld [vmem:[%s317 + $0x1d4] sm:$0xf]
        %v3610 = vld [vmem:[%s317 + $0x1d8] sm:$0xf]
        %v3611 = vld [vmem:[%s317 + $0x1dc] sm:$0xf]
        %v3612 = vld [vmem:[%s317 + $0x1e0] sm:$0xf]
        %v3613 = vld [vmem:[%s317 + $0x1e4] sm:$0xf]
        %v3614 = vld [vmem:[%s317 + $0x1e8] sm:$0xf]
        %v3615 = vld [vmem:[%s317 + $0x1ec] sm:$0xf]
        %v3616 = vld [vmem:[%s317 + $0x1f0] sm:$0xf]
        %v3617 = vld [vmem:[%s317 + $0x1f4] sm:$0xf]
        %v3618 = vld [vmem:[%s317 + $0x1f8] sm:$0xf]
        %v3619 = vld [vmem:[%s317 + $0x1fc] sm:$0xf]
        %v3620 = vld [vmem:[%s317 + $0x200] sm:$0xf]
        %v3621 = vld [vmem:[%s317 + $0x204] sm:$0xf]
        %v3622 = vld [vmem:[%s317 + $0x208] sm:$0xf]
        %v3623 = vld [vmem:[%s317 + $0x20c] sm:$0xf]
        %v3624 = vld [vmem:[%s317 + $0x210] sm:$0xf]
        %v3625 = vld [vmem:[%s317 + $0x214] sm:$0xf]
        %v3626 = vld [vmem:[%s317 + $0x218] sm:$0xf]
        %v3627 = vld [vmem:[%s317 + $0x21c] sm:$0xf]
        %v3628 = vld [vmem:[%s317 + $0x220] sm:$0xf]
        %v3629 = vld [vmem:[%s317 + $0x224] sm:$0xf]
        %v3630 = vld [vmem:[%s317 + $0x228] sm:$0xf]
        %v3631 = vld [vmem:[%s317 + $0x22c] sm:$0xf]
        %v3632 = vld [vmem:[%s317 + $0x230] sm:$0xf]
        %v3633 = vld [vmem:[%s317 + $0x234] sm:$0xf]
        %v3634 = vld [vmem:[%s317 + $0x238] sm:$0xf]
        %v3635 = vld [vmem:[%s317 + $0x23c] sm:$0xf]
        %v3636 = vld [vmem:[%s317 + $0x240] sm:$0xf]
        %v3637 = vld [vmem:[%s317 + $0x244] sm:$0xf]
        %v3638 = vld [vmem:[%s317 + $0x248] sm:$0xf]
        %v3639 = vld [vmem:[%s317 + $0x24c] sm:$0xf]
        %v3640 = vld [vmem:[%s317 + $0x250] sm:$0xf]
        %v3641 = vld [vmem:[%s317 + $0x254] sm:$0xf]
        %v3642 = vld [vmem:[%s317 + $0x258] sm:$0xf]
        %v3643 = vld [vmem:[%s317 + $0x25c] sm:$0xf]
        %v3644 = vld [vmem:[%s317 + $0x260] sm:$0xf]
        %v3645 = vld [vmem:[%s317 + $0x264] sm:$0xf]
        %v3646 = vld [vmem:[%s317 + $0x268] sm:$0xf]
        %v3647 = vld [vmem:[%s317 + $0x26c] sm:$0xf]
        %v3648 = vld [vmem:[%s317 + $0x270] sm:$0xf]
        %v3649 = vld [vmem:[%s317 + $0x274] sm:$0xf]
        %v3650 = vld [vmem:[%s317 + $0x278] sm:$0xf]
        %v3651 = vld [vmem:[%s317 + $0x27c] sm:$0xf]
        %v3652 = vld [vmem:[%s317 + $0x280] sm:$0xf]
        %v3653 = vld [vmem:[%s317 + $0x284] sm:$0xf]
        %v3654 = vld [vmem:[%s317 + $0x288] sm:$0xf]
        %v3655 = vld [vmem:[%s317 + $0x28c] sm:$0xf]
        %v3656 = vld [vmem:[%s317 + $0x290] sm:$0xf]
        %v3657 = vld [vmem:[%s317 + $0x294] sm:$0xf]
        %v3658 = vld [vmem:[%s317 + $0x298] sm:$0xf]
        %v3659 = vld [vmem:[%s317 + $0x29c] sm:$0xf]
        %v3660 = vld [vmem:[%s317 + $0x2a0] sm:$0xf]
        %v3661 = vld [vmem:[%s317 + $0x2a4] sm:$0xf]
        %v3662 = vld [vmem:[%s317 + $0x2a8] sm:$0xf]
        %v3663 = vld [vmem:[%s317 + $0x2ac] sm:$0xf]
        %v3664 = vld [vmem:[%s317 + $0x2b0] sm:$0xf]
        %v3665 = vld [vmem:[%s317 + $0x2b4] sm:$0xf]
        %v3666 = vld [vmem:[%s317 + $0x2b8] sm:$0xf]
        %v3667 = vld [vmem:[%s317 + $0x2bc] sm:$0xf]
        %v3668 = vld [vmem:[%s317 + $0x2c0] sm:$0xf]
        %v3669 = vld [vmem:[%s317 + $0x2c4] sm:$0xf]
        %v3670 = vld [vmem:[%s317 + $0x2c8] sm:$0xf]
        %v3671 = vld [vmem:[%s317 + $0x2cc] sm:$0xf]
        %v3672 = vld [vmem:[%s317 + $0x2d0] sm:$0xf]
        %v3673 = vld [vmem:[%s317 + $0x2d4] sm:$0xf]
        %v3674 = vld [vmem:[%s317 + $0x2d8] sm:$0xf]
        %v3675 = vld [vmem:[%s317 + $0x2dc] sm:$0xf]
        %v3676 = vld [vmem:[%s317 + $0x2e0] sm:$0xf]
        %v3677 = vld [vmem:[%s317 + $0x2e4] sm:$0xf]
        %v3678 = vld [vmem:[%s317 + $0x2e8] sm:$0xf]
        %v3679 = vld [vmem:[%s317 + $0x2ec] sm:$0xf]
        %v3680 = vld [vmem:[%s317 + $0x2f0] sm:$0xf]
        %v3681 = vld [vmem:[%s317 + $0x2f4] sm:$0xf]
        %v3682 = vld [vmem:[%s317 + $0x2f8] sm:$0xf]
        %v3683 = vld [vmem:[%s317 + $0x2fc] sm:$0xf]
        %v3684 = vld [vmem:[%s317 + $0x300] sm:$0xf]
        %v3685 = vld [vmem:[%s317 + $0x304] sm:$0xf]
        %v3686 = vld [vmem:[%s317 + $0x308] sm:$0xf]
        %v3687 = vld [vmem:[%s317 + $0x30c] sm:$0xf]
        %v3688 = vld [vmem:[%s317 + $0x310] sm:$0xf]
        %v3689 = vld [vmem:[%s317 + $0x314] sm:$0xf]
        %v3690 = vld [vmem:[%s317 + $0x318] sm:$0xf]
        %v3691 = vld [vmem:[%s317 + $0x31c] sm:$0xf]
        %v3692 = vld [vmem:[%s317 + $0x320] sm:$0xf]
        %v3693 = vld [vmem:[%s317 + $0x324] sm:$0xf]
        %v3694 = vld [vmem:[%s317 + $0x328] sm:$0xf]
        %v3695 = vld [vmem:[%s317 + $0x32c] sm:$0xf]
        %v3696 = vld [vmem:[%s317 + $0x330] sm:$0xf]
        %v3697 = vld [vmem:[%s317 + $0x334] sm:$0xf]
        %v3698 = vld [vmem:[%s317 + $0x338] sm:$0xf]
        %v3699 = vld [vmem:[%s317 + $0x33c] sm:$0xf]
        %v3700 = vld [vmem:[%s317 + $0x340] sm:$0xf]
        %v3701 = vld [vmem:[%s317 + $0x344] sm:$0xf]
        %v3702 = vld [vmem:[%s317 + $0x348] sm:$0xf]
        %v3703 = vld [vmem:[%s317 + $0x34c] sm:$0xf]
        %v3704 = vld [vmem:[%s317 + $0x350] sm:$0xf]
        %v3705 = vld [vmem:[%s317 + $0x354] sm:$0xf]
        %v3706 = vld [vmem:[%s317 + $0x358] sm:$0xf]
        %v3707 = vld [vmem:[%s317 + $0x35c] sm:$0xf]
        %v3708 = vld [vmem:[%s317 + $0x360] sm:$0xf]
        %v3709 = vld [vmem:[%s317 + $0x364] sm:$0xf]
        %v3710 = vld [vmem:[%s317 + $0x368] sm:$0xf]
        %v3711 = vld [vmem:[%s317 + $0x36c] sm:$0xf]
        %v3712 = vld [vmem:[%s317 + $0x370] sm:$0xf]
        %v3713 = vld [vmem:[%s317 + $0x374] sm:$0xf]
        %v3714 = vld [vmem:[%s317 + $0x378] sm:$0xf]
        %v3715 = vld [vmem:[%s317 + $0x37c] sm:$0xf]
        %v3716 = vld [vmem:[%s317 + $0x380] sm:$0xf]
        %v3717 = vld [vmem:[%s317 + $0x384] sm:$0xf]
        %v3718 = vld [vmem:[%s317 + $0x388] sm:$0xf]
        %v3719 = vld [vmem:[%s317 + $0x38c] sm:$0xf]
        %v3720 = vld [vmem:[%s317 + $0x390] sm:$0xf]
        %v3721 = vld [vmem:[%s317 + $0x394] sm:$0xf]
        %v3722 = vld [vmem:[%s317 + $0x398] sm:$0xf]
        %v3723 = vld [vmem:[%s317 + $0x39c] sm:$0xf]
        %v3724 = vld [vmem:[%s317 + $0x3a0] sm:$0xf]
        %v3725 = vld [vmem:[%s317 + $0x3a4] sm:$0xf]
        %v3726 = vld [vmem:[%s317 + $0x3a8] sm:$0xf]
        %v3727 = vld [vmem:[%s317 + $0x3ac] sm:$0xf]
        %v3728 = vld [vmem:[%s317 + $0x3b0] sm:$0xf]
        %v3729 = vld [vmem:[%s317 + $0x3b4] sm:$0xf]
        %v3730 = vld [vmem:[%s317 + $0x3b8] sm:$0xf]
        %v3731 = vld [vmem:[%s317 + $0x3bc] sm:$0xf]
        %v3732 = vld [vmem:[%s317 + $0x3c0] sm:$0xf]
        %v3733 = vld [vmem:[%s317 + $0x3c4] sm:$0xf]
        %v3734 = vld [vmem:[%s317 + $0x3c8] sm:$0xf]
        %v3735 = vld [vmem:[%s317 + $0x3cc] sm:$0xf]
        %v3736 = vld [vmem:[%s317 + $0x3d0] sm:$0xf]
        %v3737 = vld [vmem:[%s317 + $0x3d4] sm:$0xf]
        %v3738 = vld [vmem:[%s317 + $0x3d8] sm:$0xf]
        %v3739 = vld [vmem:[%s317 + $0x3dc] sm:$0xf]
        %v3740 = vld [vmem:[%s317 + $0x3e0] sm:$0xf]
        %v3741 = vld [vmem:[%s317 + $0x3e4] sm:$0xf]
        %v3742 = vld [vmem:[%s317 + $0x3e8] sm:$0xf]
        %v3743 = vld [vmem:[%s317 + $0x3ec] sm:$0xf]
        %v3744 = vld [vmem:[%s317 + $0x3f0] sm:$0xf]
        %v3745 = vld [vmem:[%s317 + $0x3f4] sm:$0xf]
        %v3746 = vld [vmem:[%s317 + $0x3f8] sm:$0xf]
        %v3747 = vld [vmem:[%s317 + $0x3fc] sm:$0xf]
        %v3748 = vld [vmem:[%s317 + $0x400] sm:$0xf]
        %v3749 = vld [vmem:[%s317 + $0x404] sm:$0xf]
        %v3750 = vld [vmem:[%s317 + $0x408] sm:$0xf]
        %v3751 = vld [vmem:[%s317 + $0x40c] sm:$0xf]
        %v3752 = vld [vmem:[%s317 + $0x410] sm:$0xf]
        %v3753 = vld [vmem:[%s317 + $0x414] sm:$0xf]
        %v3754 = vld [vmem:[%s317 + $0x418] sm:$0xf]
        %v3755 = vld [vmem:[%s317 + $0x41c] sm:$0xf]
        %v3756 = vld [vmem:[%s317 + $0x420] sm:$0xf]
        %v3757 = vld [vmem:[%s317 + $0x424] sm:$0xf]
        %v3758 = vld [vmem:[%s317 + $0x428] sm:$0xf]
        %v3759 = vld [vmem:[%s317 + $0x42c] sm:$0xf]
        %v3760 = vld [vmem:[%s317 + $0x430] sm:$0xf]
        %v3761 = vld [vmem:[%s317 + $0x434] sm:$0xf]
        %v3762 = vld [vmem:[%s317 + $0x438] sm:$0xf]
        %v3763 = vld [vmem:[%s317 + $0x43c] sm:$0xf]
        %v3764 = vld [vmem:[%s317 + $0x440] sm:$0xf]
        %v3765 = vld [vmem:[%s317 + $0x444] sm:$0xf]
        %v3766 = vld [vmem:[%s317 + $0x448] sm:$0xf]
        %v3767 = vld [vmem:[%s317 + $0x44c] sm:$0xf]
        %v3768 = vld [vmem:[%s317 + $0x450] sm:$0xf]
        %v3769 = vld [vmem:[%s317 + $0x454] sm:$0xf]
        %v3770 = vld [vmem:[%s317 + $0x458] sm:$0xf]
        %v3771 = vld [vmem:[%s317 + $0x45c] sm:$0xf]
        %v3772 = vld [vmem:[%s317 + $0x460] sm:$0xf]
        %v3773 = vld [vmem:[%s317 + $0x464] sm:$0xf]
        %v3774 = vld [vmem:[%s317 + $0x468] sm:$0xf]
        %v3775 = vld [vmem:[%s317 + $0x46c] sm:$0xf]
        %v3776 = vld [vmem:[%s317 + $0x470] sm:$0xf]
        %v3777 = vld [vmem:[%s317 + $0x474] sm:$0xf]
        %v3778 = vld [vmem:[%s317 + $0x478] sm:$0xf]
        %v3779 = vld [vmem:[%s317 + $0x47c] sm:$0xf]
        %v3780 = vld [vmem:[%s317 + $0x480] sm:$0xf]
        %v3781 = vld [vmem:[%s317 + $0x484] sm:$0xf]
        %v3782 = vld [vmem:[%s317 + $0x488] sm:$0xf]
        %v3783 = vld [vmem:[%s317 + $0x48c] sm:$0xf]
        %v3784 = vld [vmem:[%s317 + $0x490] sm:$0xf]
        %v3785 = vld [vmem:[%s317 + $0x494] sm:$0xf]
        %v3786 = vld [vmem:[%s317 + $0x498] sm:$0xf]
        %v3787 = vld [vmem:[%s317 + $0x49c] sm:$0xf]
        %v3788 = vld [vmem:[%s317 + $0x4a0] sm:$0xf]
        %v3789 = vld [vmem:[%s317 + $0x4a4] sm:$0xf]
        %v3790 = vld [vmem:[%s317 + $0x4a8] sm:$0xf]
        %v3791 = vld [vmem:[%s317 + $0x4ac] sm:$0xf]
        %v3792 = vld [vmem:[%s317 + $0x4b0] sm:$0xf]
        %v3793 = vld [vmem:[%s317 + $0x4b4] sm:$0xf]
        %v3794 = vld [vmem:[%s317 + $0x4b8] sm:$0xf]
        %v3795 = vld [vmem:[%s317 + $0x4bc] sm:$0xf]
        %v3796 = vld [vmem:[%s317 + $0x4c0] sm:$0xf]
        %v3797 = vld [vmem:[%s317 + $0x4c4] sm:$0xf]
        %v3798 = vld [vmem:[%s317 + $0x4c8] sm:$0xf]
        %v3799 = vld [vmem:[%s317 + $0x4cc] sm:$0xf]
        %v3800 = vld [vmem:[%s317 + $0x4d0] sm:$0xf]
        %v3801 = vld [vmem:[%s317 + $0x4d4] sm:$0xf]
        %v3802 = vld [vmem:[%s317 + $0x4d8] sm:$0xf]
        %v3803 = vld [vmem:[%s317 + $0x4dc] sm:$0xf]
        %v3804 = vld [vmem:[%s317 + $0x4e0] sm:$0xf]
        %v3805 = vld [vmem:[%s317 + $0x4e4] sm:$0xf]
        %v3806 = vld [vmem:[%s317 + $0x4e8] sm:$0xf]
        %v3807 = vld [vmem:[%s317 + $0x4ec] sm:$0xf]
        %v3808 = vld [vmem:[%s317 + $0x4f0] sm:$0xf]
        %v3809 = vld [vmem:[%s317 + $0x4f4] sm:$0xf]
        %v3810 = vld [vmem:[%s317 + $0x4f8] sm:$0xf]
        %v3811 = vld [vmem:[%s317 + $0x4fc] sm:$0xf]
        %v3812 = vld [vmem:[%s317 + $0x500] sm:$0xf]
        %v3813 = vld [vmem:[%s317 + $0x504] sm:$0xf]
        %v3814 = vld [vmem:[%s317 + $0x508] sm:$0xf]
        %v3815 = vld [vmem:[%s317 + $0x50c] sm:$0xf]
        %v3816 = vld [vmem:[%s317 + $0x510] sm:$0xf]
        %v3817 = vld [vmem:[%s317 + $0x514] sm:$0xf]
        %v3818 = vld [vmem:[%s317 + $0x518] sm:$0xf]
        %v3819 = vld [vmem:[%s317 + $0x51c] sm:$0xf]
        %v3820 = vld [vmem:[%s317 + $0x520] sm:$0xf]
        %v3821 = vld [vmem:[%s317 + $0x524] sm:$0xf]
        %v3822 = vld [vmem:[%s317 + $0x528] sm:$0xf]
        %v3823 = vld [vmem:[%s317 + $0x52c] sm:$0xf]
        %v3824 = vld [vmem:[%s317 + $0x530] sm:$0xf]
        %v3825 = vld [vmem:[%s317 + $0x534] sm:$0xf]
        %v3826 = vld [vmem:[%s317 + $0x538] sm:$0xf]
        %v3827 = vld [vmem:[%s317 + $0x53c] sm:$0xf]
        %v3828 = vld [vmem:[%s317 + $0x540] sm:$0xf]
        %v3829 = vld [vmem:[%s317 + $0x544] sm:$0xf]
        %v3830 = vld [vmem:[%s317 + $0x548] sm:$0xf]
        %v3831 = vld [vmem:[%s317 + $0x54c] sm:$0xf]
        %v3832 = vld [vmem:[%s317 + $0x550] sm:$0xf]
        %v3833 = vld [vmem:[%s317 + $0x554] sm:$0xf]
        %v3834 = vld [vmem:[%s317 + $0x558] sm:$0xf]
        %v3835 = vld [vmem:[%s317 + $0x55c] sm:$0xf]
        %v3836 = vld [vmem:[%s317 + $0x560] sm:$0xf]
        %v3837 = vld [vmem:[%s317 + $0x564] sm:$0xf]
        %v3838 = vld [vmem:[%s317 + $0x568] sm:$0xf]
        %v3839 = vld [vmem:[%s317 + $0x56c] sm:$0xf]
        %v3840 = vld [vmem:[%s317 + $0x570] sm:$0xf]
        %v3841 = vld [vmem:[%s317 + $0x574] sm:$0xf]
        %v3842 = vld [vmem:[%s317 + $0x578] sm:$0xf]
        %v3843 = vld [vmem:[%s317 + $0x57c] sm:$0xf]
        %v3844 = vld [vmem:[%s317 + $0x580] sm:$0xf]
        %v3845 = vld [vmem:[%s317 + $0x584] sm:$0xf]
        %v3846 = vld [vmem:[%s317 + $0x588] sm:$0xf]
        %v3847 = vld [vmem:[%s317 + $0x58c] sm:$0xf]
        %v3848 = vld [vmem:[%s317 + $0x590] sm:$0xf]
        %v3849 = vld [vmem:[%s317 + $0x594] sm:$0xf]
        %v3850 = vld [vmem:[%s317 + $0x598] sm:$0xf]
        %v3851 = vld [vmem:[%s317 + $0x59c] sm:$0xf]
        %v3852 = vld [vmem:[%s317 + $0x5a0] sm:$0xf]
        %v3853 = vld [vmem:[%s317 + $0x5a4] sm:$0xf]
        %v3854 = vld [vmem:[%s317 + $0x5a8] sm:$0xf]
        %v3855 = vld [vmem:[%s317 + $0x5ac] sm:$0xf]
        %v3856 = vld [vmem:[%s317 + $0x5b0] sm:$0xf]
        %v3857 = vld [vmem:[%s317 + $0x5b4] sm:$0xf]
        %v3858 = vld [vmem:[%s317 + $0x5b8] sm:$0xf]
        %v3859 = vld [vmem:[%s317 + $0x5bc] sm:$0xf]
        %v3860 = vld [vmem:[%s317 + $0x5c0] sm:$0xf]
        %v3861 = vld [vmem:[%s317 + $0x5c4] sm:$0xf]
        %v3862 = vld [vmem:[%s317 + $0x5c8] sm:$0xf]
        %v3863 = vld [vmem:[%s317 + $0x5cc] sm:$0xf]
        %v3864 = vld [vmem:[%s317 + $0x5d0] sm:$0xf]
        %v3865 = vld [vmem:[%s317 + $0x5d4] sm:$0xf]
        %v3866 = vld [vmem:[%s317 + $0x5d8] sm:$0xf]
        %v3867 = vld [vmem:[%s317 + $0x5dc] sm:$0xf]
        %v3868 = vld [vmem:[%s317 + $0x5e0] sm:$0xf]
        %v3869 = vld [vmem:[%s317 + $0x5e4] sm:$0xf]
        %v3870 = vld [vmem:[%s317 + $0x5e8] sm:$0xf]
        %v3871 = vld [vmem:[%s317 + $0x5ec] sm:$0xf]
        %v3872 = vld [vmem:[%s317 + $0x5f0] sm:$0xf]
        %v3873 = vld [vmem:[%s317 + $0x5f4] sm:$0xf]
        %v3874 = vld [vmem:[%s317 + $0x5f8] sm:$0xf]
        %v3875 = vld [vmem:[%s317 + $0x5fc] sm:$0xf]
        %v3876 = vld [vmem:[%s317 + $0x600] sm:$0xf]
        %v3877 = vld [vmem:[%s317 + $0x604] sm:$0xf]
        %v3878 = vld [vmem:[%s317 + $0x608] sm:$0xf]
        %v3879 = vld [vmem:[%s317 + $0x60c] sm:$0xf]
        %v3880 = vld [vmem:[%s317 + $0x610] sm:$0xf]
        %v3881 = vld [vmem:[%s317 + $0x614] sm:$0xf]
        %v3882 = vld [vmem:[%s317 + $0x618] sm:$0xf]
        %v3883 = vld [vmem:[%s317 + $0x61c] sm:$0xf]
        %v3884 = vld [vmem:[%s317 + $0x620] sm:$0xf]
        %v3885 = vld [vmem:[%s317 + $0x624] sm:$0xf]
        %v3886 = vld [vmem:[%s317 + $0x628] sm:$0xf]
        %v3887 = vld [vmem:[%s317 + $0x62c] sm:$0xf]
        %v3888 = vld [vmem:[%s317 + $0x630] sm:$0xf]
        %v3889 = vld [vmem:[%s317 + $0x634] sm:$0xf]
        %v3890 = vld [vmem:[%s317 + $0x638] sm:$0xf]
        %v3891 = vld [vmem:[%s317 + $0x63c] sm:$0xf]
        %v3905 = vunpack.c.l.b16 %v3479
        %v3906 = vunpack.c.h.b16 %v3479
        %v3907 = vunpack.c.l.b16 %v3480
        %v3908 = vunpack.c.h.b16 %v3480
        %v3909 = vunpack.c.l.b16 %v3481
        %v3910 = vunpack.c.h.b16 %v3481
        %v3911 = vunpack.c.l.b16 %v3482
        %v3912 = vunpack.c.h.b16 %v3482
        %v3913 = vunpack.c.l.b16 %v3483
        %v3914 = vunpack.c.h.b16 %v3483
        %v3915 = vunpack.c.l.b16 %v3484
        %v3916 = vunpack.c.h.b16 %v3484
        %v3917 = vunpack.c.l.b16 %v3485
        %v3918 = vunpack.c.h.b16 %v3485
        %v3919 = vunpack.c.l.b16 %v3486
        %v3920 = vunpack.c.h.b16 %v3486
        %v3921 = vunpack.c.l.b16 %v3487
        %v3922 = vunpack.c.h.b16 %v3487
        %v3923 = vunpack.c.l.b16 %v3488
        %v3924 = vunpack.c.h.b16 %v3488
        %v3925 = vunpack.c.l.b16 %v3489
        %v3926 = vunpack.c.h.b16 %v3489
        %v3927 = vunpack.c.l.b16 %v3490
        %v3928 = vunpack.c.h.b16 %v3490
        %v3929 = vunpack.c.l.b16 %v3491
        %v3930 = vpack.c.b16 %v3905, %v3905
        %v3931 = vpack.c.b16 %v3906, %v3906
        %v3932 = vpack.c.b16 %v3907, %v3907
        %v3933 = vpack.c.b16 %v3908, %v3908
        %v3934 = vpack.c.b16 %v3909, %v3909
        %v3935 = vpack.c.b16 %v3910, %v3910
        %v3936 = vpack.c.b16 %v3911, %v3911
        %v3937 = vpack.c.b16 %v3912, %v3912
        %v3938 = vpack.c.b16 %v3913, %v3913
        %v3939 = vpack.c.b16 %v3914, %v3914
        %v3940 = vpack.c.b16 %v3915, %v3915
        %v3941 = vpack.c.b16 %v3916, %v3916
        %v3942 = vpack.c.b16 %v3917, %v3917
        %v3943 = vpack.c.b16 %v3918, %v3918
        %v3944 = vpack.c.b16 %v3919, %v3919
        %v3945 = vpack.c.b16 %v3920, %v3920
        %v3946 = vpack.c.b16 %v3921, %v3921
        %v3947 = vpack.c.b16 %v3922, %v3922
        %v3948 = vpack.c.b16 %v3923, %v3923
        %v3949 = vpack.c.b16 %v3924, %v3924
        %v3950 = vpack.c.b16 %v3925, %v3925
        %v3951 = vpack.c.b16 %v3926, %v3926
        %v3952 = vpack.c.b16 %v3927, %v3927
        %v3953 = vpack.c.b16 %v3928, %v3928
        %v3954 = vpack.c.b16 %v3929, %v3929
        %v4380 = vunpack.c.l.b16 %v3492
        %v4381 = vunpack.c.l.b16 %v3493
        %v4382 = vunpack.c.l.b16 %v3494
        %v4383 = vunpack.c.l.b16 %v3495
        %v4384 = vunpack.c.l.b16 %v3496
        %v4385 = vunpack.c.l.b16 %v3497
        %v4386 = vunpack.c.l.b16 %v3498
        %v4387 = vunpack.c.l.b16 %v3499
        %v4388 = vunpack.c.l.b16 %v3500
        %v4389 = vunpack.c.l.b16 %v3501
        %v4390 = vunpack.c.l.b16 %v3502
        %v4391 = vunpack.c.l.b16 %v3503
        %v4392 = vunpack.c.l.b16 %v3504
        %v4393 = vunpack.c.l.b16 %v3505
        %v4394 = vunpack.c.l.b16 %v3506
        %v4395 = vunpack.c.l.b16 %v3507
        %v4396 = vunpack.c.l.b16 %v3508
        %v4397 = vunpack.c.l.b16 %v3509
        %v4398 = vunpack.c.l.b16 %v3510
        %v4399 = vunpack.c.l.b16 %v3511
        %v4400 = vunpack.c.l.b16 %v3512
        %v4401 = vunpack.c.l.b16 %v3513
        %v4402 = vunpack.c.l.b16 %v3514
        %v4403 = vunpack.c.l.b16 %v3515
        %v4404 = vunpack.c.l.b16 %v3516
        %v4405 = vunpack.c.l.b16 %v3517
        %v4406 = vunpack.c.l.b16 %v3518
        %v4407 = vunpack.c.l.b16 %v3519
        %v4408 = vunpack.c.l.b16 %v3520
        %v4409 = vunpack.c.l.b16 %v3521
        %v4410 = vunpack.c.l.b16 %v3522
        %v4411 = vunpack.c.l.b16 %v3523
        %v4412 = vunpack.c.l.b16 %v3524
        %v4413 = vunpack.c.l.b16 %v3525
        %v4414 = vunpack.c.l.b16 %v3526
        %v4415 = vunpack.c.l.b16 %v3527
        %v4416 = vunpack.c.l.b16 %v3528
        %v4417 = vunpack.c.l.b16 %v3529
        %v4418 = vunpack.c.l.b16 %v3530
        %v4419 = vunpack.c.l.b16 %v3531
        %v4420 = vunpack.c.l.b16 %v3532
        %v4421 = vunpack.c.l.b16 %v3533
        %v4422 = vunpack.c.l.b16 %v3534
        %v4423 = vunpack.c.l.b16 %v3535
        %v4424 = vunpack.c.l.b16 %v3536
        %v4425 = vunpack.c.l.b16 %v3537
        %v4426 = vunpack.c.l.b16 %v3538
        %v4427 = vunpack.c.l.b16 %v3539
        %v4428 = vunpack.c.l.b16 %v3540
        %v4429 = vunpack.c.l.b16 %v3541
        %v4430 = vunpack.c.l.b16 %v3542
        %v4431 = vunpack.c.l.b16 %v3543
        %v4432 = vunpack.c.l.b16 %v3544
        %v4433 = vunpack.c.l.b16 %v3545
        %v4434 = vunpack.c.l.b16 %v3546
        %v4435 = vunpack.c.l.b16 %v3547
        %v4436 = vunpack.c.l.b16 %v3548
        %v4437 = vunpack.c.l.b16 %v3549
        %v4438 = vunpack.c.l.b16 %v3550
        %v4439 = vunpack.c.l.b16 %v3551
        %v4440 = vunpack.c.l.b16 %v3552
        %v4441 = vunpack.c.l.b16 %v3553
        %v4442 = vunpack.c.l.b16 %v3554
        %v4443 = vunpack.c.l.b16 %v3555
        %v4444 = vunpack.c.l.b16 %v3556
        %v4445 = vunpack.c.l.b16 %v3557
        %v4446 = vunpack.c.l.b16 %v3558
        %v4447 = vunpack.c.l.b16 %v3559
        %v4448 = vunpack.c.l.b16 %v3560
        %v4449 = vunpack.c.l.b16 %v3561
        %v4450 = vunpack.c.l.b16 %v3562
        %v4451 = vunpack.c.l.b16 %v3563
        %v4452 = vunpack.c.l.b16 %v3564
        %v4453 = vunpack.c.l.b16 %v3565
        %v4454 = vunpack.c.l.b16 %v3566
        %v4455 = vunpack.c.l.b16 %v3567
        %v4456 = vunpack.c.l.b16 %v3568
        %v4457 = vunpack.c.l.b16 %v3569
        %v4458 = vunpack.c.l.b16 %v3570
        %v4459 = vunpack.c.l.b16 %v3571
        %v4460 = vunpack.c.l.b16 %v3572
        %v4461 = vunpack.c.l.b16 %v3573
        %v4462 = vunpack.c.l.b16 %v3574
        %v4463 = vunpack.c.l.b16 %v3575
        %v4464 = vunpack.c.l.b16 %v3576
        %v4465 = vunpack.c.l.b16 %v3577
        %v4466 = vunpack.c.l.b16 %v3578
        %v4467 = vunpack.c.l.b16 %v3579
        %v4468 = vunpack.c.l.b16 %v3580
        %v4469 = vunpack.c.l.b16 %v3581
        %v4470 = vunpack.c.l.b16 %v3582
        %v4471 = vunpack.c.l.b16 %v3583
        %v4472 = vunpack.c.l.b16 %v3584
        %v4473 = vunpack.c.l.b16 %v3585
        %v4474 = vunpack.c.l.b16 %v3586
        %v4475 = vunpack.c.l.b16 %v3587
        %v4476 = vunpack.c.l.b16 %v3588
        %v4477 = vunpack.c.l.b16 %v3589
        %v4478 = vunpack.c.l.b16 %v3590
        %v4479 = vunpack.c.l.b16 %v3591
        %v4480 = vunpack.c.l.b16 %v3592
        %v4481 = vunpack.c.l.b16 %v3593
        %v4482 = vunpack.c.l.b16 %v3594
        %v4483 = vunpack.c.l.b16 %v3595
        %v4484 = vunpack.c.l.b16 %v3596
        %v4485 = vunpack.c.l.b16 %v3597
        %v4486 = vunpack.c.l.b16 %v3598
        %v4487 = vunpack.c.l.b16 %v3599
        %v4488 = vunpack.c.l.b16 %v3600
        %v4489 = vunpack.c.l.b16 %v3601
        %v4490 = vunpack.c.l.b16 %v3602
        %v4491 = vunpack.c.l.b16 %v3603
        %v4492 = vunpack.c.l.b16 %v3604
        %v4493 = vunpack.c.l.b16 %v3605
        %v4494 = vunpack.c.l.b16 %v3606
        %v4495 = vunpack.c.l.b16 %v3607
        %v4496 = vunpack.c.l.b16 %v3608
        %v4497 = vunpack.c.l.b16 %v3609
        %v4498 = vunpack.c.l.b16 %v3610
        %v4499 = vunpack.c.l.b16 %v3611
        %v4500 = vunpack.c.l.b16 %v3612
        %v4501 = vunpack.c.l.b16 %v3613
        %v4502 = vunpack.c.l.b16 %v3614
        %v4503 = vunpack.c.l.b16 %v3615
        %v4504 = vunpack.c.l.b16 %v3616
        %v4505 = vunpack.c.l.b16 %v3617
        %v4506 = vunpack.c.l.b16 %v3618
        %v4507 = vunpack.c.l.b16 %v3619
        %v4508 = vunpack.c.l.b16 %v3620
        %v4509 = vunpack.c.l.b16 %v3621
        %v4510 = vunpack.c.l.b16 %v3622
        %v4511 = vunpack.c.l.b16 %v3623
        %v4512 = vunpack.c.l.b16 %v3624
        %v4513 = vunpack.c.l.b16 %v3625
        %v4514 = vunpack.c.l.b16 %v3626
        %v4515 = vunpack.c.l.b16 %v3627
        %v4516 = vunpack.c.l.b16 %v3628
        %v4517 = vunpack.c.l.b16 %v3629
        %v4518 = vunpack.c.l.b16 %v3630
        %v4519 = vunpack.c.l.b16 %v3631
        %v4520 = vunpack.c.l.b16 %v3632
        %v4521 = vunpack.c.l.b16 %v3633
        %v4522 = vunpack.c.l.b16 %v3634
        %v4523 = vunpack.c.l.b16 %v3635
        %v4524 = vunpack.c.l.b16 %v3636
        %v4525 = vunpack.c.l.b16 %v3637
        %v4526 = vunpack.c.l.b16 %v3638
        %v4527 = vunpack.c.l.b16 %v3639
        %v4528 = vunpack.c.l.b16 %v3640
        %v4529 = vunpack.c.l.b16 %v3641
        %v4530 = vunpack.c.l.b16 %v3642
        %v4531 = vunpack.c.l.b16 %v3643
        %v4532 = vunpack.c.l.b16 %v3644
        %v4533 = vunpack.c.l.b16 %v3645
        %v4534 = vunpack.c.l.b16 %v3646
        %v4535 = vunpack.c.l.b16 %v3647
        %v4536 = vunpack.c.l.b16 %v3648
        %v4537 = vunpack.c.l.b16 %v3649
        %v4538 = vunpack.c.l.b16 %v3650
        %v4539 = vunpack.c.l.b16 %v3651
        %v4540 = vunpack.c.l.b16 %v3652
        %v4541 = vunpack.c.l.b16 %v3653
        %v4542 = vunpack.c.l.b16 %v3654
        %v4543 = vunpack.c.l.b16 %v3655
        %v4544 = vunpack.c.l.b16 %v3656
        %v4545 = vunpack.c.l.b16 %v3657
        %v4546 = vunpack.c.l.b16 %v3658
        %v4547 = vunpack.c.l.b16 %v3659
        %v4548 = vunpack.c.l.b16 %v3660
        %v4549 = vunpack.c.l.b16 %v3661
        %v4550 = vunpack.c.l.b16 %v3662
        %v4551 = vunpack.c.l.b16 %v3663
        %v4552 = vunpack.c.l.b16 %v3664
        %v4553 = vunpack.c.l.b16 %v3665
        %v4554 = vunpack.c.l.b16 %v3666
        %v4555 = vunpack.c.l.b16 %v3667
        %v4556 = vunpack.c.l.b16 %v3668
        %v4557 = vunpack.c.l.b16 %v3669
        %v4558 = vunpack.c.l.b16 %v3670
        %v4559 = vunpack.c.l.b16 %v3671
        %v4560 = vunpack.c.l.b16 %v3672
        %v4561 = vunpack.c.l.b16 %v3673
        %v4562 = vunpack.c.l.b16 %v3674
        %v4563 = vunpack.c.l.b16 %v3675
        %v4564 = vunpack.c.l.b16 %v3676
        %v4565 = vunpack.c.l.b16 %v3677
        %v4566 = vunpack.c.l.b16 %v3678
        %v4567 = vunpack.c.l.b16 %v3679
        %v4568 = vunpack.c.l.b16 %v3680
        %v4569 = vunpack.c.l.b16 %v3681
        %v4570 = vunpack.c.l.b16 %v3682
        %v4571 = vunpack.c.l.b16 %v3683
        %v4572 = vunpack.c.l.b16 %v3684
        %v4573 = vunpack.c.l.b16 %v3685
        %v4574 = vunpack.c.l.b16 %v3686
        %v4575 = vunpack.c.l.b16 %v3687
        %v4576 = vunpack.c.l.b16 %v3688
        %v4577 = vunpack.c.l.b16 %v3689
        %v4578 = vunpack.c.l.b16 %v3690
        %v4579 = vunpack.c.l.b16 %v3691
        %v4580 = vunpack.c.l.b16 %v3692
        %v4581 = vunpack.c.l.b16 %v3693
        %v4582 = vunpack.c.l.b16 %v3694
        %v4583 = vunpack.c.l.b16 %v3695
        %v4584 = vunpack.c.l.b16 %v3696
        %v4585 = vunpack.c.l.b16 %v3697
        %v4586 = vunpack.c.l.b16 %v3698
        %v4587 = vunpack.c.l.b16 %v3699
        %v4588 = vunpack.c.l.b16 %v3700
        %v4589 = vunpack.c.l.b16 %v3701
        %v4590 = vunpack.c.l.b16 %v3702
        %v4591 = vunpack.c.l.b16 %v3703
        %v4592 = vunpack.c.l.b16 %v3704
        %v4593 = vunpack.c.l.b16 %v3705
        %v4594 = vunpack.c.l.b16 %v3706
        %v4595 = vunpack.c.l.b16 %v3707
        %v4596 = vunpack.c.l.b16 %v3708
        %v4597 = vunpack.c.l.b16 %v3709
        %v4598 = vunpack.c.l.b16 %v3710
        %v4599 = vunpack.c.l.b16 %v3711
        %v4600 = vunpack.c.l.b16 %v3712
        %v4601 = vunpack.c.l.b16 %v3713
        %v4602 = vunpack.c.l.b16 %v3714
        %v4603 = vunpack.c.l.b16 %v3715
        %v4604 = vunpack.c.l.b16 %v3716
        %v4605 = vunpack.c.l.b16 %v3717
        %v4606 = vunpack.c.l.b16 %v3718
        %v4607 = vunpack.c.l.b16 %v3719
        %v4608 = vunpack.c.l.b16 %v3720
        %v4609 = vunpack.c.l.b16 %v3721
        %v4610 = vunpack.c.l.b16 %v3722
        %v4611 = vunpack.c.l.b16 %v3723
        %v4612 = vunpack.c.l.b16 %v3724
        %v4613 = vunpack.c.l.b16 %v3725
        %v4614 = vunpack.c.l.b16 %v3726
        %v4615 = vunpack.c.l.b16 %v3727
        %v4616 = vunpack.c.l.b16 %v3728
        %v4617 = vunpack.c.l.b16 %v3729
        %v4618 = vunpack.c.l.b16 %v3730
        %v4619 = vunpack.c.l.b16 %v3731
        %v4620 = vunpack.c.l.b16 %v3732
        %v4621 = vunpack.c.l.b16 %v3733
        %v4622 = vunpack.c.l.b16 %v3734
        %v4623 = vunpack.c.l.b16 %v3735
        %v4624 = vunpack.c.l.b16 %v3736
        %v4625 = vunpack.c.l.b16 %v3737
        %v4626 = vunpack.c.l.b16 %v3738
        %v4627 = vunpack.c.l.b16 %v3739
        %v4628 = vunpack.c.l.b16 %v3740
        %v4629 = vunpack.c.l.b16 %v3741
        %v4630 = vunpack.c.l.b16 %v3742
        %v4631 = vunpack.c.l.b16 %v3743
        %v4632 = vunpack.c.l.b16 %v3744
        %v4633 = vunpack.c.l.b16 %v3745
        %v4634 = vunpack.c.l.b16 %v3746
        %v4635 = vunpack.c.l.b16 %v3747
        %v4636 = vunpack.c.l.b16 %v3748
        %v4637 = vunpack.c.l.b16 %v3749
        %v4638 = vunpack.c.l.b16 %v3750
        %v4639 = vunpack.c.l.b16 %v3751
        %v4640 = vunpack.c.l.b16 %v3752
        %v4641 = vunpack.c.l.b16 %v3753
        %v4642 = vunpack.c.l.b16 %v3754
        %v4643 = vunpack.c.l.b16 %v3755
        %v4644 = vunpack.c.l.b16 %v3756
        %v4645 = vunpack.c.l.b16 %v3757
        %v4646 = vunpack.c.l.b16 %v3758
        %v4647 = vunpack.c.l.b16 %v3759
        %v4648 = vunpack.c.l.b16 %v3760
        %v4649 = vunpack.c.l.b16 %v3761
        %v4650 = vunpack.c.l.b16 %v3762
        %v4651 = vunpack.c.l.b16 %v3763
        %v4652 = vunpack.c.l.b16 %v3764
        %v4653 = vunpack.c.l.b16 %v3765
        %v4654 = vunpack.c.l.b16 %v3766
        %v4655 = vunpack.c.l.b16 %v3767
        %v4656 = vunpack.c.l.b16 %v3768
        %v4657 = vunpack.c.l.b16 %v3769
        %v4658 = vunpack.c.l.b16 %v3770
        %v4659 = vunpack.c.l.b16 %v3771
        %v4660 = vunpack.c.l.b16 %v3772
        %v4661 = vunpack.c.l.b16 %v3773
        %v4662 = vunpack.c.l.b16 %v3774
        %v4663 = vunpack.c.l.b16 %v3775
        %v4664 = vunpack.c.l.b16 %v3776
        %v4665 = vunpack.c.l.b16 %v3777
        %v4666 = vunpack.c.l.b16 %v3778
        %v4667 = vunpack.c.l.b16 %v3779
        %v4668 = vunpack.c.l.b16 %v3780
        %v4669 = vunpack.c.l.b16 %v3781
        %v4670 = vunpack.c.l.b16 %v3782
        %v4671 = vunpack.c.l.b16 %v3783
        %v4672 = vunpack.c.l.b16 %v3784
        %v4673 = vunpack.c.l.b16 %v3785
        %v4674 = vunpack.c.l.b16 %v3786
        %v4675 = vunpack.c.l.b16 %v3787
        %v4676 = vunpack.c.l.b16 %v3788
        %v4677 = vunpack.c.l.b16 %v3789
        %v4678 = vunpack.c.l.b16 %v3790
        %v4679 = vunpack.c.l.b16 %v3791
        %v4680 = vunpack.c.l.b16 %v3792
        %v4681 = vunpack.c.l.b16 %v3793
        %v4682 = vunpack.c.l.b16 %v3794
        %v4683 = vunpack.c.l.b16 %v3795
        %v4684 = vunpack.c.l.b16 %v3796
        %v4685 = vunpack.c.l.b16 %v3797
        %v4686 = vunpack.c.l.b16 %v3798
        %v4687 = vunpack.c.l.b16 %v3799
        %v4688 = vunpack.c.l.b16 %v3800
        %v4689 = vunpack.c.l.b16 %v3801
        %v4690 = vunpack.c.l.b16 %v3802
        %v4691 = vunpack.c.l.b16 %v3803
        %v4692 = vunpack.c.l.b16 %v3804
        %v4693 = vunpack.c.l.b16 %v3805
        %v4694 = vunpack.c.l.b16 %v3806
        %v4695 = vunpack.c.l.b16 %v3807
        %v4696 = vunpack.c.l.b16 %v3808
        %v4697 = vunpack.c.l.b16 %v3809
        %v4698 = vunpack.c.l.b16 %v3810
        %v4699 = vunpack.c.l.b16 %v3811
        %v4700 = vunpack.c.l.b16 %v3812
        %v4701 = vunpack.c.l.b16 %v3813
        %v4702 = vunpack.c.l.b16 %v3814
        %v4703 = vunpack.c.l.b16 %v3815
        %v4704 = vunpack.c.l.b16 %v3816
        %v4705 = vunpack.c.l.b16 %v3817
        %v4706 = vunpack.c.l.b16 %v3818
        %v4707 = vunpack.c.l.b16 %v3819
        %v4708 = vunpack.c.l.b16 %v3820
        %v4709 = vunpack.c.l.b16 %v3821
        %v4710 = vunpack.c.l.b16 %v3822
        %v4711 = vunpack.c.l.b16 %v3823
        %v4712 = vunpack.c.l.b16 %v3824
        %v4713 = vunpack.c.l.b16 %v3825
        %v4714 = vunpack.c.l.b16 %v3826
        %v4715 = vunpack.c.l.b16 %v3827
        %v4716 = vunpack.c.l.b16 %v3828
        %v4717 = vunpack.c.l.b16 %v3829
        %v4718 = vunpack.c.l.b16 %v3830
        %v4719 = vunpack.c.l.b16 %v3831
        %v4720 = vunpack.c.l.b16 %v3832
        %v4721 = vunpack.c.l.b16 %v3833
        %v4722 = vunpack.c.l.b16 %v3834
        %v4723 = vunpack.c.l.b16 %v3835
        %v4724 = vunpack.c.l.b16 %v3836
        %v4725 = vunpack.c.l.b16 %v3837
        %v4726 = vunpack.c.l.b16 %v3838
        %v4727 = vunpack.c.l.b16 %v3839
        %v4728 = vunpack.c.l.b16 %v3840
        %v4729 = vunpack.c.l.b16 %v3841
        %v4730 = vunpack.c.l.b16 %v3842
        %v4731 = vunpack.c.l.b16 %v3843
        %v4732 = vunpack.c.l.b16 %v3844
        %v4733 = vunpack.c.l.b16 %v3845
        %v4734 = vunpack.c.l.b16 %v3846
        %v4735 = vunpack.c.l.b16 %v3847
        %v4736 = vunpack.c.l.b16 %v3848
        %v4737 = vunpack.c.l.b16 %v3849
        %v4738 = vunpack.c.l.b16 %v3850
        %v4739 = vunpack.c.l.b16 %v3851
        %v4740 = vunpack.c.l.b16 %v3852
        %v4741 = vunpack.c.l.b16 %v3853
        %v4742 = vunpack.c.l.b16 %v3854
        %v4743 = vunpack.c.l.b16 %v3855
        %v4744 = vunpack.c.l.b16 %v3856
        %v4745 = vunpack.c.l.b16 %v3857
        %v4746 = vunpack.c.l.b16 %v3858
        %v4747 = vunpack.c.l.b16 %v3859
        %v4748 = vunpack.c.l.b16 %v3860
        %v4749 = vunpack.c.l.b16 %v3861
        %v4750 = vunpack.c.l.b16 %v3862
        %v4751 = vunpack.c.l.b16 %v3863
        %v4752 = vunpack.c.l.b16 %v3864
        %v4753 = vunpack.c.l.b16 %v3865
        %v4754 = vunpack.c.l.b16 %v3866
        %v4755 = vunpack.c.l.b16 %v3867
        %v4756 = vunpack.c.l.b16 %v3868
        %v4757 = vunpack.c.l.b16 %v3869
        %v4758 = vunpack.c.l.b16 %v3870
        %v4759 = vunpack.c.l.b16 %v3871
        %v4760 = vunpack.c.l.b16 %v3872
        %v4761 = vunpack.c.l.b16 %v3873
        %v4762 = vunpack.c.l.b16 %v3874
        %v4763 = vunpack.c.l.b16 %v3875
        %v4764 = vunpack.c.l.b16 %v3876
        %v4765 = vunpack.c.l.b16 %v3877
        %v4766 = vunpack.c.l.b16 %v3878
        %v4767 = vunpack.c.l.b16 %v3879
        %v4768 = vunpack.c.l.b16 %v3880
        %v4769 = vunpack.c.l.b16 %v3881
        %v4770 = vunpack.c.l.b16 %v3882
        %v4771 = vunpack.c.l.b16 %v3883
        %v4772 = vunpack.c.l.b16 %v3884
        %v4773 = vunpack.c.l.b16 %v3885
        %v4774 = vunpack.c.l.b16 %v3886
        %v4775 = vunpack.c.l.b16 %v3887
        %v4776 = vunpack.c.l.b16 %v3888
        %v4777 = vunpack.c.l.b16 %v3889
        %v4778 = vunpack.c.l.b16 %v3890
        %v4779 = vunpack.c.l.b16 %v3891
        %v4780 = vpack.c.b16 %v4381, %v4380
        %v4781 = vpack.c.b16 %v4383, %v4382
        %v4782 = vpack.c.b16 %v4385, %v4384
        %v4783 = vpack.c.b16 %v4387, %v4386
        %v4784 = vpack.c.b16 %v4389, %v4388
        %v4785 = vpack.c.b16 %v4391, %v4390
        %v4786 = vpack.c.b16 %v4393, %v4392
        %v4787 = vpack.c.b16 %v4395, %v4394
        %v4788 = vpack.c.b16 %v4397, %v4396
        %v4789 = vpack.c.b16 %v4399, %v4398
        %v4790 = vpack.c.b16 %v4401, %v4400
        %v4791 = vpack.c.b16 %v4403, %v4402
        %v4792 = vpack.c.b16 %v4405, %v4404
        %v4793 = vpack.c.b16 %v4407, %v4406
        %v4794 = vpack.c.b16 %v4409, %v4408
        %v4795 = vpack.c.b16 %v4411, %v4410
        %v4796 = vpack.c.b16 %v4413, %v4412
        %v4797 = vpack.c.b16 %v4415, %v4414
        %v4798 = vpack.c.b16 %v4417, %v4416
        %v4799 = vpack.c.b16 %v4419, %v4418
        %v4800 = vpack.c.b16 %v4421, %v4420
        %v4801 = vpack.c.b16 %v4423, %v4422
        %v4802 = vpack.c.b16 %v4425, %v4424
        %v4803 = vpack.c.b16 %v4427, %v4426
        %v4804 = vpack.c.b16 %v4429, %v4428
        %v4805 = vpack.c.b16 %v4431, %v4430
        %v4806 = vpack.c.b16 %v4433, %v4432
        %v4807 = vpack.c.b16 %v4435, %v4434
        %v4808 = vpack.c.b16 %v4437, %v4436
        %v4809 = vpack.c.b16 %v4439, %v4438
        %v4810 = vpack.c.b16 %v4441, %v4440
        %v4811 = vpack.c.b16 %v4443, %v4442
        %v4812 = vpack.c.b16 %v4445, %v4444
        %v4813 = vpack.c.b16 %v4447, %v4446
        %v4814 = vpack.c.b16 %v4449, %v4448
        %v4815 = vpack.c.b16 %v4451, %v4450
        %v4816 = vpack.c.b16 %v4453, %v4452
        %v4817 = vpack.c.b16 %v4455, %v4454
        %v4818 = vpack.c.b16 %v4457, %v4456
        %v4819 = vpack.c.b16 %v4459, %v4458
        %v4820 = vpack.c.b16 %v4461, %v4460
        %v4821 = vpack.c.b16 %v4463, %v4462
        %v4822 = vpack.c.b16 %v4465, %v4464
        %v4823 = vpack.c.b16 %v4467, %v4466
        %v4824 = vpack.c.b16 %v4469, %v4468
        %v4825 = vpack.c.b16 %v4471, %v4470
        %v4826 = vpack.c.b16 %v4473, %v4472
        %v4827 = vpack.c.b16 %v4475, %v4474
        %v4828 = vpack.c.b16 %v4477, %v4476
        %v4829 = vpack.c.b16 %v4479, %v4478
        %v4830 = vpack.c.b16 %v4481, %v4480
        %v4831 = vpack.c.b16 %v4483, %v4482
        %v4832 = vpack.c.b16 %v4485, %v4484
        %v4833 = vpack.c.b16 %v4487, %v4486
        %v4834 = vpack.c.b16 %v4489, %v4488
        %v4835 = vpack.c.b16 %v4491, %v4490
        %v4836 = vpack.c.b16 %v4493, %v4492
        %v4837 = vpack.c.b16 %v4495, %v4494
        %v4838 = vpack.c.b16 %v4497, %v4496
        %v4839 = vpack.c.b16 %v4499, %v4498
        %v4840 = vpack.c.b16 %v4501, %v4500
        %v4841 = vpack.c.b16 %v4503, %v4502
        %v4842 = vpack.c.b16 %v4505, %v4504
        %v4843 = vpack.c.b16 %v4507, %v4506
        %v4844 = vpack.c.b16 %v4509, %v4508
        %v4845 = vpack.c.b16 %v4511, %v4510
        %v4846 = vpack.c.b16 %v4513, %v4512
        %v4847 = vpack.c.b16 %v4515, %v4514
        %v4848 = vpack.c.b16 %v4517, %v4516
        %v4849 = vpack.c.b16 %v4519, %v4518
        %v4850 = vpack.c.b16 %v4521, %v4520
        %v4851 = vpack.c.b16 %v4523, %v4522
        %v4852 = vpack.c.b16 %v4525, %v4524
        %v4853 = vpack.c.b16 %v4527, %v4526
        %v4854 = vpack.c.b16 %v4529, %v4528
        %v4855 = vpack.c.b16 %v4531, %v4530
        %v4856 = vpack.c.b16 %v4533, %v4532
        %v4857 = vpack.c.b16 %v4535, %v4534
        %v4858 = vpack.c.b16 %v4537, %v4536
        %v4859 = vpack.c.b16 %v4539, %v4538
        %v4860 = vpack.c.b16 %v4541, %v4540
        %v4861 = vpack.c.b16 %v4543, %v4542
        %v4862 = vpack.c.b16 %v4545, %v4544
        %v4863 = vpack.c.b16 %v4547, %v4546
        %v4864 = vpack.c.b16 %v4549, %v4548
        %v4865 = vpack.c.b16 %v4551, %v4550
        %v4866 = vpack.c.b16 %v4553, %v4552
        %v4867 = vpack.c.b16 %v4555, %v4554
        %v4868 = vpack.c.b16 %v4557, %v4556
        %v4869 = vpack.c.b16 %v4559, %v4558
        %v4870 = vpack.c.b16 %v4561, %v4560
        %v4871 = vpack.c.b16 %v4563, %v4562
        %v4872 = vpack.c.b16 %v4565, %v4564
        %v4873 = vpack.c.b16 %v4567, %v4566
        %v4874 = vpack.c.b16 %v4569, %v4568
        %v4875 = vpack.c.b16 %v4571, %v4570
        %v4876 = vpack.c.b16 %v4573, %v4572
        %v4877 = vpack.c.b16 %v4575, %v4574
        %v4878 = vpack.c.b16 %v4577, %v4576
        %v4879 = vpack.c.b16 %v4579, %v4578
        %v4880 = vpack.c.b16 %v4581, %v4580
        %v4881 = vpack.c.b16 %v4583, %v4582
        %v4882 = vpack.c.b16 %v4585, %v4584
        %v4883 = vpack.c.b16 %v4587, %v4586
        %v4884 = vpack.c.b16 %v4589, %v4588
        %v4885 = vpack.c.b16 %v4591, %v4590
        %v4886 = vpack.c.b16 %v4593, %v4592
        %v4887 = vpack.c.b16 %v4595, %v4594
        %v4888 = vpack.c.b16 %v4597, %v4596
        %v4889 = vpack.c.b16 %v4599, %v4598
        %v4890 = vpack.c.b16 %v4601, %v4600
        %v4891 = vpack.c.b16 %v4603, %v4602
        %v4892 = vpack.c.b16 %v4605, %v4604
        %v4893 = vpack.c.b16 %v4607, %v4606
        %v4894 = vpack.c.b16 %v4609, %v4608
        %v4895 = vpack.c.b16 %v4611, %v4610
        %v4896 = vpack.c.b16 %v4613, %v4612
        %v4897 = vpack.c.b16 %v4615, %v4614
        %v4898 = vpack.c.b16 %v4617, %v4616
        %v4899 = vpack.c.b16 %v4619, %v4618
        %v4900 = vpack.c.b16 %v4621, %v4620
        %v4901 = vpack.c.b16 %v4623, %v4622
        %v4902 = vpack.c.b16 %v4625, %v4624
        %v4903 = vpack.c.b16 %v4627, %v4626
        %v4904 = vpack.c.b16 %v4629, %v4628
        %v4905 = vpack.c.b16 %v4631, %v4630
        %v4906 = vpack.c.b16 %v4633, %v4632
        %v4907 = vpack.c.b16 %v4635, %v4634
        %v4908 = vpack.c.b16 %v4637, %v4636
        %v4909 = vpack.c.b16 %v4639, %v4638
        %v4910 = vpack.c.b16 %v4641, %v4640
        %v4911 = vpack.c.b16 %v4643, %v4642
        %v4912 = vpack.c.b16 %v4645, %v4644
        %v4913 = vpack.c.b16 %v4647, %v4646
        %v4914 = vpack.c.b16 %v4649, %v4648
        %v4915 = vpack.c.b16 %v4651, %v4650
        %v4916 = vpack.c.b16 %v4653, %v4652
        %v4917 = vpack.c.b16 %v4655, %v4654
        %v4918 = vpack.c.b16 %v4657, %v4656
        %v4919 = vpack.c.b16 %v4659, %v4658
        %v4920 = vpack.c.b16 %v4661, %v4660
        %v4921 = vpack.c.b16 %v4663, %v4662
        %v4922 = vpack.c.b16 %v4665, %v4664
        %v4923 = vpack.c.b16 %v4667, %v4666
        %v4924 = vpack.c.b16 %v4669, %v4668
        %v4925 = vpack.c.b16 %v4671, %v4670
        %v4926 = vpack.c.b16 %v4673, %v4672
        %v4927 = vpack.c.b16 %v4675, %v4674
        %v4928 = vpack.c.b16 %v4677, %v4676
        %v4929 = vpack.c.b16 %v4679, %v4678
        %v4930 = vpack.c.b16 %v4681, %v4680
        %v4931 = vpack.c.b16 %v4683, %v4682
        %v4932 = vpack.c.b16 %v4685, %v4684
        %v4933 = vpack.c.b16 %v4687, %v4686
        %v4934 = vpack.c.b16 %v4689, %v4688
        %v4935 = vpack.c.b16 %v4691, %v4690
        %v4936 = vpack.c.b16 %v4693, %v4692
        %v4937 = vpack.c.b16 %v4695, %v4694
        %v4938 = vpack.c.b16 %v4697, %v4696
        %v4939 = vpack.c.b16 %v4699, %v4698
        %v4940 = vpack.c.b16 %v4701, %v4700
        %v4941 = vpack.c.b16 %v4703, %v4702
        %v4942 = vpack.c.b16 %v4705, %v4704
        %v4943 = vpack.c.b16 %v4707, %v4706
        %v4944 = vpack.c.b16 %v4709, %v4708
        %v4945 = vpack.c.b16 %v4711, %v4710
        %v4946 = vpack.c.b16 %v4713, %v4712
        %v4947 = vpack.c.b16 %v4715, %v4714
        %v4948 = vpack.c.b16 %v4717, %v4716
        %v4949 = vpack.c.b16 %v4719, %v4718
        %v4950 = vpack.c.b16 %v4721, %v4720
        %v4951 = vpack.c.b16 %v4723, %v4722
        %v4952 = vpack.c.b16 %v4725, %v4724
        %v4953 = vpack.c.b16 %v4727, %v4726
        %v4954 = vpack.c.b16 %v4729, %v4728
        %v4955 = vpack.c.b16 %v4731, %v4730
        %v4956 = vpack.c.b16 %v4733, %v4732
        %v4957 = vpack.c.b16 %v4735, %v4734
        %v4958 = vpack.c.b16 %v4737, %v4736
        %v4959 = vpack.c.b16 %v4739, %v4738
        %v4960 = vpack.c.b16 %v4741, %v4740
        %v4961 = vpack.c.b16 %v4743, %v4742
        %v4962 = vpack.c.b16 %v4745, %v4744
        %v4963 = vpack.c.b16 %v4747, %v4746
        %v4964 = vpack.c.b16 %v4749, %v4748
        %v4965 = vpack.c.b16 %v4751, %v4750
        %v4966 = vpack.c.b16 %v4753, %v4752
        %v4967 = vpack.c.b16 %v4755, %v4754
        %v4968 = vpack.c.b16 %v4757, %v4756
        %v4969 = vpack.c.b16 %v4759, %v4758
        %v4970 = vpack.c.b16 %v4761, %v4760
        %v4971 = vpack.c.b16 %v4763, %v4762
        %v4972 = vpack.c.b16 %v4765, %v4764
        %v4973 = vpack.c.b16 %v4767, %v4766
        %v4974 = vpack.c.b16 %v4769, %v4768
        %v4975 = vpack.c.b16 %v4771, %v4770
        %v4976 = vpack.c.b16 %v4773, %v4772
        %v4977 = vpack.c.b16 %v4775, %v4774
        %v4978 = vpack.c.b16 %v4777, %v4776
        %v4979 = vpack.c.b16 %v4779, %v4778
        %5180 = vmatpush.bf16.msra.mxu0 %v4787
        %5181 = vmatpush.bf16.msra.mxu0 %v4786
        %5182 = vmatpush.bf16.msra.mxu0 %v4785
        %5183 = vmatpush.bf16.msra.mxu0 %v4784
        %5184 = vmatpush.bf16.msra.mxu0 %v4783
        %5185 = vmatpush.bf16.msra.mxu0 %v4782
        %5186 = vmatpush.bf16.msra.mxu0 %v4781
        %5187 = vmatpush.bf16.msra.mxu0 %v4780
        %5188 = vmatmul.bf16.gmra.mxu0 %v3930
        %v5189 = vpop.f32.mrf.mxu0
        %v5190 = vadd.f32 0.0, %v5189
        %v5191 = vpop.f32.mrf.mxu0
        %5192 = vdwg.mxu0
        %5193 = vmatpush.bf16.msra.mxu0 %v4795
        %5194 = vmatpush.bf16.msra.mxu0 %v4794
        %5195 = vmatpush.bf16.msra.mxu0 %v4793
        %5196 = vmatpush.bf16.msra.mxu0 %v4792
        %5197 = vmatpush.bf16.msra.mxu0 %v4791
        %5198 = vmatpush.bf16.msra.mxu0 %v4790
        %5199 = vmatpush.bf16.msra.mxu0 %v4789
        %5200 = vmatpush.bf16.msra.mxu0 %v4788
        %5201 = vmatmul.bf16.gmra.mxu0 %v3931
        %v5202 = vpop.f32.mrf.mxu0
        %v5203 = vadd.f32 %v5190, %v5202
        %v5204 = vpop.f32.mrf.mxu0
        %5205 = vdwg.mxu0
        %5206 = vmatpush.bf16.msra.mxu0 %v4803
        %5207 = vmatpush.bf16.msra.mxu0 %v4802
        %5208 = vmatpush.bf16.msra.mxu0 %v4801
        %5209 = vmatpush.bf16.msra.mxu0 %v4800
        %5210 = vmatpush.bf16.msra.mxu0 %v4799
        %5211 = vmatpush.bf16.msra.mxu0 %v4798
        %5212 = vmatpush.bf16.msra.mxu0 %v4797
        %5213 = vmatpush.bf16.msra.mxu0 %v4796
        %5214 = vmatmul.bf16.gmra.mxu0 %v3932
        %v5215 = vpop.f32.mrf.mxu0
        %v5216 = vadd.f32 %v5203, %v5215
        %v5217 = vpop.f32.mrf.mxu0
        %5218 = vdwg.mxu0
        %5219 = vmatpush.bf16.msra.mxu0 %v4811
        %5220 = vmatpush.bf16.msra.mxu0 %v4810
        %5221 = vmatpush.bf16.msra.mxu0 %v4809
        %5222 = vmatpush.bf16.msra.mxu0 %v4808
        %5223 = vmatpush.bf16.msra.mxu0 %v4807
        %5224 = vmatpush.bf16.msra.mxu0 %v4806
        %5225 = vmatpush.bf16.msra.mxu0 %v4805
        %5226 = vmatpush.bf16.msra.mxu0 %v4804
        %5227 = vmatmul.bf16.gmra.mxu0 %v3933
        %v5228 = vpop.f32.mrf.mxu0
        %v5229 = vadd.f32 %v5216, %v5228
        %v5230 = vpop.f32.mrf.mxu0
        %5231 = vdwg.mxu0
        %5232 = vmatpush.bf16.msra.mxu0 %v4819
        %5233 = vmatpush.bf16.msra.mxu0 %v4818
        %5234 = vmatpush.bf16.msra.mxu0 %v4817
        %5235 = vmatpush.bf16.msra.mxu0 %v4816
        %5236 = vmatpush.bf16.msra.mxu0 %v4815
        %5237 = vmatpush.bf16.msra.mxu0 %v4814
        %5238 = vmatpush.bf16.msra.mxu0 %v4813
        %5239 = vmatpush.bf16.msra.mxu0 %v4812
        %5240 = vmatmul.bf16.gmra.mxu0 %v3934
        %v5241 = vpop.f32.mrf.mxu0
        %v5242 = vadd.f32 %v5229, %v5241
        %v5243 = vpop.f32.mrf.mxu0
        %5244 = vdwg.mxu0
        %5245 = vmatpush.bf16.msra.mxu0 %v4827
        %5246 = vmatpush.bf16.msra.mxu0 %v4826
        %5247 = vmatpush.bf16.msra.mxu0 %v4825
        %5248 = vmatpush.bf16.msra.mxu0 %v4824
        %5249 = vmatpush.bf16.msra.mxu0 %v4823
        %5250 = vmatpush.bf16.msra.mxu0 %v4822
        %5251 = vmatpush.bf16.msra.mxu0 %v4821
        %5252 = vmatpush.bf16.msra.mxu0 %v4820
        %5253 = vmatmul.bf16.gmra.mxu0 %v3935
        %v5254 = vpop.f32.mrf.mxu0
        %v5255 = vadd.f32 %v5242, %v5254
        %v5256 = vpop.f32.mrf.mxu0
        %5257 = vdwg.mxu0
        %5258 = vmatpush.bf16.msra.mxu0 %v4835
        %5259 = vmatpush.bf16.msra.mxu0 %v4834
        %5260 = vmatpush.bf16.msra.mxu0 %v4833
        %5261 = vmatpush.bf16.msra.mxu0 %v4832
        %5262 = vmatpush.bf16.msra.mxu0 %v4831
        %5263 = vmatpush.bf16.msra.mxu0 %v4830
        %5264 = vmatpush.bf16.msra.mxu0 %v4829
        %5265 = vmatpush.bf16.msra.mxu0 %v4828
        %5266 = vmatmul.bf16.gmra.mxu0 %v3936
        %v5267 = vpop.f32.mrf.mxu0
        %v5268 = vadd.f32 %v5255, %v5267
        %v5269 = vpop.f32.mrf.mxu0
        %5270 = vdwg.mxu0
        %5271 = vmatpush.bf16.msra.mxu0 %v4843
        %5272 = vmatpush.bf16.msra.mxu0 %v4842
        %5273 = vmatpush.bf16.msra.mxu0 %v4841
        %5274 = vmatpush.bf16.msra.mxu0 %v4840
        %5275 = vmatpush.bf16.msra.mxu0 %v4839
        %5276 = vmatpush.bf16.msra.mxu0 %v4838
        %5277 = vmatpush.bf16.msra.mxu0 %v4837
        %5278 = vmatpush.bf16.msra.mxu0 %v4836
        %5279 = vmatmul.bf16.gmra.mxu0 %v3937
        %v5280 = vpop.f32.mrf.mxu0
        %v5281 = vadd.f32 %v5268, %v5280
        %v5282 = vpop.f32.mrf.mxu0
        %5283 = vdwg.mxu0
        %5284 = vmatpush.bf16.msra.mxu0 %v4851
        %5285 = vmatpush.bf16.msra.mxu0 %v4850
        %5286 = vmatpush.bf16.msra.mxu0 %v4849
        %5287 = vmatpush.bf16.msra.mxu0 %v4848
        %5288 = vmatpush.bf16.msra.mxu0 %v4847
        %5289 = vmatpush.bf16.msra.mxu0 %v4846
        %5290 = vmatpush.bf16.msra.mxu0 %v4845
        %5291 = vmatpush.bf16.msra.mxu0 %v4844
        %5292 = vmatmul.bf16.gmra.mxu0 %v3938
        %v5293 = vpop.f32.mrf.mxu0
        %v5294 = vadd.f32 %v5281, %v5293
        %v5295 = vpop.f32.mrf.mxu0
        %5296 = vdwg.mxu0
        %5297 = vmatpush.bf16.msra.mxu0 %v4859
        %5298 = vmatpush.bf16.msra.mxu0 %v4858
        %5299 = vmatpush.bf16.msra.mxu0 %v4857
        %5300 = vmatpush.bf16.msra.mxu0 %v4856
        %5301 = vmatpush.bf16.msra.mxu0 %v4855
        %5302 = vmatpush.bf16.msra.mxu0 %v4854
        %5303 = vmatpush.bf16.msra.mxu0 %v4853
        %5304 = vmatpush.bf16.msra.mxu0 %v4852
        %5305 = vmatmul.bf16.gmra.mxu0 %v3939
        %v5306 = vpop.f32.mrf.mxu0
        %v5307 = vadd.f32 %v5294, %v5306
        %v5308 = vpop.f32.mrf.mxu0
        %5309 = vdwg.mxu0
        %5310 = vmatpush.bf16.msra.mxu0 %v4867
        %5311 = vmatpush.bf16.msra.mxu0 %v4866
        %5312 = vmatpush.bf16.msra.mxu0 %v4865
        %5313 = vmatpush.bf16.msra.mxu0 %v4864
        %5314 = vmatpush.bf16.msra.mxu0 %v4863
        %5315 = vmatpush.bf16.msra.mxu0 %v4862
        %5316 = vmatpush.bf16.msra.mxu0 %v4861
        %5317 = vmatpush.bf16.msra.mxu0 %v4860
        %5318 = vmatmul.bf16.gmra.mxu0 %v3940
        %v5319 = vpop.f32.mrf.mxu0
        %v5320 = vadd.f32 %v5307, %v5319
        %v5321 = vpop.f32.mrf.mxu0
        %5322 = vdwg.mxu0
        %5323 = vmatpush.bf16.msra.mxu0 %v4875
        %5324 = vmatpush.bf16.msra.mxu0 %v4874
        %5325 = vmatpush.bf16.msra.mxu0 %v4873
        %5326 = vmatpush.bf16.msra.mxu0 %v4872
        %5327 = vmatpush.bf16.msra.mxu0 %v4871
        %5328 = vmatpush.bf16.msra.mxu0 %v4870
        %5329 = vmatpush.bf16.msra.mxu0 %v4869
        %5330 = vmatpush.bf16.msra.mxu0 %v4868
        %5331 = vmatmul.bf16.gmra.mxu0 %v3941
        %v5332 = vpop.f32.mrf.mxu0
        %v5333 = vadd.f32 %v5320, %v5332
        %v5334 = vpop.f32.mrf.mxu0
        %5335 = vdwg.mxu0
        %5336 = vmatpush.bf16.msra.mxu0 %v4883
        %5337 = vmatpush.bf16.msra.mxu0 %v4882
        %5338 = vmatpush.bf16.msra.mxu0 %v4881
        %5339 = vmatpush.bf16.msra.mxu0 %v4880
        %5340 = vmatpush.bf16.msra.mxu0 %v4879
        %5341 = vmatpush.bf16.msra.mxu0 %v4878
        %5342 = vmatpush.bf16.msra.mxu0 %v4877
        %5343 = vmatpush.bf16.msra.mxu0 %v4876
        %5344 = vmatmul.bf16.gmra.mxu0 %v3942
        %v5345 = vpop.f32.mrf.mxu0
        %v5346 = vadd.f32 %v5333, %v5345
        %v5347 = vpop.f32.mrf.mxu0
        %5348 = vdwg.mxu0
        %5349 = vmatpush.bf16.msra.mxu0 %v4891
        %5350 = vmatpush.bf16.msra.mxu0 %v4890
        %5351 = vmatpush.bf16.msra.mxu0 %v4889
        %5352 = vmatpush.bf16.msra.mxu0 %v4888
        %5353 = vmatpush.bf16.msra.mxu0 %v4887
        %5354 = vmatpush.bf16.msra.mxu0 %v4886
        %5355 = vmatpush.bf16.msra.mxu0 %v4885
        %5356 = vmatpush.bf16.msra.mxu0 %v4884
        %5357 = vmatmul.bf16.gmra.mxu0 %v3943
        %v5358 = vpop.f32.mrf.mxu0
        %v5359 = vadd.f32 %v5346, %v5358
        %v5360 = vpop.f32.mrf.mxu0
        %5361 = vdwg.mxu0
        %5362 = vmatpush.bf16.msra.mxu0 %v4899
        %5363 = vmatpush.bf16.msra.mxu0 %v4898
        %5364 = vmatpush.bf16.msra.mxu0 %v4897
        %5365 = vmatpush.bf16.msra.mxu0 %v4896
        %5366 = vmatpush.bf16.msra.mxu0 %v4895
        %5367 = vmatpush.bf16.msra.mxu0 %v4894
        %5368 = vmatpush.bf16.msra.mxu0 %v4893
        %5369 = vmatpush.bf16.msra.mxu0 %v4892
        %5370 = vmatmul.bf16.gmra.mxu0 %v3944
        %v5371 = vpop.f32.mrf.mxu0
        %v5372 = vadd.f32 %v5359, %v5371
        %v5373 = vpop.f32.mrf.mxu0
        %5374 = vdwg.mxu0
        %5375 = vmatpush.bf16.msra.mxu0 %v4907
        %5376 = vmatpush.bf16.msra.mxu0 %v4906
        %5377 = vmatpush.bf16.msra.mxu0 %v4905
        %5378 = vmatpush.bf16.msra.mxu0 %v4904
        %5379 = vmatpush.bf16.msra.mxu0 %v4903
        %5380 = vmatpush.bf16.msra.mxu0 %v4902
        %5381 = vmatpush.bf16.msra.mxu0 %v4901
        %5382 = vmatpush.bf16.msra.mxu0 %v4900
        %5383 = vmatmul.bf16.gmra.mxu0 %v3945
        %v5384 = vpop.f32.mrf.mxu0
        %v5385 = vadd.f32 %v5372, %v5384
        %v5386 = vpop.f32.mrf.mxu0
        %5387 = vdwg.mxu0
        %5388 = vmatpush.bf16.msra.mxu0 %v4915
        %5389 = vmatpush.bf16.msra.mxu0 %v4914
        %5390 = vmatpush.bf16.msra.mxu0 %v4913
        %5391 = vmatpush.bf16.msra.mxu0 %v4912
        %5392 = vmatpush.bf16.msra.mxu0 %v4911
        %5393 = vmatpush.bf16.msra.mxu0 %v4910
        %5394 = vmatpush.bf16.msra.mxu0 %v4909
        %5395 = vmatpush.bf16.msra.mxu0 %v4908
        %5396 = vmatmul.bf16.gmra.mxu0 %v3946
        %v5397 = vpop.f32.mrf.mxu0
        %v5398 = vadd.f32 %v5385, %v5397
        %v5399 = vpop.f32.mrf.mxu0
        %5400 = vdwg.mxu0
        %5401 = vmatpush.bf16.msra.mxu0 %v4923
        %5402 = vmatpush.bf16.msra.mxu0 %v4922
        %5403 = vmatpush.bf16.msra.mxu0 %v4921
        %5404 = vmatpush.bf16.msra.mxu0 %v4920
        %5405 = vmatpush.bf16.msra.mxu0 %v4919
        %5406 = vmatpush.bf16.msra.mxu0 %v4918
        %5407 = vmatpush.bf16.msra.mxu0 %v4917
        %5408 = vmatpush.bf16.msra.mxu0 %v4916
        %5409 = vmatmul.bf16.gmra.mxu0 %v3947
        %v5410 = vpop.f32.mrf.mxu0
        %v5411 = vadd.f32 %v5398, %v5410
        %v5412 = vpop.f32.mrf.mxu0
        %5413 = vdwg.mxu0
        %5414 = vmatpush.bf16.msra.mxu0 %v4931
        %5415 = vmatpush.bf16.msra.mxu0 %v4930
        %5416 = vmatpush.bf16.msra.mxu0 %v4929
        %5417 = vmatpush.bf16.msra.mxu0 %v4928
        %5418 = vmatpush.bf16.msra.mxu0 %v4927
        %5419 = vmatpush.bf16.msra.mxu0 %v4926
        %5420 = vmatpush.bf16.msra.mxu0 %v4925
        %5421 = vmatpush.bf16.msra.mxu0 %v4924
        %5422 = vmatmul.bf16.gmra.mxu0 %v3948
        %v5423 = vpop.f32.mrf.mxu0
        %v5424 = vadd.f32 %v5411, %v5423
        %v5425 = vpop.f32.mrf.mxu0
        %5426 = vdwg.mxu0
        %5427 = vmatpush.bf16.msra.mxu0 %v4939
        %5428 = vmatpush.bf16.msra.mxu0 %v4938
        %5429 = vmatpush.bf16.msra.mxu0 %v4937
        %5430 = vmatpush.bf16.msra.mxu0 %v4936
        %5431 = vmatpush.bf16.msra.mxu0 %v4935
        %5432 = vmatpush.bf16.msra.mxu0 %v4934
        %5433 = vmatpush.bf16.msra.mxu0 %v4933
        %5434 = vmatpush.bf16.msra.mxu0 %v4932
        %5435 = vmatmul.bf16.gmra.mxu0 %v3949
        %v5436 = vpop.f32.mrf.mxu0
        %v5437 = vadd.f32 %v5424, %v5436
        %v5438 = vpop.f32.mrf.mxu0
        %5439 = vdwg.mxu0
        %5440 = vmatpush.bf16.msra.mxu0 %v4947
        %5441 = vmatpush.bf16.msra.mxu0 %v4946
        %5442 = vmatpush.bf16.msra.mxu0 %v4945
        %5443 = vmatpush.bf16.msra.mxu0 %v4944
        %5444 = vmatpush.bf16.msra.mxu0 %v4943
        %5445 = vmatpush.bf16.msra.mxu0 %v4942
        %5446 = vmatpush.bf16.msra.mxu0 %v4941
        %5447 = vmatpush.bf16.msra.mxu0 %v4940
        %5448 = vmatmul.bf16.gmra.mxu0 %v3950
        %v5449 = vpop.f32.mrf.mxu0
        %v5450 = vadd.f32 %v5437, %v5449
        %v5451 = vpop.f32.mrf.mxu0
        %5452 = vdwg.mxu0
        %5453 = vmatpush.bf16.msra.mxu0 %v4955
        %5454 = vmatpush.bf16.msra.mxu0 %v4954
        %5455 = vmatpush.bf16.msra.mxu0 %v4953
        %5456 = vmatpush.bf16.msra.mxu0 %v4952
        %5457 = vmatpush.bf16.msra.mxu0 %v4951
        %5458 = vmatpush.bf16.msra.mxu0 %v4950
        %5459 = vmatpush.bf16.msra.mxu0 %v4949
        %5460 = vmatpush.bf16.msra.mxu0 %v4948
        %5461 = vmatmul.bf16.gmra.mxu0 %v3951
        %v5462 = vpop.f32.mrf.mxu0
        %v5463 = vadd.f32 %v5450, %v5462
        %v5464 = vpop.f32.mrf.mxu0
        %5465 = vdwg.mxu0
        %5466 = vmatpush.bf16.msra.mxu0 %v4963
        %5467 = vmatpush.bf16.msra.mxu0 %v4962
        %5468 = vmatpush.bf16.msra.mxu0 %v4961
        %5469 = vmatpush.bf16.msra.mxu0 %v4960
        %5470 = vmatpush.bf16.msra.mxu0 %v4959
        %5471 = vmatpush.bf16.msra.mxu0 %v4958
        %5472 = vmatpush.bf16.msra.mxu0 %v4957
        %5473 = vmatpush.bf16.msra.mxu0 %v4956
        %5474 = vmatmul.bf16.gmra.mxu0 %v3952
        %v5475 = vpop.f32.mrf.mxu0
        %v5476 = vadd.f32 %v5463, %v5475
        %v5477 = vpop.f32.mrf.mxu0
        %5478 = vdwg.mxu0
        %5479 = vmatpush.bf16.msra.mxu0 %v4971
        %5480 = vmatpush.bf16.msra.mxu0 %v4970
        %5481 = vmatpush.bf16.msra.mxu0 %v4969
        %5482 = vmatpush.bf16.msra.mxu0 %v4968
        %5483 = vmatpush.bf16.msra.mxu0 %v4967
        %5484 = vmatpush.bf16.msra.mxu0 %v4966
        %5485 = vmatpush.bf16.msra.mxu0 %v4965
        %5486 = vmatpush.bf16.msra.mxu0 %v4964
        %5487 = vmatmul.bf16.gmra.mxu0 %v3953
        %v5488 = vpop.f32.mrf.mxu0
        %v5489 = vadd.f32 %v5476, %v5488
        %v5490 = vpop.f32.mrf.mxu0
        %5491 = vdwg.mxu0
        %5492 = vmatpush.bf16.msra.mxu0 %v4979
        %5493 = vmatpush.bf16.msra.mxu0 %v4978
        %5494 = vmatpush.bf16.msra.mxu0 %v4977
        %5495 = vmatpush.bf16.msra.mxu0 %v4976
        %5496 = vmatpush.bf16.msra.mxu0 %v4975
        %5497 = vmatpush.bf16.msra.mxu0 %v4974
        %5498 = vmatpush.bf16.msra.mxu0 %v4973
        %5499 = vmatpush.bf16.msra.mxu0 %v4972
        %5500 = vmatmul.bf16.gmra.mxu0 %v3954
        %v5501 = vpop.f32.mrf.mxu0
        %v5502 = vadd.f32 %v5489, %v5501
        %v5503 = vpop.f32.mrf.mxu0
        %5504 = vdwg.mxu0
        %v5505 = vld [vmem:[%s366] sm:$0x1]
        %v5507 = vperm.slane %v5505, 0
        %v5509 = vmul.f32 %v5502, %v5507
        %v5510 = vld [vmem:[%s373] sm:$0x1]
        %v5512 = vperm.slane %v5510, 0
        %v5514 = vadd.f32 %v5509, %v5512
        %v5515 = vmax.f32 %v5514, 0.0
        %5516 = vst [vmem:[%s381] sm:$0xff] %v5515
        %s5517 = smul.u32 %s25, 3
        %s5518 = sadd.s32 %s5517, %s26
        %p5519 = scmp.lt.s32.totalorder %s5518, 5
        %s5520 = scalar_select %p5519, %s5518, 5
        %s5521 = smul.addr %s5520, 8
        %s5522 = scalar_lea.vmem %s7, %s5521
        // Predicated region
        $region57: #{inception_aux_forward.1} parent=47 // pred_check
          %p5523 = pneg %p229
        $region58: #{inception_aux_forward.1} parent=47 // pred_check_branch
          %5525 = sbr.rel (%p5523) target = $region60
        $region59: #{inception_aux_forward.1} parent=47 // pred_region
          %s5526 = smul.u32 %s25, 3
          %s5527 = sadd.s32 %s5526, %s26
        $region60: #{inception_aux_forward.1} parent=47 // pred_fallthru
          _
      $region48: #{inception_aux_forward.1} parent=5 // pred_fallthru
        _
      %p5528 = scmp.le.s32.totalorder 2, %s16
      // Predicated region
      $region61: #{inception_aux_forward.1} parent=5 // pred_check
        %p5529 = pneg %p5528
      $region62: #{inception_aux_forward.1} parent=5 // pred_check_branch
        %5531 = sbr.rel (%p5529) target = $region64
      $region63: #{inception_aux_forward.1} parent=5 // pred_region
        %s5532 = ssub.s32 %s16, 2
        // Predicated region
        $region65: #{inception_aux_forward.1} parent=63 // pred_check
          %p5533 = pneg %p235
        $region66: #{inception_aux_forward.1} parent=63 // pred_check_branch
          %5535 = sbr.rel (%p5533) target = $region68
        $region67: #{inception_aux_forward.1} parent=63 // pred_region
          %s5536 = smul.u32 %s27, 3
          %s5537 = sadd.s32 %s5536, %s28
          %p5538 = scmp.lt.s32.totalorder %s5537, 5
          %s5539 = scalar_select %p5538, %s5537, 5
          %s5540 = smul.addr %s5539, 8
          %s5541 = scalar_lea.vmem %s7, %s5540
        $region68: #{inception_aux_forward.1} parent=63 // pred_fallthru
          _
      $region64: #{inception_aux_forward.1} parent=5 // pred_fallthru
        _
    $region6: #{inception_aux_forward.1} parent=1 // loop_footer
      %s20 = sadd.s32 1, %s16
    $region7: #{inception_aux_forward.1} parent=1 // loop_footer_branch
      %15 = sbr.rel target = $region3
    $region8: #{inception_aux_forward.1} parent=1 // loop_exit
      _
    %5542 = vsyncpa [#allocation4], 1
    %s5543 = scalar_lea.sflag [#allocation4], 1
    %5544 = vsyncpa %s5543, 1

</llo_original>
